<compile_context>
chip_gen: v7x
topology: tpu7x:2x2x1
jax: 0.10.0
libtpu: 0.0.40
codegen_flags: <defaults>
</compile_context>

<pallas_src>
import math

import numpy as np
import jax
import jax.numpy as jnp
from jax import lax
from jax.experimental import pallas as pl
from jax.experimental.pallas import tpu as pltpu

SQRT_2_OVER_PI = math.sqrt(2.0 / math.pi)
LN_EPS = 1e-5
LANE = 128


def _round_up(n, m):
    return ((n + m - 1) // m) * m


# ----------------------------- in-kernel math ------------------------------
def _gelu(x):
    # BERT-style tanh GELU (matches the custom GELU module exactly)
    return 0.5 * x * (1.0 + jnp.tanh(SQRT_2_OVER_PI * (x + 0.044715 * x * x * x)))


def _layernorm(x, g, b, inv_d):
    # Fused single-pass statistics over the TRUE feature width.
    # Pad lanes of x are exactly zero, so full-lane sums == true-D sums;
    # var = E[x^2] - mu^2 removes the dependent second cross-lane reduce.
    s = jnp.sum(x, axis=-1, keepdims=True)
    s2 = jnp.sum(x * x, axis=-1, keepdims=True)
    mu = s * inv_d
    var = s2 * inv_d - mu * mu
    return (x - mu) * lax.rsqrt(var + LN_EPS) * g + b


# ------------------------------- fused kernel --------------------------------
def make_fused_kernel(n_mixer, n_reg, d_true):
    """Kernel computing the entire RegMixer3D forward for ONE batch element.

    Ref shapes (L = n_mixer + 2*n_reg, Dp/Dep/Cp = lane-padded dims):
      x_ref      : (1, P, F)     f32
      ew, eb     : (F, Dp) bf16, (1, Dp) f32          embed Linear (W^T, b)
      lnA_g/b    : (L, 1, Dp)    f32                  token-mix LayerNorm
      tW1, tb1   : (L, Pe, P) f32, (L, Pe, Dp) f32    Conv1d #1 (bias lane-masked)
      tW2, tb2   : (L, P, Pe) f32, (L, P, Dp)  f32    Conv1d #2 (bias lane-masked)
      lnB_g/b    : (L, 1, Dp)    f32                  channel-mix LayerNorm
      cW1, cb1   : (L, Dp, Dep) bf16, (L, 1, Dep) f32 Linear #1 (W^T, b)
      cW2, cb2   : (L, Dep, Dp) bf16, (L, 1, Dp)  f32 Linear #2 (W^T, b)
      hg, hb     : (2, 1, Dp)    f32                  ln1 / ln2
      hwT, hbo   : (2, Dp, Cp) bf16, (2, 1, Cp) f32   out1 / out2 Linear
      o1, o2     : (1, 1, Cp)    f32
    """
    inv_d = 1.0 / float(d_true)

    def kernel(
        x_ref, ew_ref, eb_ref,
        lnA_g_ref, lnA_b_ref, tW1_ref, tb1_ref, tW2_ref, tb2_ref,
        lnB_g_ref, lnB_b_ref, cW1_ref, cb1_ref, cW2_ref, cb2_ref,
        hg_ref, hb_ref, hwT_ref, hbo_ref,
        o1_ref, o2_ref,
    ):
        # ---- embedding: Linear(F -> Dp) for this batch element ----
        x = (
            jnp.dot(x_ref[0].astype(jnp.bfloat16), ew_ref[...],
                    preferred_element_type=jnp.float32)
            + eb_ref[...]
        )  # (P, Dp) f32; pad lanes are exactly 0

        def block(x, l):
            # token mixing: PreNormResidual(LayerNorm -> Conv1d(k=1) FF over P)
            h = _layernorm(x, lnA_g_ref[l], lnA_b_ref[l], inv_d)
            h = jnp.dot(tW1_ref[l], h, preferred_element_type=jnp.float32) + tb1_ref[l]
            h = _gelu(h)
            h = jnp.dot(tW2_ref[l], h, preferred_element_type=jnp.float32) + tb2_ref[l]
            x = x + h
            # channel mixing: PreNormResidual(LayerNorm -> Linear FF over D)
            h = _layernorm(x, lnB_g_ref[l], lnB_b_ref[l], inv_d)
            h = jnp.dot(h.astype(jnp.bfloat16), cW1_ref[l],
                        preferred_element_type=jnp.float32) + cb1_ref[l]
            h = _gelu(h)
            h = jnp.dot(h.astype(jnp.bfloat16), cW2_ref[l],
                        preferred_element_type=jnp.float32) + cb2_ref[l]
            return x + h

        # self.mixer (shared trunk) — layers fully unrolled at trace time
        for l in range(n_mixer):
            x = block(x, l)
        # self.fea1 / self.fea2 branches
        f1 = x
        for l in range(n_mixer, n_mixer + n_reg):
            f1 = block(f1, l)
        f2 = x
        for l in range(n_mixer + n_reg, n_mixer + 2 * n_reg):
            f2 = block(f2, l)

        def head(f, i, o_ref):
            h = _layernorm(f, hg_ref[i], hb_ref[i], inv_d)                   # (P, Dp)
            t = jnp.dot(h.astype(jnp.bfloat16), hwT_ref[i],
                        preferred_element_type=jnp.float32)                  # (P, Cp)
            logits = jnp.mean(t, axis=0, keepdims=True) + hbo_ref[i]         # (1, Cp)
            o_ref[0] = jax.nn.sigmoid(logits)

        head(f1, 0, o1_ref)
        head(f2, 1, o2_ref)

    return kernel


# ------------------------------- packing --------------------------------------
def pack_params(params, D, De, C):
    """One-time packing (call once at init, reuse every forward):
       * stack per-layer weights along a leading layer axis,
       * zero-pad D/De/C to lane multiples of 128,
       * lane-mask biases / LN params so activation pad lanes stay exactly zero,
       * cast lane-dense matmul weights to bf16 (f32 accumulation in-kernel)."""
    Dp = _round_up(D, LANE)
    Dep = _round_up(De, LANE)
    Cp = _round_up(C, LANE)

    def padto(a, *tgt):
        return jnp.pad(a, [(0, t - s) for s, t in zip(a.shape, tgt)])

    blocks = list(params["mixer"]) + list(params["fea1"]) + list(params["fea2"])

    def stack_ln(i):
        return jnp.stack([padto(blk[i], 1, Dp) for blk in blocks])          # (L,1,Dp)

    # Token-mix Conv1d weights: few KiB, K=P/Pe contractions — kept f32 on purpose.
    tW1 = jnp.stack([blk[2] for blk in blocks])                              # (L,Pe,P)
    tW2 = jnp.stack([blk[4] for blk in blocks])                              # (L,P,Pe)
    # Conv1d biases broadcast along D; materialize them lane-masked (pad lanes 0)
    # so the padded activation lanes remain exactly zero for the masked LN stats.
    tb1 = jnp.stack([padto(jnp.tile(blk[3], (1, D)), blk[3].shape[0], Dp)
                     for blk in blocks])                                     # (L,Pe,Dp)
    tb2 = jnp.stack([padto(jnp.tile(blk[5], (1, D)), blk[5].shape[0], Dp)
                     for blk in blocks])                                     # (L,P,Dp)

    cW1 = jnp.stack([padto(blk[8], Dp, Dep) for blk in blocks]).astype(jnp.bfloat16)
    cb1 = jnp.stack([padto(blk[9], 1, Dep) for blk in blocks])
    cW2 = jnp.stack([padto(blk[10], Dep, Dp) for blk in blocks]).astype(jnp.bfloat16)
    cb2 = jnp.stack([padto(blk[11], 1, Dp) for blk in blocks])

    ew, eb = params["embed"]
    ew = padto(ew, ew.shape[0], Dp).astype(jnp.bfloat16)                     # (F,Dp)
    eb = padto(eb, 1, Dp)                                                    # (1,Dp)

    heads = (params["head1"], params["head2"])
    hg = jnp.stack([padto(h[0], 1, Dp) for h in heads])                      # (2,1,Dp)
    hb = jnp.stack([padto(h[1], 1, Dp) for h in heads])
    hwT = jnp.stack([padto(h[2], Dp, Cp) for h in heads]).astype(jnp.bfloat16)
    hbo = jnp.stack([padto(h[3], 1, Cp) for h in heads])                     # (2,1,Cp)

    return (ew, eb,
            stack_ln(0), stack_ln(1), tW1, tb1, tW2, tb2,
            stack_ln(6), stack_ln(7), cW1, cb1, cW2, cb2,
            hg, hb, hwT, hbo)


# ------------------------------- wrapper ---------------------------------------
def regmixer3d_forward(x_raw, packed, *, n_mixer, n_reg, D, C):
    """x_raw: (B, num_patches, channels, *patch_size); `packed` = pack_params(...)
    computed ONCE at init (not rebuilt per call)."""
    B, P = x_raw.shape[:2]
    x = x_raw.reshape(B, P, -1).astype(jnp.float32)          # (B, P, F)
    F = x.shape[-1]
    Cp = packed[-2].shape[-1]                                 # hwT: (2, Dp, Cp)

    kernel = make_fused_kernel(n_mixer, n_reg, D)

    def full_spec(a):
        n = a.ndim

        def idx(b):
            return (0,) * n

        return pl.BlockSpec(a.shape, idx)

    in_specs = ([pl.BlockSpec((1, P, F), lambda b: (b, 0, 0))]
                + [full_spec(a) for a in packed])
    out_spec = pl.BlockSpec((1, 1, Cp), lambda b: (b, 0, 0))  # lane-dense (Cp=128)
    out_shape = (jax.ShapeDtypeStruct((B, 1, Cp), jnp.float32),
                 jax.ShapeDtypeStruct((B, 1, Cp), jnp.float32))

    o1, o2 = pl.pallas_call(
        kernel,
        out_shape=out_shape,
        grid_spec=pltpu.PrefetchScalarGridSpec(
            num_scalar_prefetch=0,
            grid=(B,),                      # per-batch programs; megacore-shardable
            in_specs=in_specs,
            out_specs=[out_spec, out_spec],
        ),
        compiler_params=pltpu.CompilerParams(
            dimension_semantics=("parallel",),
            vmem_limit_bytes=32 * 1024 * 1024,
        ),
    )(x, *packed)
    return o1[:, 0, :C], o2[:, 0, :C]


# --------------------------- pure-JAX reference -------------------------------
def _ref_ln(x, g, b):
    mu = x.mean(-1, keepdims=True)
    var = ((x - mu) ** 2).mean(-1, keepdims=True)
    return (x - mu) / jnp.sqrt(var + LN_EPS) * g + b


def _ref_block(x, p):
    lnA_g, lnA_b, tW1, tb1, tW2, tb2, lnB_g, lnB_b, cW1, cb1, cW2, cb2 = p
    h = _ref_ln(x, lnA_g, lnA_b)
    h = jnp.einsum("op,bpd->bod", tW1, h) + tb1[None]
    h = _gelu(h)
    h = jnp.einsum("op,bpd->bod", tW2, h) + tb2[None]
    x = x + h
    h = _ref_ln(x, lnB_g, lnB_b)
    h = jnp.einsum("bpd,de->bpe", h, cW1) + cb1
    h = _gelu(h)
    h = jnp.einsum("bpe,ed->bpd", h, cW2) + cb2
    return x + h


def _ref_head(x, p):
    g, b, wT, bo = p
    h = _ref_ln(x, g, b)
    m = h.mean(axis=1)
    return jax.nn.sigmoid(m @ wT + bo)


def regmixer3d_reference(x_raw, params):
    B, P = x_raw.shape[:2]
    x = x_raw.reshape(B, P, -1).astype(jnp.float32)
    wT, b = params["embed"]
    x = x @ wT + b
    for bp in params["mixer"]:
        x = _ref_block(x, bp)
    f1, f2 = x, x
    for bp in params["fea1"]:
        f1 = _ref_block(f1, bp)
    for bp in params["fea2"]:
        f2 = _ref_block(f2, bp)
    return _ref_head(f1, params["head1"]), _ref_head(f2, params["head2"])


# ------------------------------ parameters ------------------------------------
def init_params(key, F, P, D, C, ef, n_mixer, n_reg):
    keys = iter(jax.random.split(key, 256))

    def nrm(shape, scale=0.05):
        return (scale * jax.random.normal(next(keys), shape)).astype(jnp.float32)

    def block_params():
        Pe, De = P * ef, D * ef
        return (
            jnp.ones((1, D), jnp.float32), jnp.zeros((1, D), jnp.float32),   # ln (token)
            nrm((Pe, P)), nrm((Pe, 1)),                                      # Conv1d #1 (W, b)
            nrm((P, Pe)), nrm((P, 1)),                                       # Conv1d #2 (W, b)
            jnp.ones((1, D), jnp.float32), jnp.zeros((1, D), jnp.float32),   # ln (channel)
            nrm((D, De)), nrm((1, De)),                                      # Linear #1 (W^T, b)
            nrm((De, D)), nrm((1, D)),                                       # Linear #2 (W^T, b)
        )

    def head_params():
        return (
            jnp.ones((1, D), jnp.float32), jnp.zeros((1, D), jnp.float32),   # LayerNorm
            nrm((D, C)), nrm((1, C)),                                        # Linear (W^T, b)
        )

    return dict(
        embed=(nrm((F, D)), nrm((1, D))),
        mixer=[block_params() for _ in range(n_mixer)],
        fea1=[block_params() for _ in range(n_reg)],
        fea2=[block_params() for _ in range(n_reg)],
        head1=head_params(),
        head2=head_params(),
    )


# --------------------------------- main ---------------------------------------
if __name__ == "__main__":
    # Module hyperparameters (small, consistent with RegMixer3D.__init__)
    B = 2
    num_patches = 8
    channels = 4
    patch_size = (2, 2, 2)
    dim = 32
    depth = 2
    num_classes = 3
    expansion_factor = 4
    num_regmixer = 1
    n_mixer = depth - num_regmixer            # blocks in self.mixer
    F = int(np.prod(patch_size) * channels)   # flattened per-patch features

    # NOTE: nn.Dropout is identity (p=0.0 / eval mode); training utilities
    # (BCELoss/MSELoss, fit, evaluate_data, embed_data) are not part of forward.

    key = jax.random.PRNGKey(0)
    k_x, k_p = jax.random.split(key)
    # input: (B, num_patches, channels, *patch_size)
    x = jax.random.normal(k_x, (B, num_patches, channels, *patch_size), jnp.float32)
    params = init_params(k_p, F, num_patches, dim, num_classes,
                         expansion_factor, n_mixer, num_regmixer)

    # Pack / pad / bf16-cast weights ONCE at init; reused for every forward call.
    packed = pack_params(params, dim, dim * expansion_factor, num_classes)

    out1, out2 = regmixer3d_forward(x, packed, n_mixer=n_mixer, n_reg=num_regmixer,
                                    D=dim, C=num_classes)
    out1, out2 = jax.block_until_ready(out1), jax.block_until_ready(out2)

    # f32 reference; tolerance loosened to bf16-matmul level (f32 accumulation).
    ref1, ref2 = regmixer3d_reference(x, params)
    np.testing.assert_allclose(np.asarray(out1), np.asarray(ref1), atol=1e-2, rtol=1e-2)
    np.testing.assert_allclose(np.asarray(out2), np.asarray(ref2), atol=1e-2, rtol=1e-2)

    print("KERNEL_OK")
</pallas_src>

<mosaic_0001>
module attributes {stable_mosaic.version = 11 : i64} {
  func.func @kernel(%arg0: i32, %arg1: memref<1x8x32xf32, #tpu.memory_space<vmem>>, %arg2: memref<32x128xbf16, #tpu.memory_space<vmem>>, %arg3: memref<1x128xf32, #tpu.memory_space<vmem>>, %arg4: memref<3x1x128xf32, #tpu.memory_space<vmem>>, %arg5: memref<3x1x128xf32, #tpu.memory_space<vmem>>, %arg6: memref<3x32x8xf32, #tpu.memory_space<vmem>>, %arg7: memref<3x32x128xf32, #tpu.memory_space<vmem>>, %arg8: memref<3x8x32xf32, #tpu.memory_space<vmem>>, %arg9: memref<3x8x128xf32, #tpu.memory_space<vmem>>, %arg10: memref<3x1x128xf32, #tpu.memory_space<vmem>>, %arg11: memref<3x1x128xf32, #tpu.memory_space<vmem>>, %arg12: memref<3x128x128xbf16, #tpu.memory_space<vmem>>, %arg13: memref<3x1x128xf32, #tpu.memory_space<vmem>>, %arg14: memref<3x128x128xbf16, #tpu.memory_space<vmem>>, %arg15: memref<3x1x128xf32, #tpu.memory_space<vmem>>, %arg16: memref<2x1x128xf32, #tpu.memory_space<vmem>>, %arg17: memref<2x1x128xf32, #tpu.memory_space<vmem>>, %arg18: memref<2x128x128xbf16, #tpu.memory_space<vmem>>, %arg19: memref<2x1x128xf32, #tpu.memory_space<vmem>>, %arg20: memref<1x1x128xf32, #tpu.memory_space<vmem>>, %arg21: memref<1x1x128xf32, #tpu.memory_space<vmem>>) attributes {dimension_semantics = [#tpu.dimension_semantics<parallel>], iteration_bounds = array<i64: 2>, scalar_prefetch = 0 : i64, scratch_operands = 0 : i64, tpu.core_type = #tpu.core_type<tc>, window_params = [{transform_indices = @transform_0, window_bounds = array<i64: 1, 8, 32>}, {pipeline_mode = #tpu.pipeline_mode<synchronous>, transform_indices = @transform_1, window_bounds = array<i64: 32, 128>}, {pipeline_mode = #tpu.pipeline_mode<synchronous>, transform_indices = @transform_2, window_bounds = array<i64: 1, 128>}, {pipeline_mode = #tpu.pipeline_mode<synchronous>, transform_indices = @transform_3, window_bounds = array<i64: 3, 1, 128>}, {pipeline_mode = #tpu.pipeline_mode<synchronous>, transform_indices = @transform_4, window_bounds = array<i64: 3, 1, 128>}, {pipeline_mode = #tpu.pipeline_mode<synchronous>, transform_indices = @transform_5, window_bounds = array<i64: 3, 32, 8>}, {pipeline_mode = #tpu.pipeline_mode<synchronous>, transform_indices = @transform_6, window_bounds = array<i64: 3, 32, 128>}, {pipeline_mode = #tpu.pipeline_mode<synchronous>, transform_indices = @transform_7, window_bounds = array<i64: 3, 8, 32>}, {pipeline_mode = #tpu.pipeline_mode<synchronous>, transform_indices = @transform_8, window_bounds = array<i64: 3, 8, 128>}, {pipeline_mode = #tpu.pipeline_mode<synchronous>, transform_indices = @transform_9, window_bounds = array<i64: 3, 1, 128>}, {pipeline_mode = #tpu.pipeline_mode<synchronous>, transform_indices = @transform_10, window_bounds = array<i64: 3, 1, 128>}, {pipeline_mode = #tpu.pipeline_mode<synchronous>, transform_indices = @transform_11, window_bounds = array<i64: 3, 128, 128>}, {pipeline_mode = #tpu.pipeline_mode<synchronous>, transform_indices = @transform_12, window_bounds = array<i64: 3, 1, 128>}, {pipeline_mode = #tpu.pipeline_mode<synchronous>, transform_indices = @transform_13, window_bounds = array<i64: 3, 128, 128>}, {pipeline_mode = #tpu.pipeline_mode<synchronous>, transform_indices = @transform_14, window_bounds = array<i64: 3, 1, 128>}, {pipeline_mode = #tpu.pipeline_mode<synchronous>, transform_indices = @transform_15, window_bounds = array<i64: 2, 1, 128>}, {pipeline_mode = #tpu.pipeline_mode<synchronous>, transform_indices = @transform_16, window_bounds = array<i64: 2, 1, 128>}, {pipeline_mode = #tpu.pipeline_mode<synchronous>, transform_indices = @transform_17, window_bounds = array<i64: 2, 128, 128>}, {pipeline_mode = #tpu.pipeline_mode<synchronous>, transform_indices = @transform_18, window_bounds = array<i64: 2, 1, 128>}, {transform_indices = @transform_19, window_bounds = array<i64: 1, 1, 128>}, {transform_indices = @transform_20, window_bounds = array<i64: 1, 1, 128>}]} {
    %c0 = arith.constant 0 : index
    %c0_0 = arith.constant 0 : index
    %c0_1 = arith.constant 0 : index
    %0 = vector.load %arg1[%c0, %c0_0, %c0_1] : memref<1x8x32xf32, #tpu.memory_space<vmem>>, vector<1x8x32xf32>
    %1 = vector.shape_cast %0 : vector<1x8x32xf32> to vector<8x32xf32>
    %2 = arith.truncf %1 : vector<8x32xf32> to vector<8x32xbf16>
    %c0_2 = arith.constant 0 : index
    %c0_3 = arith.constant 0 : index
    %3 = vector.load %arg2[%c0_2, %c0_3] : memref<32x128xbf16, #tpu.memory_space<vmem>>, vector<32x128xbf16>
    %cst = arith.constant dense<0.000000e+00> : vector<8x128xf32>
    %4 = tpu.matmul %2, %3, %cst {dimension_numbers = #tpu.dot_dimension_numbers<[1], [0], [0], [1], [0, 0, 1, 1], [], []>} : vector<8x32xbf16>, vector<32x128xbf16>, vector<8x128xf32> -> vector<8x128xf32>
    %c0_4 = arith.constant 0 : index
    %c0_5 = arith.constant 0 : index
    %5 = vector.load %arg3[%c0_4, %c0_5] : memref<1x128xf32, #tpu.memory_space<vmem>>, vector<1x128xf32>
    %6 = vector.broadcast %5 : vector<1x128xf32> to vector<8x128xf32>
    %7 = arith.addf %4, %6 : vector<8x128xf32>
    %c0_6 = arith.constant 0 : index
    %c0_7 = arith.constant 0 : index
    %c0_8 = arith.constant 0 : index
    %8 = vector.load %arg4[%c0_6, %c0_7, %c0_8] : memref<3x1x128xf32, #tpu.memory_space<vmem>>, vector<1x1x128xf32>
    %9 = vector.shape_cast %8 : vector<1x1x128xf32> to vector<1x128xf32>
    %c0_9 = arith.constant 0 : index
    %c0_10 = arith.constant 0 : index
    %c0_11 = arith.constant 0 : index
    %10 = vector.load %arg5[%c0_9, %c0_10, %c0_11] : memref<3x1x128xf32, #tpu.memory_space<vmem>>, vector<1x1x128xf32>
    %11 = vector.shape_cast %10 : vector<1x1x128xf32> to vector<1x128xf32>
    %cst_12 = arith.constant dense<0.000000e+00> : vector<8xf32>
    %12 = vector.multi_reduction <add>, %7, %cst_12 [1] : vector<8x128xf32> to vector<8xf32>
    %13 = vector.shape_cast %12 : vector<8xf32> to vector<8x1xf32>
    %14 = arith.mulf %7, %7 : vector<8x128xf32>
    %cst_13 = arith.constant dense<0.000000e+00> : vector<8xf32>
    %15 = vector.multi_reduction <add>, %14, %cst_13 [1] : vector<8x128xf32> to vector<8xf32>
    %16 = vector.shape_cast %15 : vector<8xf32> to vector<8x1xf32>
    %cst_14 = arith.constant 3.125000e-02 : f32
    %17 = vector.broadcast %cst_14 : f32 to vector<8x1xf32>
    %18 = arith.mulf %13, %17 : vector<8x1xf32>
    %cst_15 = arith.constant 3.125000e-02 : f32
    %19 = vector.broadcast %cst_15 : f32 to vector<8x1xf32>
    %20 = arith.mulf %16, %19 : vector<8x1xf32>
    %21 = arith.mulf %18, %18 : vector<8x1xf32>
    %22 = arith.subf %20, %21 : vector<8x1xf32>
    %23 = vector.broadcast %18 : vector<8x1xf32> to vector<8x128xf32>
    %24 = arith.subf %7, %23 : vector<8x128xf32>
    %cst_16 = arith.constant 9.99999974E-6 : f32
    %25 = vector.broadcast %cst_16 : f32 to vector<8x1xf32>
    %26 = arith.addf %22, %25 : vector<8x1xf32>
    %27 = math.rsqrt %26 : vector<8x1xf32>
    %28 = vector.broadcast %27 : vector<8x1xf32> to vector<8x128xf32>
    %29 = arith.mulf %24, %28 : vector<8x128xf32>
    %30 = vector.broadcast %9 : vector<1x128xf32> to vector<8x128xf32>
    %31 = arith.mulf %29, %30 : vector<8x128xf32>
    %32 = vector.broadcast %11 : vector<1x128xf32> to vector<8x128xf32>
    %33 = arith.addf %31, %32 : vector<8x128xf32>
    %c0_17 = arith.constant 0 : index
    %c0_18 = arith.constant 0 : index
    %c0_19 = arith.constant 0 : index
    %34 = vector.load %arg6[%c0_17, %c0_18, %c0_19] : memref<3x32x8xf32, #tpu.memory_space<vmem>>, vector<1x32x8xf32>
    %35 = vector.shape_cast %34 : vector<1x32x8xf32> to vector<32x8xf32>
    %cst_20 = arith.constant dense<0.000000e+00> : vector<32x128xf32>
    %36 = tpu.matmul %35, %33, %cst_20 {dimension_numbers = #tpu.dot_dimension_numbers<[1], [0], [0], [1], [0, 0, 1, 1], [], []>} : vector<32x8xf32>, vector<8x128xf32>, vector<32x128xf32> -> vector<32x128xf32>
    %c0_21 = arith.constant 0 : index
    %c0_22 = arith.constant 0 : index
    %c0_23 = arith.constant 0 : index
    %37 = vector.load %arg7[%c0_21, %c0_22, %c0_23] : memref<3x32x128xf32, #tpu.memory_space<vmem>>, vector<1x32x128xf32>
    %38 = vector.shape_cast %37 : vector<1x32x128xf32> to vector<32x128xf32>
    %39 = arith.addf %36, %38 : vector<32x128xf32>
    %cst_24 = arith.constant 5.000000e-01 : f32
    %40 = vector.broadcast %cst_24 : f32 to vector<32x128xf32>
    %41 = arith.mulf %40, %39 : vector<32x128xf32>
    %cst_25 = arith.constant 4.471500e-02 : f32
    %42 = vector.broadcast %cst_25 : f32 to vector<32x128xf32>
    %43 = arith.mulf %42, %39 : vector<32x128xf32>
    %44 = arith.mulf %43, %39 : vector<32x128xf32>
    %45 = arith.mulf %44, %39 : vector<32x128xf32>
    %46 = arith.addf %39, %45 : vector<32x128xf32>
    %cst_26 = arith.constant 0.797884583 : f32
    %47 = vector.broadcast %cst_26 : f32 to vector<32x128xf32>
    %48 = arith.mulf %47, %46 : vector<32x128xf32>
    %49 = math.tanh %48 : vector<32x128xf32>
    %cst_27 = arith.constant 1.000000e+00 : f32
    %50 = vector.broadcast %cst_27 : f32 to vector<32x128xf32>
    %51 = arith.addf %50, %49 : vector<32x128xf32>
    %52 = arith.mulf %41, %51 : vector<32x128xf32>
    %c0_28 = arith.constant 0 : index
    %c0_29 = arith.constant 0 : index
    %c0_30 = arith.constant 0 : index
    %53 = vector.load %arg8[%c0_28, %c0_29, %c0_30] : memref<3x8x32xf32, #tpu.memory_space<vmem>>, vector<1x8x32xf32>
    %54 = vector.shape_cast %53 : vector<1x8x32xf32> to vector<8x32xf32>
    %cst_31 = arith.constant dense<0.000000e+00> : vector<8x128xf32>
    %55 = tpu.matmul %54, %52, %cst_31 {dimension_numbers = #tpu.dot_dimension_numbers<[1], [0], [0], [1], [0, 0, 1, 1], [], []>} : vector<8x32xf32>, vector<32x128xf32>, vector<8x128xf32> -> vector<8x128xf32>
    %c0_32 = arith.constant 0 : index
    %c0_33 = arith.constant 0 : index
    %c0_34 = arith.constant 0 : index
    %56 = vector.load %arg9[%c0_32, %c0_33, %c0_34] : memref<3x8x128xf32, #tpu.memory_space<vmem>>, vector<1x8x128xf32>
    %57 = vector.shape_cast %56 : vector<1x8x128xf32> to vector<8x128xf32>
    %58 = arith.addf %55, %57 : vector<8x128xf32>
    %59 = arith.addf %7, %58 : vector<8x128xf32>
    %c0_35 = arith.constant 0 : index
    %c0_36 = arith.constant 0 : index
    %c0_37 = arith.constant 0 : index
    %60 = vector.load %arg10[%c0_35, %c0_36, %c0_37] : memref<3x1x128xf32, #tpu.memory_space<vmem>>, vector<1x1x128xf32>
    %61 = vector.shape_cast %60 : vector<1x1x128xf32> to vector<1x128xf32>
    %c0_38 = arith.constant 0 : index
    %c0_39 = arith.constant 0 : index
    %c0_40 = arith.constant 0 : index
    %62 = vector.load %arg11[%c0_38, %c0_39, %c0_40] : memref<3x1x128xf32, #tpu.memory_space<vmem>>, vector<1x1x128xf32>
    %63 = vector.shape_cast %62 : vector<1x1x128xf32> to vector<1x128xf32>
    %cst_41 = arith.constant dense<0.000000e+00> : vector<8xf32>
    %64 = vector.multi_reduction <add>, %59, %cst_41 [1] : vector<8x128xf32> to vector<8xf32>
    %65 = vector.shape_cast %64 : vector<8xf32> to vector<8x1xf32>
    %66 = arith.mulf %59, %59 : vector<8x128xf32>
    %cst_42 = arith.constant dense<0.000000e+00> : vector<8xf32>
    %67 = vector.multi_reduction <add>, %66, %cst_42 [1] : vector<8x128xf32> to vector<8xf32>
    %68 = vector.shape_cast %67 : vector<8xf32> to vector<8x1xf32>
    %cst_43 = arith.constant 3.125000e-02 : f32
    %69 = vector.broadcast %cst_43 : f32 to vector<8x1xf32>
    %70 = arith.mulf %65, %69 : vector<8x1xf32>
    %cst_44 = arith.constant 3.125000e-02 : f32
    %71 = vector.broadcast %cst_44 : f32 to vector<8x1xf32>
    %72 = arith.mulf %68, %71 : vector<8x1xf32>
    %73 = arith.mulf %70, %70 : vector<8x1xf32>
    %74 = arith.subf %72, %73 : vector<8x1xf32>
    %75 = vector.broadcast %70 : vector<8x1xf32> to vector<8x128xf32>
    %76 = arith.subf %59, %75 : vector<8x128xf32>
    %cst_45 = arith.constant 9.99999974E-6 : f32
    %77 = vector.broadcast %cst_45 : f32 to vector<8x1xf32>
    %78 = arith.addf %74, %77 : vector<8x1xf32>
    %79 = math.rsqrt %78 : vector<8x1xf32>
    %80 = vector.broadcast %79 : vector<8x1xf32> to vector<8x128xf32>
    %81 = arith.mulf %76, %80 : vector<8x128xf32>
    %82 = vector.broadcast %61 : vector<1x128xf32> to vector<8x128xf32>
    %83 = arith.mulf %81, %82 : vector<8x128xf32>
    %84 = vector.broadcast %63 : vector<1x128xf32> to vector<8x128xf32>
    %85 = arith.addf %83, %84 : vector<8x128xf32>
    %86 = arith.truncf %85 : vector<8x128xf32> to vector<8x128xbf16>
    %c0_46 = arith.constant 0 : index
    %c0_47 = arith.constant 0 : index
    %c0_48 = arith.constant 0 : index
    %87 = vector.load %arg12[%c0_46, %c0_47, %c0_48] : memref<3x128x128xbf16, #tpu.memory_space<vmem>>, vector<1x128x128xbf16>
    %88 = vector.shape_cast %87 : vector<1x128x128xbf16> to vector<128x128xbf16>
    %cst_49 = arith.constant dense<0.000000e+00> : vector<8x128xf32>
    %89 = tpu.matmul %86, %88, %cst_49 {dimension_numbers = #tpu.dot_dimension_numbers<[1], [0], [0], [1], [0, 0, 1, 1], [], []>} : vector<8x128xbf16>, vector<128x128xbf16>, vector<8x128xf32> -> vector<8x128xf32>
    %c0_50 = arith.constant 0 : index
    %c0_51 = arith.constant 0 : index
    %c0_52 = arith.constant 0 : index
    %90 = vector.load %arg13[%c0_50, %c0_51, %c0_52] : memref<3x1x128xf32, #tpu.memory_space<vmem>>, vector<1x1x128xf32>
    %91 = vector.shape_cast %90 : vector<1x1x128xf32> to vector<1x128xf32>
    %92 = vector.broadcast %91 : vector<1x128xf32> to vector<8x128xf32>
    %93 = arith.addf %89, %92 : vector<8x128xf32>
    %cst_53 = arith.constant 5.000000e-01 : f32
    %94 = vector.broadcast %cst_53 : f32 to vector<8x128xf32>
    %95 = arith.mulf %94, %93 : vector<8x128xf32>
    %cst_54 = arith.constant 4.471500e-02 : f32
    %96 = vector.broadcast %cst_54 : f32 to vector<8x128xf32>
    %97 = arith.mulf %96, %93 : vector<8x128xf32>
    %98 = arith.mulf %97, %93 : vector<8x128xf32>
    %99 = arith.mulf %98, %93 : vector<8x128xf32>
    %100 = arith.addf %93, %99 : vector<8x128xf32>
    %cst_55 = arith.constant 0.797884583 : f32
    %101 = vector.broadcast %cst_55 : f32 to vector<8x128xf32>
    %102 = arith.mulf %101, %100 : vector<8x128xf32>
    %103 = math.tanh %102 : vector<8x128xf32>
    %cst_56 = arith.constant 1.000000e+00 : f32
    %104 = vector.broadcast %cst_56 : f32 to vector<8x128xf32>
    %105 = arith.addf %104, %103 : vector<8x128xf32>
    %106 = arith.mulf %95, %105 : vector<8x128xf32>
    %107 = arith.truncf %106 : vector<8x128xf32> to vector<8x128xbf16>
    %c0_57 = arith.constant 0 : index
    %c0_58 = arith.constant 0 : index
    %c0_59 = arith.constant 0 : index
    %108 = vector.load %arg14[%c0_57, %c0_58, %c0_59] : memref<3x128x128xbf16, #tpu.memory_space<vmem>>, vector<1x128x128xbf16>
    %109 = vector.shape_cast %108 : vector<1x128x128xbf16> to vector<128x128xbf16>
    %cst_60 = arith.constant dense<0.000000e+00> : vector<8x128xf32>
    %110 = tpu.matmul %107, %109, %cst_60 {dimension_numbers = #tpu.dot_dimension_numbers<[1], [0], [0], [1], [0, 0, 1, 1], [], []>} : vector<8x128xbf16>, vector<128x128xbf16>, vector<8x128xf32> -> vector<8x128xf32>
    %c0_61 = arith.constant 0 : index
    %c0_62 = arith.constant 0 : index
    %c0_63 = arith.constant 0 : index
    %111 = vector.load %arg15[%c0_61, %c0_62, %c0_63] : memref<3x1x128xf32, #tpu.memory_space<vmem>>, vector<1x1x128xf32>
    %112 = vector.shape_cast %111 : vector<1x1x128xf32> to vector<1x128xf32>
    %113 = vector.broadcast %112 : vector<1x128xf32> to vector<8x128xf32>
    %114 = arith.addf %110, %113 : vector<8x128xf32>
    %115 = arith.addf %59, %114 : vector<8x128xf32>
    %c1 = arith.constant 1 : index
    %c0_64 = arith.constant 0 : index
    %c0_65 = arith.constant 0 : index
    %116 = vector.load %arg4[%c1, %c0_64, %c0_65] : memref<3x1x128xf32, #tpu.memory_space<vmem>>, vector<1x1x128xf32>
    %117 = vector.shape_cast %116 : vector<1x1x128xf32> to vector<1x128xf32>
    %c1_66 = arith.constant 1 : index
    %c0_67 = arith.constant 0 : index
    %c0_68 = arith.constant 0 : index
    %118 = vector.load %arg5[%c1_66, %c0_67, %c0_68] : memref<3x1x128xf32, #tpu.memory_space<vmem>>, vector<1x1x128xf32>
    %119 = vector.shape_cast %118 : vector<1x1x128xf32> to vector<1x128xf32>
    %cst_69 = arith.constant dense<0.000000e+00> : vector<8xf32>
    %120 = vector.multi_reduction <add>, %115, %cst_69 [1] : vector<8x128xf32> to vector<8xf32>
    %121 = vector.shape_cast %120 : vector<8xf32> to vector<8x1xf32>
    %122 = arith.mulf %115, %115 : vector<8x128xf32>
    %cst_70 = arith.constant dense<0.000000e+00> : vector<8xf32>
    %123 = vector.multi_reduction <add>, %122, %cst_70 [1] : vector<8x128xf32> to vector<8xf32>
    %124 = vector.shape_cast %123 : vector<8xf32> to vector<8x1xf32>
    %cst_71 = arith.constant 3.125000e-02 : f32
    %125 = vector.broadcast %cst_71 : f32 to vector<8x1xf32>
    %126 = arith.mulf %121, %125 : vector<8x1xf32>
    %cst_72 = arith.constant 3.125000e-02 : f32
    %127 = vector.broadcast %cst_72 : f32 to vector<8x1xf32>
    %128 = arith.mulf %124, %127 : vector<8x1xf32>
    %129 = arith.mulf %126, %126 : vector<8x1xf32>
    %130 = arith.subf %128, %129 : vector<8x1xf32>
    %131 = vector.broadcast %126 : vector<8x1xf32> to vector<8x128xf32>
    %132 = arith.subf %115, %131 : vector<8x128xf32>
    %cst_73 = arith.constant 9.99999974E-6 : f32
    %133 = vector.broadcast %cst_73 : f32 to vector<8x1xf32>
    %134 = arith.addf %130, %133 : vector<8x1xf32>
    %135 = math.rsqrt %134 : vector<8x1xf32>
    %136 = vector.broadcast %135 : vector<8x1xf32> to vector<8x128xf32>
    %137 = arith.mulf %132, %136 : vector<8x128xf32>
    %138 = vector.broadcast %117 : vector<1x128xf32> to vector<8x128xf32>
    %139 = arith.mulf %137, %138 : vector<8x128xf32>
    %140 = vector.broadcast %119 : vector<1x128xf32> to vector<8x128xf32>
    %141 = arith.addf %139, %140 : vector<8x128xf32>
    %c1_74 = arith.constant 1 : index
    %c0_75 = arith.constant 0 : index
    %c0_76 = arith.constant 0 : index
    %142 = vector.load %arg6[%c1_74, %c0_75, %c0_76] : memref<3x32x8xf32, #tpu.memory_space<vmem>>, vector<1x32x8xf32>
    %143 = vector.shape_cast %142 : vector<1x32x8xf32> to vector<32x8xf32>
    %cst_77 = arith.constant dense<0.000000e+00> : vector<32x128xf32>
    %144 = tpu.matmul %143, %141, %cst_77 {dimension_numbers = #tpu.dot_dimension_numbers<[1], [0], [0], [1], [0, 0, 1, 1], [], []>} : vector<32x8xf32>, vector<8x128xf32>, vector<32x128xf32> -> vector<32x128xf32>
    %c1_78 = arith.constant 1 : index
    %c0_79 = arith.constant 0 : index
    %c0_80 = arith.constant 0 : index
    %145 = vector.load %arg7[%c1_78, %c0_79, %c0_80] : memref<3x32x128xf32, #tpu.memory_space<vmem>>, vector<1x32x128xf32>
    %146 = vector.shape_cast %145 : vector<1x32x128xf32> to vector<32x128xf32>
    %147 = arith.addf %144, %146 : vector<32x128xf32>
    %cst_81 = arith.constant 5.000000e-01 : f32
    %148 = vector.broadcast %cst_81 : f32 to vector<32x128xf32>
    %149 = arith.mulf %148, %147 : vector<32x128xf32>
    %cst_82 = arith.constant 4.471500e-02 : f32
    %150 = vector.broadcast %cst_82 : f32 to vector<32x128xf32>
    %151 = arith.mulf %150, %147 : vector<32x128xf32>
    %152 = arith.mulf %151, %147 : vector<32x128xf32>
    %153 = arith.mulf %152, %147 : vector<32x128xf32>
    %154 = arith.addf %147, %153 : vector<32x128xf32>
    %cst_83 = arith.constant 0.797884583 : f32
    %155 = vector.broadcast %cst_83 : f32 to vector<32x128xf32>
    %156 = arith.mulf %155, %154 : vector<32x128xf32>
    %157 = math.tanh %156 : vector<32x128xf32>
    %cst_84 = arith.constant 1.000000e+00 : f32
    %158 = vector.broadcast %cst_84 : f32 to vector<32x128xf32>
    %159 = arith.addf %158, %157 : vector<32x128xf32>
    %160 = arith.mulf %149, %159 : vector<32x128xf32>
    %c1_85 = arith.constant 1 : index
    %c0_86 = arith.constant 0 : index
    %c0_87 = arith.constant 0 : index
    %161 = vector.load %arg8[%c1_85, %c0_86, %c0_87] : memref<3x8x32xf32, #tpu.memory_space<vmem>>, vector<1x8x32xf32>
    %162 = vector.shape_cast %161 : vector<1x8x32xf32> to vector<8x32xf32>
    %cst_88 = arith.constant dense<0.000000e+00> : vector<8x128xf32>
    %163 = tpu.matmul %162, %160, %cst_88 {dimension_numbers = #tpu.dot_dimension_numbers<[1], [0], [0], [1], [0, 0, 1, 1], [], []>} : vector<8x32xf32>, vector<32x128xf32>, vector<8x128xf32> -> vector<8x128xf32>
    %c1_89 = arith.constant 1 : index
    %c0_90 = arith.constant 0 : index
    %c0_91 = arith.constant 0 : index
    %164 = vector.load %arg9[%c1_89, %c0_90, %c0_91] : memref<3x8x128xf32, #tpu.memory_space<vmem>>, vector<1x8x128xf32>
    %165 = vector.shape_cast %164 : vector<1x8x128xf32> to vector<8x128xf32>
    %166 = arith.addf %163, %165 : vector<8x128xf32>
    %167 = arith.addf %115, %166 : vector<8x128xf32>
    %c1_92 = arith.constant 1 : index
    %c0_93 = arith.constant 0 : index
    %c0_94 = arith.constant 0 : index
    %168 = vector.load %arg10[%c1_92, %c0_93, %c0_94] : memref<3x1x128xf32, #tpu.memory_space<vmem>>, vector<1x1x128xf32>
    %169 = vector.shape_cast %168 : vector<1x1x128xf32> to vector<1x128xf32>
    %c1_95 = arith.constant 1 : index
    %c0_96 = arith.constant 0 : index
    %c0_97 = arith.constant 0 : index
    %170 = vector.load %arg11[%c1_95, %c0_96, %c0_97] : memref<3x1x128xf32, #tpu.memory_space<vmem>>, vector<1x1x128xf32>
    %171 = vector.shape_cast %170 : vector<1x1x128xf32> to vector<1x128xf32>
    %cst_98 = arith.constant dense<0.000000e+00> : vector<8xf32>
    %172 = vector.multi_reduction <add>, %167, %cst_98 [1] : vector<8x128xf32> to vector<8xf32>
    %173 = vector.shape_cast %172 : vector<8xf32> to vector<8x1xf32>
    %174 = arith.mulf %167, %167 : vector<8x128xf32>
    %cst_99 = arith.constant dense<0.000000e+00> : vector<8xf32>
    %175 = vector.multi_reduction <add>, %174, %cst_99 [1] : vector<8x128xf32> to vector<8xf32>
    %176 = vector.shape_cast %175 : vector<8xf32> to vector<8x1xf32>
    %cst_100 = arith.constant 3.125000e-02 : f32
    %177 = vector.broadcast %cst_100 : f32 to vector<8x1xf32>
    %178 = arith.mulf %173, %177 : vector<8x1xf32>
    %cst_101 = arith.constant 3.125000e-02 : f32
    %179 = vector.broadcast %cst_101 : f32 to vector<8x1xf32>
    %180 = arith.mulf %176, %179 : vector<8x1xf32>
    %181 = arith.mulf %178, %178 : vector<8x1xf32>
    %182 = arith.subf %180, %181 : vector<8x1xf32>
    %183 = vector.broadcast %178 : vector<8x1xf32> to vector<8x128xf32>
    %184 = arith.subf %167, %183 : vector<8x128xf32>
    %cst_102 = arith.constant 9.99999974E-6 : f32
    %185 = vector.broadcast %cst_102 : f32 to vector<8x1xf32>
    %186 = arith.addf %182, %185 : vector<8x1xf32>
    %187 = math.rsqrt %186 : vector<8x1xf32>
    %188 = vector.broadcast %187 : vector<8x1xf32> to vector<8x128xf32>
    %189 = arith.mulf %184, %188 : vector<8x128xf32>
    %190 = vector.broadcast %169 : vector<1x128xf32> to vector<8x128xf32>
    %191 = arith.mulf %189, %190 : vector<8x128xf32>
    %192 = vector.broadcast %171 : vector<1x128xf32> to vector<8x128xf32>
    %193 = arith.addf %191, %192 : vector<8x128xf32>
    %194 = arith.truncf %193 : vector<8x128xf32> to vector<8x128xbf16>
    %c1_103 = arith.constant 1 : index
    %c0_104 = arith.constant 0 : index
    %c0_105 = arith.constant 0 : index
    %195 = vector.load %arg12[%c1_103, %c0_104, %c0_105] : memref<3x128x128xbf16, #tpu.memory_space<vmem>>, vector<1x128x128xbf16>
    %196 = vector.shape_cast %195 : vector<1x128x128xbf16> to vector<128x128xbf16>
    %cst_106 = arith.constant dense<0.000000e+00> : vector<8x128xf32>
    %197 = tpu.matmul %194, %196, %cst_106 {dimension_numbers = #tpu.dot_dimension_numbers<[1], [0], [0], [1], [0, 0, 1, 1], [], []>} : vector<8x128xbf16>, vector<128x128xbf16>, vector<8x128xf32> -> vector<8x128xf32>
    %c1_107 = arith.constant 1 : index
    %c0_108 = arith.constant 0 : index
    %c0_109 = arith.constant 0 : index
    %198 = vector.load %arg13[%c1_107, %c0_108, %c0_109] : memref<3x1x128xf32, #tpu.memory_space<vmem>>, vector<1x1x128xf32>
    %199 = vector.shape_cast %198 : vector<1x1x128xf32> to vector<1x128xf32>
    %200 = vector.broadcast %199 : vector<1x128xf32> to vector<8x128xf32>
    %201 = arith.addf %197, %200 : vector<8x128xf32>
    %cst_110 = arith.constant 5.000000e-01 : f32
    %202 = vector.broadcast %cst_110 : f32 to vector<8x128xf32>
    %203 = arith.mulf %202, %201 : vector<8x128xf32>
    %cst_111 = arith.constant 4.471500e-02 : f32
    %204 = vector.broadcast %cst_111 : f32 to vector<8x128xf32>
    %205 = arith.mulf %204, %201 : vector<8x128xf32>
    %206 = arith.mulf %205, %201 : vector<8x128xf32>
    %207 = arith.mulf %206, %201 : vector<8x128xf32>
    %208 = arith.addf %201, %207 : vector<8x128xf32>
    %cst_112 = arith.constant 0.797884583 : f32
    %209 = vector.broadcast %cst_112 : f32 to vector<8x128xf32>
    %210 = arith.mulf %209, %208 : vector<8x128xf32>
    %211 = math.tanh %210 : vector<8x128xf32>
    %cst_113 = arith.constant 1.000000e+00 : f32
    %212 = vector.broadcast %cst_113 : f32 to vector<8x128xf32>
    %213 = arith.addf %212, %211 : vector<8x128xf32>
    %214 = arith.mulf %203, %213 : vector<8x128xf32>
    %215 = arith.truncf %214 : vector<8x128xf32> to vector<8x128xbf16>
    %c1_114 = arith.constant 1 : index
    %c0_115 = arith.constant 0 : index
    %c0_116 = arith.constant 0 : index
    %216 = vector.load %arg14[%c1_114, %c0_115, %c0_116] : memref<3x128x128xbf16, #tpu.memory_space<vmem>>, vector<1x128x128xbf16>
    %217 = vector.shape_cast %216 : vector<1x128x128xbf16> to vector<128x128xbf16>
    %cst_117 = arith.constant dense<0.000000e+00> : vector<8x128xf32>
    %218 = tpu.matmul %215, %217, %cst_117 {dimension_numbers = #tpu.dot_dimension_numbers<[1], [0], [0], [1], [0, 0, 1, 1], [], []>} : vector<8x128xbf16>, vector<128x128xbf16>, vector<8x128xf32> -> vector<8x128xf32>
    %c1_118 = arith.constant 1 : index
    %c0_119 = arith.constant 0 : index
    %c0_120 = arith.constant 0 : index
    %219 = vector.load %arg15[%c1_118, %c0_119, %c0_120] : memref<3x1x128xf32, #tpu.memory_space<vmem>>, vector<1x1x128xf32>
    %220 = vector.shape_cast %219 : vector<1x1x128xf32> to vector<1x128xf32>
    %221 = vector.broadcast %220 : vector<1x128xf32> to vector<8x128xf32>
    %222 = arith.addf %218, %221 : vector<8x128xf32>
    %223 = arith.addf %167, %222 : vector<8x128xf32>
    %c2 = arith.constant 2 : index
    %c0_121 = arith.constant 0 : index
    %c0_122 = arith.constant 0 : index
    %224 = vector.load %arg4[%c2, %c0_121, %c0_122] : memref<3x1x128xf32, #tpu.memory_space<vmem>>, vector<1x1x128xf32>
    %225 = vector.shape_cast %224 : vector<1x1x128xf32> to vector<1x128xf32>
    %c2_123 = arith.constant 2 : index
    %c0_124 = arith.constant 0 : index
    %c0_125 = arith.constant 0 : index
    %226 = vector.load %arg5[%c2_123, %c0_124, %c0_125] : memref<3x1x128xf32, #tpu.memory_space<vmem>>, vector<1x1x128xf32>
    %227 = vector.shape_cast %226 : vector<1x1x128xf32> to vector<1x128xf32>
    %cst_126 = arith.constant dense<0.000000e+00> : vector<8xf32>
    %228 = vector.multi_reduction <add>, %115, %cst_126 [1] : vector<8x128xf32> to vector<8xf32>
    %229 = vector.shape_cast %228 : vector<8xf32> to vector<8x1xf32>
    %230 = arith.mulf %115, %115 : vector<8x128xf32>
    %cst_127 = arith.constant dense<0.000000e+00> : vector<8xf32>
    %231 = vector.multi_reduction <add>, %230, %cst_127 [1] : vector<8x128xf32> to vector<8xf32>
    %232 = vector.shape_cast %231 : vector<8xf32> to vector<8x1xf32>
    %cst_128 = arith.constant 3.125000e-02 : f32
    %233 = vector.broadcast %cst_128 : f32 to vector<8x1xf32>
    %234 = arith.mulf %229, %233 : vector<8x1xf32>
    %cst_129 = arith.constant 3.125000e-02 : f32
    %235 = vector.broadcast %cst_129 : f32 to vector<8x1xf32>
    %236 = arith.mulf %232, %235 : vector<8x1xf32>
    %237 = arith.mulf %234, %234 : vector<8x1xf32>
    %238 = arith.subf %236, %237 : vector<8x1xf32>
    %239 = vector.broadcast %234 : vector<8x1xf32> to vector<8x128xf32>
    %240 = arith.subf %115, %239 : vector<8x128xf32>
    %cst_130 = arith.constant 9.99999974E-6 : f32
    %241 = vector.broadcast %cst_130 : f32 to vector<8x1xf32>
    %242 = arith.addf %238, %241 : vector<8x1xf32>
    %243 = math.rsqrt %242 : vector<8x1xf32>
    %244 = vector.broadcast %243 : vector<8x1xf32> to vector<8x128xf32>
    %245 = arith.mulf %240, %244 : vector<8x128xf32>
    %246 = vector.broadcast %225 : vector<1x128xf32> to vector<8x128xf32>
    %247 = arith.mulf %245, %246 : vector<8x128xf32>
    %248 = vector.broadcast %227 : vector<1x128xf32> to vector<8x128xf32>
    %249 = arith.addf %247, %248 : vector<8x128xf32>
    %c2_131 = arith.constant 2 : index
    %c0_132 = arith.constant 0 : index
    %c0_133 = arith.constant 0 : index
    %250 = vector.load %arg6[%c2_131, %c0_132, %c0_133] : memref<3x32x8xf32, #tpu.memory_space<vmem>>, vector<1x32x8xf32>
    %251 = vector.shape_cast %250 : vector<1x32x8xf32> to vector<32x8xf32>
    %cst_134 = arith.constant dense<0.000000e+00> : vector<32x128xf32>
    %252 = tpu.matmul %251, %249, %cst_134 {dimension_numbers = #tpu.dot_dimension_numbers<[1], [0], [0], [1], [0, 0, 1, 1], [], []>} : vector<32x8xf32>, vector<8x128xf32>, vector<32x128xf32> -> vector<32x128xf32>
    %c2_135 = arith.constant 2 : index
    %c0_136 = arith.constant 0 : index
    %c0_137 = arith.constant 0 : index
    %253 = vector.load %arg7[%c2_135, %c0_136, %c0_137] : memref<3x32x128xf32, #tpu.memory_space<vmem>>, vector<1x32x128xf32>
    %254 = vector.shape_cast %253 : vector<1x32x128xf32> to vector<32x128xf32>
    %255 = arith.addf %252, %254 : vector<32x128xf32>
    %cst_138 = arith.constant 5.000000e-01 : f32
    %256 = vector.broadcast %cst_138 : f32 to vector<32x128xf32>
    %257 = arith.mulf %256, %255 : vector<32x128xf32>
    %cst_139 = arith.constant 4.471500e-02 : f32
    %258 = vector.broadcast %cst_139 : f32 to vector<32x128xf32>
    %259 = arith.mulf %258, %255 : vector<32x128xf32>
    %260 = arith.mulf %259, %255 : vector<32x128xf32>
    %261 = arith.mulf %260, %255 : vector<32x128xf32>
    %262 = arith.addf %255, %261 : vector<32x128xf32>
    %cst_140 = arith.constant 0.797884583 : f32
    %263 = vector.broadcast %cst_140 : f32 to vector<32x128xf32>
    %264 = arith.mulf %263, %262 : vector<32x128xf32>
    %265 = math.tanh %264 : vector<32x128xf32>
    %cst_141 = arith.constant 1.000000e+00 : f32
    %266 = vector.broadcast %cst_141 : f32 to vector<32x128xf32>
    %267 = arith.addf %266, %265 : vector<32x128xf32>
    %268 = arith.mulf %257, %267 : vector<32x128xf32>
    %c2_142 = arith.constant 2 : index
    %c0_143 = arith.constant 0 : index
    %c0_144 = arith.constant 0 : index
    %269 = vector.load %arg8[%c2_142, %c0_143, %c0_144] : memref<3x8x32xf32, #tpu.memory_space<vmem>>, vector<1x8x32xf32>
    %270 = vector.shape_cast %269 : vector<1x8x32xf32> to vector<8x32xf32>
    %cst_145 = arith.constant dense<0.000000e+00> : vector<8x128xf32>
    %271 = tpu.matmul %270, %268, %cst_145 {dimension_numbers = #tpu.dot_dimension_numbers<[1], [0], [0], [1], [0, 0, 1, 1], [], []>} : vector<8x32xf32>, vector<32x128xf32>, vector<8x128xf32> -> vector<8x128xf32>
    %c2_146 = arith.constant 2 : index
    %c0_147 = arith.constant 0 : index
    %c0_148 = arith.constant 0 : index
    %272 = vector.load %arg9[%c2_146, %c0_147, %c0_148] : memref<3x8x128xf32, #tpu.memory_space<vmem>>, vector<1x8x128xf32>
    %273 = vector.shape_cast %272 : vector<1x8x128xf32> to vector<8x128xf32>
    %274 = arith.addf %271, %273 : vector<8x128xf32>
    %275 = arith.addf %115, %274 : vector<8x128xf32>
    %c2_149 = arith.constant 2 : index
    %c0_150 = arith.constant 0 : index
    %c0_151 = arith.constant 0 : index
    %276 = vector.load %arg10[%c2_149, %c0_150, %c0_151] : memref<3x1x128xf32, #tpu.memory_space<vmem>>, vector<1x1x128xf32>
    %277 = vector.shape_cast %276 : vector<1x1x128xf32> to vector<1x128xf32>
    %c2_152 = arith.constant 2 : index
    %c0_153 = arith.constant 0 : index
    %c0_154 = arith.constant 0 : index
    %278 = vector.load %arg11[%c2_152, %c0_153, %c0_154] : memref<3x1x128xf32, #tpu.memory_space<vmem>>, vector<1x1x128xf32>
    %279 = vector.shape_cast %278 : vector<1x1x128xf32> to vector<1x128xf32>
    %cst_155 = arith.constant dense<0.000000e+00> : vector<8xf32>
    %280 = vector.multi_reduction <add>, %275, %cst_155 [1] : vector<8x128xf32> to vector<8xf32>
    %281 = vector.shape_cast %280 : vector<8xf32> to vector<8x1xf32>
    %282 = arith.mulf %275, %275 : vector<8x128xf32>
    %cst_156 = arith.constant dense<0.000000e+00> : vector<8xf32>
    %283 = vector.multi_reduction <add>, %282, %cst_156 [1] : vector<8x128xf32> to vector<8xf32>
    %284 = vector.shape_cast %283 : vector<8xf32> to vector<8x1xf32>
    %cst_157 = arith.constant 3.125000e-02 : f32
    %285 = vector.broadcast %cst_157 : f32 to vector<8x1xf32>
    %286 = arith.mulf %281, %285 : vector<8x1xf32>
    %cst_158 = arith.constant 3.125000e-02 : f32
    %287 = vector.broadcast %cst_158 : f32 to vector<8x1xf32>
    %288 = arith.mulf %284, %287 : vector<8x1xf32>
    %289 = arith.mulf %286, %286 : vector<8x1xf32>
    %290 = arith.subf %288, %289 : vector<8x1xf32>
    %291 = vector.broadcast %286 : vector<8x1xf32> to vector<8x128xf32>
    %292 = arith.subf %275, %291 : vector<8x128xf32>
    %cst_159 = arith.constant 9.99999974E-6 : f32
    %293 = vector.broadcast %cst_159 : f32 to vector<8x1xf32>
    %294 = arith.addf %290, %293 : vector<8x1xf32>
    %295 = math.rsqrt %294 : vector<8x1xf32>
    %296 = vector.broadcast %295 : vector<8x1xf32> to vector<8x128xf32>
    %297 = arith.mulf %292, %296 : vector<8x128xf32>
    %298 = vector.broadcast %277 : vector<1x128xf32> to vector<8x128xf32>
    %299 = arith.mulf %297, %298 : vector<8x128xf32>
    %300 = vector.broadcast %279 : vector<1x128xf32> to vector<8x128xf32>
    %301 = arith.addf %299, %300 : vector<8x128xf32>
    %302 = arith.truncf %301 : vector<8x128xf32> to vector<8x128xbf16>
    %c2_160 = arith.constant 2 : index
    %c0_161 = arith.constant 0 : index
    %c0_162 = arith.constant 0 : index
    %303 = vector.load %arg12[%c2_160, %c0_161, %c0_162] : memref<3x128x128xbf16, #tpu.memory_space<vmem>>, vector<1x128x128xbf16>
    %304 = vector.shape_cast %303 : vector<1x128x128xbf16> to vector<128x128xbf16>
    %cst_163 = arith.constant dense<0.000000e+00> : vector<8x128xf32>
    %305 = tpu.matmul %302, %304, %cst_163 {dimension_numbers = #tpu.dot_dimension_numbers<[1], [0], [0], [1], [0, 0, 1, 1], [], []>} : vector<8x128xbf16>, vector<128x128xbf16>, vector<8x128xf32> -> vector<8x128xf32>
    %c2_164 = arith.constant 2 : index
    %c0_165 = arith.constant 0 : index
    %c0_166 = arith.constant 0 : index
    %306 = vector.load %arg13[%c2_164, %c0_165, %c0_166] : memref<3x1x128xf32, #tpu.memory_space<vmem>>, vector<1x1x128xf32>
    %307 = vector.shape_cast %306 : vector<1x1x128xf32> to vector<1x128xf32>
    %308 = vector.broadcast %307 : vector<1x128xf32> to vector<8x128xf32>
    %309 = arith.addf %305, %308 : vector<8x128xf32>
    %cst_167 = arith.constant 5.000000e-01 : f32
    %310 = vector.broadcast %cst_167 : f32 to vector<8x128xf32>
    %311 = arith.mulf %310, %309 : vector<8x128xf32>
    %cst_168 = arith.constant 4.471500e-02 : f32
    %312 = vector.broadcast %cst_168 : f32 to vector<8x128xf32>
    %313 = arith.mulf %312, %309 : vector<8x128xf32>
    %314 = arith.mulf %313, %309 : vector<8x128xf32>
    %315 = arith.mulf %314, %309 : vector<8x128xf32>
    %316 = arith.addf %309, %315 : vector<8x128xf32>
    %cst_169 = arith.constant 0.797884583 : f32
    %317 = vector.broadcast %cst_169 : f32 to vector<8x128xf32>
    %318 = arith.mulf %317, %316 : vector<8x128xf32>
    %319 = math.tanh %318 : vector<8x128xf32>
    %cst_170 = arith.constant 1.000000e+00 : f32
    %320 = vector.broadcast %cst_170 : f32 to vector<8x128xf32>
    %321 = arith.addf %320, %319 : vector<8x128xf32>
    %322 = arith.mulf %311, %321 : vector<8x128xf32>
    %323 = arith.truncf %322 : vector<8x128xf32> to vector<8x128xbf16>
    %c2_171 = arith.constant 2 : index
    %c0_172 = arith.constant 0 : index
    %c0_173 = arith.constant 0 : index
    %324 = vector.load %arg14[%c2_171, %c0_172, %c0_173] : memref<3x128x128xbf16, #tpu.memory_space<vmem>>, vector<1x128x128xbf16>
    %325 = vector.shape_cast %324 : vector<1x128x128xbf16> to vector<128x128xbf16>
    %cst_174 = arith.constant dense<0.000000e+00> : vector<8x128xf32>
    %326 = tpu.matmul %323, %325, %cst_174 {dimension_numbers = #tpu.dot_dimension_numbers<[1], [0], [0], [1], [0, 0, 1, 1], [], []>} : vector<8x128xbf16>, vector<128x128xbf16>, vector<8x128xf32> -> vector<8x128xf32>
    %c2_175 = arith.constant 2 : index
    %c0_176 = arith.constant 0 : index
    %c0_177 = arith.constant 0 : index
    %327 = vector.load %arg15[%c2_175, %c0_176, %c0_177] : memref<3x1x128xf32, #tpu.memory_space<vmem>>, vector<1x1x128xf32>
    %328 = vector.shape_cast %327 : vector<1x1x128xf32> to vector<1x128xf32>
    %329 = vector.broadcast %328 : vector<1x128xf32> to vector<8x128xf32>
    %330 = arith.addf %326, %329 : vector<8x128xf32>
    %331 = arith.addf %275, %330 : vector<8x128xf32>
    %c0_178 = arith.constant 0 : index
    %c0_179 = arith.constant 0 : index
    %c0_180 = arith.constant 0 : index
    %332 = vector.load %arg16[%c0_178, %c0_179, %c0_180] : memref<2x1x128xf32, #tpu.memory_space<vmem>>, vector<1x1x128xf32>
    %333 = vector.shape_cast %332 : vector<1x1x128xf32> to vector<1x128xf32>
    %c0_181 = arith.constant 0 : index
    %c0_182 = arith.constant 0 : index
    %c0_183 = arith.constant 0 : index
    %334 = vector.load %arg17[%c0_181, %c0_182, %c0_183] : memref<2x1x128xf32, #tpu.memory_space<vmem>>, vector<1x1x128xf32>
    %335 = vector.shape_cast %334 : vector<1x1x128xf32> to vector<1x128xf32>
    %cst_184 = arith.constant dense<0.000000e+00> : vector<8xf32>
    %336 = vector.multi_reduction <add>, %223, %cst_184 [1] : vector<8x128xf32> to vector<8xf32>
    %337 = vector.shape_cast %336 : vector<8xf32> to vector<8x1xf32>
    %338 = arith.mulf %223, %223 : vector<8x128xf32>
    %cst_185 = arith.constant dense<0.000000e+00> : vector<8xf32>
    %339 = vector.multi_reduction <add>, %338, %cst_185 [1] : vector<8x128xf32> to vector<8xf32>
    %340 = vector.shape_cast %339 : vector<8xf32> to vector<8x1xf32>
    %cst_186 = arith.constant 3.125000e-02 : f32
    %341 = vector.broadcast %cst_186 : f32 to vector<8x1xf32>
    %342 = arith.mulf %337, %341 : vector<8x1xf32>
    %cst_187 = arith.constant 3.125000e-02 : f32
    %343 = vector.broadcast %cst_187 : f32 to vector<8x1xf32>
    %344 = arith.mulf %340, %343 : vector<8x1xf32>
    %345 = arith.mulf %342, %342 : vector<8x1xf32>
    %346 = arith.subf %344, %345 : vector<8x1xf32>
    %347 = vector.broadcast %342 : vector<8x1xf32> to vector<8x128xf32>
    %348 = arith.subf %223, %347 : vector<8x128xf32>
    %cst_188 = arith.constant 9.99999974E-6 : f32
    %349 = vector.broadcast %cst_188 : f32 to vector<8x1xf32>
    %350 = arith.addf %346, %349 : vector<8x1xf32>
    %351 = math.rsqrt %350 : vector<8x1xf32>
    %352 = vector.broadcast %351 : vector<8x1xf32> to vector<8x128xf32>
    %353 = arith.mulf %348, %352 : vector<8x128xf32>
    %354 = vector.broadcast %333 : vector<1x128xf32> to vector<8x128xf32>
    %355 = arith.mulf %353, %354 : vector<8x128xf32>
    %356 = vector.broadcast %335 : vector<1x128xf32> to vector<8x128xf32>
    %357 = arith.addf %355, %356 : vector<8x128xf32>
    %358 = arith.truncf %357 : vector<8x128xf32> to vector<8x128xbf16>
    %c0_189 = arith.constant 0 : index
    %c0_190 = arith.constant 0 : index
    %c0_191 = arith.constant 0 : index
    %359 = vector.load %arg18[%c0_189, %c0_190, %c0_191] : memref<2x128x128xbf16, #tpu.memory_space<vmem>>, vector<1x128x128xbf16>
    %360 = vector.shape_cast %359 : vector<1x128x128xbf16> to vector<128x128xbf16>
    %cst_192 = arith.constant dense<0.000000e+00> : vector<8x128xf32>
    %361 = tpu.matmul %358, %360, %cst_192 {dimension_numbers = #tpu.dot_dimension_numbers<[1], [0], [0], [1], [0, 0, 1, 1], [], []>} : vector<8x128xbf16>, vector<128x128xbf16>, vector<8x128xf32> -> vector<8x128xf32>
    %cst_193 = arith.constant dense<0.000000e+00> : vector<128xf32>
    %362 = vector.multi_reduction <add>, %361, %cst_193 [0] : vector<8x128xf32> to vector<128xf32>
    %363 = vector.shape_cast %362 : vector<128xf32> to vector<1x128xf32>
    %cst_194 = arith.constant 8.000000e+00 : f32
    %364 = vector.broadcast %cst_194 : f32 to vector<1x128xf32>
    %365 = arith.divf %363, %364 : vector<1x128xf32>
    %c0_195 = arith.constant 0 : index
    %c0_196 = arith.constant 0 : index
    %c0_197 = arith.constant 0 : index
    %366 = vector.load %arg19[%c0_195, %c0_196, %c0_197] : memref<2x1x128xf32, #tpu.memory_space<vmem>>, vector<1x1x128xf32>
    %367 = vector.shape_cast %366 : vector<1x1x128xf32> to vector<1x128xf32>
    %368 = arith.addf %365, %367 : vector<1x128xf32>
    %369 = arith.negf %368 : vector<1x128xf32>
    %370 = math.exp %369 : vector<1x128xf32>
    %cst_198 = arith.constant 1.000000e+00 : f32
    %371 = vector.broadcast %cst_198 : f32 to vector<1x128xf32>
    %372 = arith.addf %371, %370 : vector<1x128xf32>
    %373 = arith.divf %371, %372 : vector<1x128xf32>
    %c0_199 = arith.constant 0 : index
    %c0_200 = arith.constant 0 : index
    %c0_201 = arith.constant 0 : index
    %374 = vector.load %arg20[%c0_199, %c0_200, %c0_201] : memref<1x1x128xf32, #tpu.memory_space<vmem>>, vector<1x1x128xf32>
    %375 = vector.shape_cast %374 : vector<1x1x128xf32> to vector<1x128xf32>
    %376 = vector.shape_cast %373 : vector<1x128xf32> to vector<1x1x128xf32>
    tpu.vector_store %arg20[%c0_199, %c0_200, %c0_201], %376 {strides = array<i32>} : memref<1x1x128xf32, #tpu.memory_space<vmem>>, vector<1x1x128xf32>,
    %c1_202 = arith.constant 1 : index
    %c0_203 = arith.constant 0 : index
    %c0_204 = arith.constant 0 : index
    %377 = vector.load %arg16[%c1_202, %c0_203, %c0_204] : memref<2x1x128xf32, #tpu.memory_space<vmem>>, vector<1x1x128xf32>
    %378 = vector.shape_cast %377 : vector<1x1x128xf32> to vector<1x128xf32>
    %c1_205 = arith.constant 1 : index
    %c0_206 = arith.constant 0 : index
    %c0_207 = arith.constant 0 : index
    %379 = vector.load %arg17[%c1_205, %c0_206, %c0_207] : memref<2x1x128xf32, #tpu.memory_space<vmem>>, vector<1x1x128xf32>
    %380 = vector.shape_cast %379 : vector<1x1x128xf32> to vector<1x128xf32>
    %cst_208 = arith.constant dense<0.000000e+00> : vector<8xf32>
    %381 = vector.multi_reduction <add>, %331, %cst_208 [1] : vector<8x128xf32> to vector<8xf32>
    %382 = vector.shape_cast %381 : vector<8xf32> to vector<8x1xf32>
    %383 = arith.mulf %331, %331 : vector<8x128xf32>
    %cst_209 = arith.constant dense<0.000000e+00> : vector<8xf32>
    %384 = vector.multi_reduction <add>, %383, %cst_209 [1] : vector<8x128xf32> to vector<8xf32>
    %385 = vector.shape_cast %384 : vector<8xf32> to vector<8x1xf32>
    %cst_210 = arith.constant 3.125000e-02 : f32
    %386 = vector.broadcast %cst_210 : f32 to vector<8x1xf32>
    %387 = arith.mulf %382, %386 : vector<8x1xf32>
    %cst_211 = arith.constant 3.125000e-02 : f32
    %388 = vector.broadcast %cst_211 : f32 to vector<8x1xf32>
    %389 = arith.mulf %385, %388 : vector<8x1xf32>
    %390 = arith.mulf %387, %387 : vector<8x1xf32>
    %391 = arith.subf %389, %390 : vector<8x1xf32>
    %392 = vector.broadcast %387 : vector<8x1xf32> to vector<8x128xf32>
    %393 = arith.subf %331, %392 : vector<8x128xf32>
    %cst_212 = arith.constant 9.99999974E-6 : f32
    %394 = vector.broadcast %cst_212 : f32 to vector<8x1xf32>
    %395 = arith.addf %391, %394 : vector<8x1xf32>
    %396 = math.rsqrt %395 : vector<8x1xf32>
    %397 = vector.broadcast %396 : vector<8x1xf32> to vector<8x128xf32>
    %398 = arith.mulf %393, %397 : vector<8x128xf32>
    %399 = vector.broadcast %378 : vector<1x128xf32> to vector<8x128xf32>
    %400 = arith.mulf %398, %399 : vector<8x128xf32>
    %401 = vector.broadcast %380 : vector<1x128xf32> to vector<8x128xf32>
    %402 = arith.addf %400, %401 : vector<8x128xf32>
    %403 = arith.truncf %402 : vector<8x128xf32> to vector<8x128xbf16>
    %c1_213 = arith.constant 1 : index
    %c0_214 = arith.constant 0 : index
    %c0_215 = arith.constant 0 : index
    %404 = vector.load %arg18[%c1_213, %c0_214, %c0_215] : memref<2x128x128xbf16, #tpu.memory_space<vmem>>, vector<1x128x128xbf16>
    %405 = vector.shape_cast %404 : vector<1x128x128xbf16> to vector<128x128xbf16>
    %cst_216 = arith.constant dense<0.000000e+00> : vector<8x128xf32>
    %406 = tpu.matmul %403, %405, %cst_216 {dimension_numbers = #tpu.dot_dimension_numbers<[1], [0], [0], [1], [0, 0, 1, 1], [], []>} : vector<8x128xbf16>, vector<128x128xbf16>, vector<8x128xf32> -> vector<8x128xf32>
    %cst_217 = arith.constant dense<0.000000e+00> : vector<128xf32>
    %407 = vector.multi_reduction <add>, %406, %cst_217 [0] : vector<8x128xf32> to vector<128xf32>
    %408 = vector.shape_cast %407 : vector<128xf32> to vector<1x128xf32>
    %cst_218 = arith.constant 8.000000e+00 : f32
    %409 = vector.broadcast %cst_218 : f32 to vector<1x128xf32>
    %410 = arith.divf %408, %409 : vector<1x128xf32>
    %c1_219 = arith.constant 1 : index
    %c0_220 = arith.constant 0 : index
    %c0_221 = arith.constant 0 : index
    %411 = vector.load %arg19[%c1_219, %c0_220, %c0_221] : memref<2x1x128xf32, #tpu.memory_space<vmem>>, vector<1x1x128xf32>
    %412 = vector.shape_cast %411 : vector<1x1x128xf32> to vector<1x128xf32>
    %413 = arith.addf %410, %412 : vector<1x128xf32>
    %414 = arith.negf %413 : vector<1x128xf32>
    %415 = math.exp %414 : vector<1x128xf32>
    %cst_222 = arith.constant 1.000000e+00 : f32
    %416 = vector.broadcast %cst_222 : f32 to vector<1x128xf32>
    %417 = arith.addf %416, %415 : vector<1x128xf32>
    %418 = arith.divf %416, %417 : vector<1x128xf32>
    %c0_223 = arith.constant 0 : index
    %c0_224 = arith.constant 0 : index
    %c0_225 = arith.constant 0 : index
    %419 = vector.load %arg21[%c0_223, %c0_224, %c0_225] : memref<1x1x128xf32, #tpu.memory_space<vmem>>, vector<1x1x128xf32>
    %420 = vector.shape_cast %419 : vector<1x1x128xf32> to vector<1x128xf32>
    %421 = vector.shape_cast %418 : vector<1x128xf32> to vector<1x1x128xf32>
    tpu.vector_store %arg21[%c0_223, %c0_224, %c0_225], %421 {strides = array<i32>} : memref<1x1x128xf32, #tpu.memory_space<vmem>>, vector<1x1x128xf32>,
    return
  }
  func.func @transform_0(%arg0: i32) -> (i32, i32, i32) {
    %c0_i32 = arith.constant 0 : i32
    %c0_i32_0 = arith.constant 0 : i32
    %c0_i32_1 = arith.constant 0 : i32
    return %arg0, %c0_i32, %c0_i32_0 : i32, i32, i32
  }
  func.func @transform_1(%arg0: i32) -> (i32, i32) {
    %c0_i32 = arith.constant 0 : i32
    %c0_i32_0 = arith.constant 0 : i32
    %c0_i32_1 = arith.constant 0 : i32
    return %c0_i32, %c0_i32_0 : i32, i32
  }
  func.func @transform_2(%arg0: i32) -> (i32, i32) {
    %c0_i32 = arith.constant 0 : i32
    %c0_i32_0 = arith.constant 0 : i32
    %c0_i32_1 = arith.constant 0 : i32
    return %c0_i32, %c0_i32_0 : i32, i32
  }
  func.func @transform_3(%arg0: i32) -> (i32, i32, i32) {
    %c0_i32 = arith.constant 0 : i32
    %c0_i32_0 = arith.constant 0 : i32
    %c0_i32_1 = arith.constant 0 : i32
    %c0_i32_2 = arith.constant 0 : i32
    return %c0_i32, %c0_i32_0, %c0_i32_1 : i32, i32, i32
  }
  func.func @transform_4(%arg0: i32) -> (i32, i32, i32) {
    %c0_i32 = arith.constant 0 : i32
    %c0_i32_0 = arith.constant 0 : i32
    %c0_i32_1 = arith.constant 0 : i32
    %c0_i32_2 = arith.constant 0 : i32
    return %c0_i32, %c0_i32_0, %c0_i32_1 : i32, i32, i32
  }
  func.func @transform_5(%arg0: i32) -> (i32, i32, i32) {
    %c0_i32 = arith.constant 0 : i32
    %c0_i32_0 = arith.constant 0 : i32
    %c0_i32_1 = arith.constant 0 : i32
    %c0_i32_2 = arith.constant 0 : i32
    return %c0_i32, %c0_i32_0, %c0_i32_1 : i32, i32, i32
  }
  func.func @transform_6(%arg0: i32) -> (i32, i32, i32) {
    %c0_i32 = arith.constant 0 : i32
    %c0_i32_0 = arith.constant 0 : i32
    %c0_i32_1 = arith.constant 0 : i32
    %c0_i32_2 = arith.constant 0 : i32
    return %c0_i32, %c0_i32_0, %c0_i32_1 : i32, i32, i32
  }
  func.func @transform_7(%arg0: i32) -> (i32, i32, i32) {
    %c0_i32 = arith.constant 0 : i32
    %c0_i32_0 = arith.constant 0 : i32
    %c0_i32_1 = arith.constant 0 : i32
    %c0_i32_2 = arith.constant 0 : i32
    return %c0_i32, %c0_i32_0, %c0_i32_1 : i32, i32, i32
  }
  func.func @transform_8(%arg0: i32) -> (i32, i32, i32) {
    %c0_i32 = arith.constant 0 : i32
    %c0_i32_0 = arith.constant 0 : i32
    %c0_i32_1 = arith.constant 0 : i32
    %c0_i32_2 = arith.constant 0 : i32
    return %c0_i32, %c0_i32_0, %c0_i32_1 : i32, i32, i32
  }
  func.func @transform_9(%arg0: i32) -> (i32, i32, i32) {
    %c0_i32 = arith.constant 0 : i32
    %c0_i32_0 = arith.constant 0 : i32
    %c0_i32_1 = arith.constant 0 : i32
    %c0_i32_2 = arith.constant 0 : i32
    return %c0_i32, %c0_i32_0, %c0_i32_1 : i32, i32, i32
  }
  func.func @transform_10(%arg0: i32) -> (i32, i32, i32) {
    %c0_i32 = arith.constant 0 : i32
    %c0_i32_0 = arith.constant 0 : i32
    %c0_i32_1 = arith.constant 0 : i32
    %c0_i32_2 = arith.constant 0 : i32
    return %c0_i32, %c0_i32_0, %c0_i32_1 : i32, i32, i32
  }
  func.func @transform_11(%arg0: i32) -> (i32, i32, i32) {
    %c0_i32 = arith.constant 0 : i32
    %c0_i32_0 = arith.constant 0 : i32
    %c0_i32_1 = arith.constant 0 : i32
    %c0_i32_2 = arith.constant 0 : i32
    return %c0_i32, %c0_i32_0, %c0_i32_1 : i32, i32, i32
  }
  func.func @transform_12(%arg0: i32) -> (i32, i32, i32) {
    %c0_i32 = arith.constant 0 : i32
    %c0_i32_0 = arith.constant 0 : i32
    %c0_i32_1 = arith.constant 0 : i32
    %c0_i32_2 = arith.constant 0 : i32
    return %c0_i32, %c0_i32_0, %c0_i32_1 : i32, i32, i32
  }
  func.func @transform_13(%arg0: i32) -> (i32, i32, i32) {
    %c0_i32 = arith.constant 0 : i32
    %c0_i32_0 = arith.constant 0 : i32
    %c0_i32_1 = arith.constant 0 : i32
    %c0_i32_2 = arith.constant 0 : i32
    return %c0_i32, %c0_i32_0, %c0_i32_1 : i32, i32, i32
  }
  func.func @transform_14(%arg0: i32) -> (i32, i32, i32) {
    %c0_i32 = arith.constant 0 : i32
    %c0_i32_0 = arith.constant 0 : i32
    %c0_i32_1 = arith.constant 0 : i32
    %c0_i32_2 = arith.constant 0 : i32
    return %c0_i32, %c0_i32_0, %c0_i32_1 : i32, i32, i32
  }
  func.func @transform_15(%arg0: i32) -> (i32, i32, i32) {
    %c0_i32 = arith.constant 0 : i32
    %c0_i32_0 = arith.constant 0 : i32
    %c0_i32_1 = arith.constant 0 : i32
    %c0_i32_2 = arith.constant 0 : i32
    return %c0_i32, %c0_i32_0, %c0_i32_1 : i32, i32, i32
  }
  func.func @transform_16(%arg0: i32) -> (i32, i32, i32) {
    %c0_i32 = arith.constant 0 : i32
    %c0_i32_0 = arith.constant 0 : i32
    %c0_i32_1 = arith.constant 0 : i32
    %c0_i32_2 = arith.constant 0 : i32
    return %c0_i32, %c0_i32_0, %c0_i32_1 : i32, i32, i32
  }
  func.func @transform_17(%arg0: i32) -> (i32, i32, i32) {
    %c0_i32 = arith.constant 0 : i32
    %c0_i32_0 = arith.constant 0 : i32
    %c0_i32_1 = arith.constant 0 : i32
    %c0_i32_2 = arith.constant 0 : i32
    return %c0_i32, %c0_i32_0, %c0_i32_1 : i32, i32, i32
  }
  func.func @transform_18(%arg0: i32) -> (i32, i32, i32) {
    %c0_i32 = arith.constant 0 : i32
    %c0_i32_0 = arith.constant 0 : i32
    %c0_i32_1 = arith.constant 0 : i32
    %c0_i32_2 = arith.constant 0 : i32
    return %c0_i32, %c0_i32_0, %c0_i32_1 : i32, i32, i32
  }
  func.func @transform_19(%arg0: i32) -> (i32, i32, i32) {
    %c0_i32 = arith.constant 0 : i32
    %c0_i32_0 = arith.constant 0 : i32
    %c0_i32_1 = arith.constant 0 : i32
    return %arg0, %c0_i32, %c0_i32_0 : i32, i32, i32
  }
  func.func @transform_20(%arg0: i32) -> (i32, i32, i32) {
    %c0_i32 = arith.constant 0 : i32
    %c0_i32_0 = arith.constant 0 : i32
    %c0_i32_1 = arith.constant 0 : i32
    return %arg0, %c0_i32, %c0_i32_0 : i32, i32, i32
  }
}

</mosaic_0001>

<llo_original>
// kernel: tpu_custom_call.1
$region0: #{tpu_custom_call.1}
  #allocation0 [shape = 'u32[]', space=smem, size = 0x4, offset = 0x4, fixed_abs, tag = 'smem constant byte address 0x4 - core index']
  #allocation1 [shape = 'u32[144,128]{1,0:T(1,128)}', space=vmem, size = 0x12000, scoped, tag = 'internal scratch']
  %s0 = inlined_call_operand.hbm [shape: f32[2,8,32], index: 0, kind: input, shape index: {}]
  %s1 = inlined_call_operand.hbm [shape: bf16[32,128], index: 1, kind: input, shape index: {}]
  %s2 = inlined_call_operand.hbm [shape: f32[1,128], index: 2, kind: input, shape index: {}]
  %s3 = inlined_call_operand.vmem [shape: f32[3,1,128], index: 3, kind: input, shape index: {}]
  %s4 = inlined_call_operand.vmem [shape: f32[3,1,128], index: 4, kind: input, shape index: {}]
  %s5 = inlined_call_operand.vmem [shape: f32[3,32,8], index: 5, kind: input, shape index: {}]
  %s6 = inlined_call_operand.hbm [shape: f32[3,32,128], index: 6, kind: input, shape index: {}]
  %s7 = inlined_call_operand.vmem [shape: f32[3,8,32], index: 7, kind: input, shape index: {}]
  %s8 = inlined_call_operand.vmem [shape: f32[3,8,128], index: 8, kind: input, shape index: {}]
  %s9 = inlined_call_operand.hbm [shape: f32[3,1,128], index: 9, kind: input, shape index: {}]
  %s10 = inlined_call_operand.hbm [shape: f32[3,1,128], index: 10, kind: input, shape index: {}]
  %s11 = inlined_call_operand.hbm [shape: bf16[3,128,128], index: 11, kind: input, shape index: {}]
  %s12 = inlined_call_operand.hbm [shape: f32[3,1,128], index: 12, kind: input, shape index: {}]
  %s13 = inlined_call_operand.hbm [shape: bf16[3,128,128], index: 13, kind: input, shape index: {}]
  %s14 = inlined_call_operand.hbm [shape: f32[3,1,128], index: 14, kind: input, shape index: {}]
  %s15 = inlined_call_operand.vmem [shape: f32[2,1,128], index: 15, kind: input, shape index: {}]
  %s16 = inlined_call_operand.hbm [shape: f32[2,1,128], index: 16, kind: input, shape index: {}]
  %s17 = inlined_call_operand.vmem [shape: bf16[2,128,128], index: 17, kind: input, shape index: {}]
  %s18 = inlined_call_operand.vmem [shape: f32[2,1,128], index: 18, kind: input, shape index: {}]
  %s19 = inlined_call_operand.hbm [shape: f32[2,1,128], index: 19, kind: output, shape index: {0}]
  %s20 = inlined_call_operand.hbm [shape: f32[2,1,128], index: 20, kind: output, shape index: {1}]
  %21 = xla_tuple %s19, %s20
  %s22 = sld [smem:[#allocation0]]
  $region161: #{tpu_custom_call.1} parent=0
    _
  %s24 = ssub.s32 1, %s22
  %s25 = scalar_select 0, %s24, %s22
  $region1: #{tpu_custom_call.1} parent=0
    #allocation2 [shape = 'u8[8192]{0}', space=vmem, size = 0x2000, scoped, tag = 'input window, operand 0']
    #allocation3 [shape = 's32[2]{0}', space=sflag, size = 0x8, scoped, tag = 'scoped memory for tpu_custom_call.1']
    #allocation4 [shape = 's32[2]{0}', space=sflag, size = 0x8, scoped, tag = 'scoped memory for tpu_custom_call.1']
    #allocation5 [shape = 'u8[8192]{0}', space=vmem, size = 0x2000, scoped, tag = 'input window, operand 1, single buffered']
    #allocation6 [shape = 's32[1]{0}', space=sflag, size = 0x4, scoped, tag = 'scoped memory for tpu_custom_call.1']
    #allocation7 [shape = 'u8[512]{0}', space=vmem, size = 0x400, scoped, tag = 'input window, operand 2, single buffered']
    #allocation8 [shape = 'u8[49152]{0}', space=vmem, size = 0xc000, scoped, tag = 'input window, operand 6, single buffered']
    #allocation9 [shape = 's32[1]{0}', space=sflag, size = 0x4, scoped, tag = 'scoped memory for tpu_custom_call.1']
    #allocation10 [shape = 'u8[1536]{0}', space=vmem, size = 0x800, scoped, tag = 'input window, operand 9, single buffered']
    #allocation11 [shape = 'u8[1536]{0}', space=vmem, size = 0x800, scoped, tag = 'input window, operand 10, single buffered']
    #allocation12 [shape = 's32[1]{0}', space=sflag, size = 0x4, scoped, tag = 'scoped memory for tpu_custom_call.1']
    #allocation13 [shape = 'u8[98304]{0}', space=vmem, size = 0x18000, scoped, tag = 'input window, operand 11, single buffered']
    #allocation14 [shape = 'u8[1536]{0}', space=vmem, size = 0x800, scoped, tag = 'input window, operand 12, single buffered']
    #allocation15 [shape = 's32[1]{0}', space=sflag, size = 0x4, scoped, tag = 'scoped memory for tpu_custom_call.1']
    #allocation16 [shape = 'u8[98304]{0}', space=vmem, size = 0x18000, scoped, tag = 'input window, operand 13, single buffered']
    #allocation17 [shape = 'u8[1536]{0}', space=vmem, size = 0x800, scoped, tag = 'input window, operand 14, single buffered']
    #allocation18 [shape = 's32[1]{0}', space=sflag, size = 0x4, scoped, tag = 'scoped memory for tpu_custom_call.1']
    #allocation19 [shape = 'u8[1024]{0}', space=vmem, size = 0x400, scoped, tag = 'input window, operand 16, single buffered']
    #allocation20 [shape = 'u8[1024]{0}', space=vmem, size = 0x400, scoped, tag = 'output window, operand 0']
    #allocation21 [shape = 'u8[1024]{0}', space=vmem, size = 0x400, scoped, tag = 'output window, operand 1']
    #allocation22 [shape = 's32[2]{0}', space=sflag, size = 0x8, scoped, tag = 'scoped memory for tpu_custom_call.1']
    %26 = vsyncpa [#allocation3], 0
    %s27 = scalar_lea.sflag [#allocation3], 1
    %28 = vsyncpa %s27, 0
    %29 = vsyncpa [#allocation6], 0
    %30 = vsyncpa [#allocation9], 0
    %31 = vsyncpa [#allocation12], 0
    %32 = vsyncpa [#allocation15], 0
    %33 = vsyncpa [#allocation18], 0
    %34 = vsyncpa [#allocation4], 0
    %s35 = scalar_lea.sflag [#allocation4], 1
    %36 = vsyncpa %s35, 0
    %37 = vsyncpa [#allocation22], 0
    %s38 = scalar_lea.sflag [#allocation22], 1
    %39 = vsyncpa %s38, 0
    loop: start=0, step=1, limit=4
    $region2: #{tpu_custom_call.1} parent=1 // loop_pre_header
      _
    $region3: #{tpu_custom_call.1} parent=1 // loop_header
      %s41 = sphi 0, %s45
      %p42 = scmp.ge.s32.totalorder %s41, 4
      %s51 = sphi 0, %s53
      %s54 = sphi 0, %s51
      %s55 = sphi 0, %s54
      %s71 = sphi 0, %s55
      %s75 = sphi 0, %s75
      %s77 = sphi 0, %s75
      %s78 = sphi 0, %s77
      %s92 = sphi 0, %s78
      %s96 = sphi 0, %s96
      %s98 = sphi 0, %s96
      %s99 = sphi 0, %s98
      %s113 = sphi 0, %s99
      %s117 = sphi 0, %s117
      %s119 = sphi 0, %s117
      %s120 = sphi 0, %s119
      %s134 = sphi 0, %s120
      %s138 = sphi 0, %s138
      %s140 = sphi 0, %s138
      %s141 = sphi 0, %s140
      %s155 = sphi 0, %s141
      %s159 = sphi 0, %s159
      %s161 = sphi 0, %s159
      %s162 = sphi 0, %s161
      %s176 = sphi 0, %s162
      %s180 = sphi 0, %s180
      %s182 = sphi 0, %s180
      %s183 = sphi 0, %s182
      %s197 = sphi 0, %s183
      %s201 = sphi 0, %s201
      %s203 = sphi 0, %s201
      %s204 = sphi 0, %s203
      %s218 = sphi 0, %s204
      %s222 = sphi 0, %s222
      %s224 = sphi 0, %s222
      %s225 = sphi 0, %s224
      %s239 = sphi 0, %s225
      %s243 = sphi 0, %s243
      %s245 = sphi 0, %s243
      %s246 = sphi 0, %s245
      %s260 = sphi 0, %s246
      %s264 = sphi 0, %s264
      %s266 = sphi 0, %s264
      %s267 = sphi 0, %s266
      %s281 = sphi 0, %s267
      %s285 = sphi 0, %s285
      %s287 = sphi 0, %s285
      %s288 = sphi 0, %s287
      %s302 = sphi 0, %s288
      %s306 = sphi 0, %s306
      %s308 = sphi 0, %s306
      %s309 = sphi 0, %s308
      %s323 = sphi 0, %s309
      %s327 = sphi 0, %s327
      %s329 = sphi 0, %s327
      %s330 = sphi 0, %s329
      %s344 = sphi 0, %s330
      %s348 = sphi 0, %s348
      %s350 = sphi 0, %s348
      %s351 = sphi 0, %s350
      %s365 = sphi 0, %s351
      %s369 = sphi 0, %s369
      %s371 = sphi 0, %s369
      %s372 = sphi 0, %s371
      %s386 = sphi 0, %s372
      %s390 = sphi 0, %s390
      %s392 = sphi 0, %s390
      %s393 = sphi 0, %s392
      %s407 = sphi 0, %s393
      %s411 = sphi 0, %s411
      %s413 = sphi 0, %s411
      %s414 = sphi 0, %s413
      %s428 = sphi 0, %s414
      %s432 = sphi 0, %s432
      %s434 = sphi 0, %s432
      %s435 = sphi 0, %s434
      %s449 = sphi 0, %s435
      %s455 = sphi 0, %s457
      %s458 = sphi 0, %s455
      %s459 = sphi 0, %s458
      %s475 = sphi 0, %s459
      %s481 = sphi 0, %s483
      %s484 = sphi 0, %s481
      %s485 = sphi 0, %s484
      %s501 = sphi 0, %s485
    $region4: #{tpu_custom_call.1} parent=1 // loop_header_branch
      %44 = sbr.rel (%p42) target = $region8
    $region5: #{tpu_custom_call.1} parent=1 // loop_body
      %s46 = ssub.s32 %s41, 1
      %s47 = ssub.s32 %s41, 2
      %s48 = sadd.s32 %s41, 1
      %s49 = ssub.s32 %s41, %s48
      %p50 = scmp.eq.s32.totalorder %s49, 0
      %s52 = sadd.s32 %s51, 1
      %s53 = scalar_select %p50, %s51, %s52
      %p56 = pneg %p50
      %p57 = scmp.eq.s32.totalorder %s41, 1
      %p58 = por %p56, %p57
      %p59 = scmp.ne.s32.totalorder %s51, %s54
      %p60 = scmp.eq.s32.totalorder %s41, 0
      %p61 = por %p59, %p60
      %p62 = scmp.ne.s32.totalorder %s51, %s54
      %p63 = scmp.eq.s32.totalorder %s46, 1
      %p64 = por %p62, %p63
      %p65 = scmp.ne.s32.totalorder %s54, %s55
      %p66 = scmp.eq.s32.totalorder %s46, 0
      %p67 = por %p65, %p66
      %p68 = scmp.ne.s32.totalorder %s54, %s55
      %p69 = scmp.eq.s32.totalorder %s47, 1
      %p70 = por %p68, %p69
      %p72 = scmp.ne.s32.totalorder %s55, %s71
      %p73 = scmp.eq.s32.totalorder %s47, 0
      %p74 = por %p72, %p73
      %s76 = sadd.s32 %s75, 1
      %p79 = scmp.eq.s32.totalorder %s41, 1
      %p80 = scmp.ne.s32.totalorder %s75, %s77
      %p81 = scmp.eq.s32.totalorder %s41, 0
      %p82 = por %p80, %p81
      %p83 = scmp.ne.s32.totalorder %s75, %s77
      %p84 = scmp.eq.s32.totalorder %s46, 1
      %p85 = por %p83, %p84
      %p86 = scmp.ne.s32.totalorder %s77, %s78
      %p87 = scmp.eq.s32.totalorder %s46, 0
      %p88 = por %p86, %p87
      %p89 = scmp.ne.s32.totalorder %s77, %s78
      %p90 = scmp.eq.s32.totalorder %s47, 1
      %p91 = por %p89, %p90
      %p93 = scmp.ne.s32.totalorder %s78, %s92
      %p94 = scmp.eq.s32.totalorder %s47, 0
      %p95 = por %p93, %p94
      %s97 = sadd.s32 %s96, 1
      %p100 = scmp.eq.s32.totalorder %s41, 1
      %p101 = scmp.ne.s32.totalorder %s96, %s98
      %p102 = scmp.eq.s32.totalorder %s41, 0
      %p103 = por %p101, %p102
      %p104 = scmp.ne.s32.totalorder %s96, %s98
      %p105 = scmp.eq.s32.totalorder %s46, 1
      %p106 = por %p104, %p105
      %p107 = scmp.ne.s32.totalorder %s98, %s99
      %p108 = scmp.eq.s32.totalorder %s46, 0
      %p109 = por %p107, %p108
      %p110 = scmp.ne.s32.totalorder %s98, %s99
      %p111 = scmp.eq.s32.totalorder %s47, 1
      %p112 = por %p110, %p111
      %p114 = scmp.ne.s32.totalorder %s99, %s113
      %p115 = scmp.eq.s32.totalorder %s47, 0
      %p116 = por %p114, %p115
      %s118 = sadd.s32 %s117, 1
      %p121 = scmp.eq.s32.totalorder %s41, 1
      %p122 = scmp.ne.s32.totalorder %s117, %s119
      %p123 = scmp.eq.s32.totalorder %s41, 0
      %p124 = por %p122, %p123
      %p125 = scmp.ne.s32.totalorder %s117, %s119
      %p126 = scmp.eq.s32.totalorder %s46, 1
      %p127 = por %p125, %p126
      %p128 = scmp.ne.s32.totalorder %s119, %s120
      %p129 = scmp.eq.s32.totalorder %s46, 0
      %p130 = por %p128, %p129
      %p131 = scmp.ne.s32.totalorder %s119, %s120
      %p132 = scmp.eq.s32.totalorder %s47, 1
      %p133 = por %p131, %p132
      %p135 = scmp.ne.s32.totalorder %s120, %s134
      %p136 = scmp.eq.s32.totalorder %s47, 0
      %p137 = por %p135, %p136
      %s139 = sadd.s32 %s138, 1
      %p142 = scmp.eq.s32.totalorder %s41, 1
      %p143 = scmp.ne.s32.totalorder %s138, %s140
      %p144 = scmp.eq.s32.totalorder %s41, 0
      %p145 = por %p143, %p144
      %p146 = scmp.ne.s32.totalorder %s138, %s140
      %p147 = scmp.eq.s32.totalorder %s46, 1
      %p148 = por %p146, %p147
      %p149 = scmp.ne.s32.totalorder %s140, %s141
      %p150 = scmp.eq.s32.totalorder %s46, 0
      %p151 = por %p149, %p150
      %p152 = scmp.ne.s32.totalorder %s140, %s141
      %p153 = scmp.eq.s32.totalorder %s47, 1
      %p154 = por %p152, %p153
      %p156 = scmp.ne.s32.totalorder %s141, %s155
      %p157 = scmp.eq.s32.totalorder %s47, 0
      %p158 = por %p156, %p157
      %s160 = sadd.s32 %s159, 1
      %p163 = scmp.eq.s32.totalorder %s41, 1
      %p164 = scmp.ne.s32.totalorder %s159, %s161
      %p165 = scmp.eq.s32.totalorder %s41, 0
      %p166 = por %p164, %p165
      %p167 = scmp.ne.s32.totalorder %s159, %s161
      %p168 = scmp.eq.s32.totalorder %s46, 1
      %p169 = por %p167, %p168
      %p170 = scmp.ne.s32.totalorder %s161, %s162
      %p171 = scmp.eq.s32.totalorder %s46, 0
      %p172 = por %p170, %p171
      %p173 = scmp.ne.s32.totalorder %s161, %s162
      %p174 = scmp.eq.s32.totalorder %s47, 1
      %p175 = por %p173, %p174
      %p177 = scmp.ne.s32.totalorder %s162, %s176
      %p178 = scmp.eq.s32.totalorder %s47, 0
      %p179 = por %p177, %p178
      %s181 = sadd.s32 %s180, 1
      %p184 = scmp.eq.s32.totalorder %s41, 1
      %p185 = scmp.ne.s32.totalorder %s180, %s182
      %p186 = scmp.eq.s32.totalorder %s41, 0
      %p187 = por %p185, %p186
      %p188 = scmp.ne.s32.totalorder %s180, %s182
      %p189 = scmp.eq.s32.totalorder %s46, 1
      %p190 = por %p188, %p189
      %p191 = scmp.ne.s32.totalorder %s182, %s183
      %p192 = scmp.eq.s32.totalorder %s46, 0
      %p193 = por %p191, %p192
      %p194 = scmp.ne.s32.totalorder %s182, %s183
      %p195 = scmp.eq.s32.totalorder %s47, 1
      %p196 = por %p194, %p195
      %p198 = scmp.ne.s32.totalorder %s183, %s197
      %p199 = scmp.eq.s32.totalorder %s47, 0
      %p200 = por %p198, %p199
      %s202 = sadd.s32 %s201, 1
      %p205 = scmp.eq.s32.totalorder %s41, 1
      %p206 = scmp.ne.s32.totalorder %s201, %s203
      %p207 = scmp.eq.s32.totalorder %s41, 0
      %p208 = por %p206, %p207
      %p209 = scmp.ne.s32.totalorder %s201, %s203
      %p210 = scmp.eq.s32.totalorder %s46, 1
      %p211 = por %p209, %p210
      %p212 = scmp.ne.s32.totalorder %s203, %s204
      %p213 = scmp.eq.s32.totalorder %s46, 0
      %p214 = por %p212, %p213
      %p215 = scmp.ne.s32.totalorder %s203, %s204
      %p216 = scmp.eq.s32.totalorder %s47, 1
      %p217 = por %p215, %p216
      %p219 = scmp.ne.s32.totalorder %s204, %s218
      %p220 = scmp.eq.s32.totalorder %s47, 0
      %p221 = por %p219, %p220
      %s223 = sadd.s32 %s222, 1
      %p226 = scmp.eq.s32.totalorder %s41, 1
      %p227 = scmp.ne.s32.totalorder %s222, %s224
      %p228 = scmp.eq.s32.totalorder %s41, 0
      %p229 = por %p227, %p228
      %p230 = scmp.ne.s32.totalorder %s222, %s224
      %p231 = scmp.eq.s32.totalorder %s46, 1
      %p232 = por %p230, %p231
      %p233 = scmp.ne.s32.totalorder %s224, %s225
      %p234 = scmp.eq.s32.totalorder %s46, 0
      %p235 = por %p233, %p234
      %p236 = scmp.ne.s32.totalorder %s224, %s225
      %p237 = scmp.eq.s32.totalorder %s47, 1
      %p238 = por %p236, %p237
      %p240 = scmp.ne.s32.totalorder %s225, %s239
      %p241 = scmp.eq.s32.totalorder %s47, 0
      %p242 = por %p240, %p241
      %s244 = sadd.s32 %s243, 1
      %p247 = scmp.eq.s32.totalorder %s41, 1
      %p248 = scmp.ne.s32.totalorder %s243, %s245
      %p249 = scmp.eq.s32.totalorder %s41, 0
      %p250 = por %p248, %p249
      %p251 = scmp.ne.s32.totalorder %s243, %s245
      %p252 = scmp.eq.s32.totalorder %s46, 1
      %p253 = por %p251, %p252
      %p254 = scmp.ne.s32.totalorder %s245, %s246
      %p255 = scmp.eq.s32.totalorder %s46, 0
      %p256 = por %p254, %p255
      %p257 = scmp.ne.s32.totalorder %s245, %s246
      %p258 = scmp.eq.s32.totalorder %s47, 1
      %p259 = por %p257, %p258
      %p261 = scmp.ne.s32.totalorder %s246, %s260
      %p262 = scmp.eq.s32.totalorder %s47, 0
      %p263 = por %p261, %p262
      %s265 = sadd.s32 %s264, 1
      %p268 = scmp.eq.s32.totalorder %s41, 1
      %p269 = scmp.ne.s32.totalorder %s264, %s266
      %p270 = scmp.eq.s32.totalorder %s41, 0
      %p271 = por %p269, %p270
      %p272 = scmp.ne.s32.totalorder %s264, %s266
      %p273 = scmp.eq.s32.totalorder %s46, 1
      %p274 = por %p272, %p273
      %p275 = scmp.ne.s32.totalorder %s266, %s267
      %p276 = scmp.eq.s32.totalorder %s46, 0
      %p277 = por %p275, %p276
      %p278 = scmp.ne.s32.totalorder %s266, %s267
      %p279 = scmp.eq.s32.totalorder %s47, 1
      %p280 = por %p278, %p279
      %p282 = scmp.ne.s32.totalorder %s267, %s281
      %p283 = scmp.eq.s32.totalorder %s47, 0
      %p284 = por %p282, %p283
      %s286 = sadd.s32 %s285, 1
      %p289 = scmp.eq.s32.totalorder %s41, 1
      %p290 = scmp.ne.s32.totalorder %s285, %s287
      %p291 = scmp.eq.s32.totalorder %s41, 0
      %p292 = por %p290, %p291
      %p293 = scmp.ne.s32.totalorder %s285, %s287
      %p294 = scmp.eq.s32.totalorder %s46, 1
      %p295 = por %p293, %p294
      %p296 = scmp.ne.s32.totalorder %s287, %s288
      %p297 = scmp.eq.s32.totalorder %s46, 0
      %p298 = por %p296, %p297
      %p299 = scmp.ne.s32.totalorder %s287, %s288
      %p300 = scmp.eq.s32.totalorder %s47, 1
      %p301 = por %p299, %p300
      %p303 = scmp.ne.s32.totalorder %s288, %s302
      %p304 = scmp.eq.s32.totalorder %s47, 0
      %p305 = por %p303, %p304
      %s307 = sadd.s32 %s306, 1
      %p310 = scmp.eq.s32.totalorder %s41, 1
      %p311 = scmp.ne.s32.totalorder %s306, %s308
      %p312 = scmp.eq.s32.totalorder %s41, 0
      %p313 = por %p311, %p312
      %p314 = scmp.ne.s32.totalorder %s306, %s308
      %p315 = scmp.eq.s32.totalorder %s46, 1
      %p316 = por %p314, %p315
      %p317 = scmp.ne.s32.totalorder %s308, %s309
      %p318 = scmp.eq.s32.totalorder %s46, 0
      %p319 = por %p317, %p318
      %p320 = scmp.ne.s32.totalorder %s308, %s309
      %p321 = scmp.eq.s32.totalorder %s47, 1
      %p322 = por %p320, %p321
      %p324 = scmp.ne.s32.totalorder %s309, %s323
      %p325 = scmp.eq.s32.totalorder %s47, 0
      %p326 = por %p324, %p325
      %s328 = sadd.s32 %s327, 1
      %p331 = scmp.eq.s32.totalorder %s41, 1
      %p332 = scmp.ne.s32.totalorder %s327, %s329
      %p333 = scmp.eq.s32.totalorder %s41, 0
      %p334 = por %p332, %p333
      %p335 = scmp.ne.s32.totalorder %s327, %s329
      %p336 = scmp.eq.s32.totalorder %s46, 1
      %p337 = por %p335, %p336
      %p338 = scmp.ne.s32.totalorder %s329, %s330
      %p339 = scmp.eq.s32.totalorder %s46, 0
      %p340 = por %p338, %p339
      %p341 = scmp.ne.s32.totalorder %s329, %s330
      %p342 = scmp.eq.s32.totalorder %s47, 1
      %p343 = por %p341, %p342
      %p345 = scmp.ne.s32.totalorder %s330, %s344
      %p346 = scmp.eq.s32.totalorder %s47, 0
      %p347 = por %p345, %p346
      %s349 = sadd.s32 %s348, 1
      %p352 = scmp.eq.s32.totalorder %s41, 1
      %p353 = scmp.ne.s32.totalorder %s348, %s350
      %p354 = scmp.eq.s32.totalorder %s41, 0
      %p355 = por %p353, %p354
      %p356 = scmp.ne.s32.totalorder %s348, %s350
      %p357 = scmp.eq.s32.totalorder %s46, 1
      %p358 = por %p356, %p357
      %p359 = scmp.ne.s32.totalorder %s350, %s351
      %p360 = scmp.eq.s32.totalorder %s46, 0
      %p361 = por %p359, %p360
      %p362 = scmp.ne.s32.totalorder %s350, %s351
      %p363 = scmp.eq.s32.totalorder %s47, 1
      %p364 = por %p362, %p363
      %p366 = scmp.ne.s32.totalorder %s351, %s365
      %p367 = scmp.eq.s32.totalorder %s47, 0
      %p368 = por %p366, %p367
      %s370 = sadd.s32 %s369, 1
      %p373 = scmp.eq.s32.totalorder %s41, 1
      %p374 = scmp.ne.s32.totalorder %s369, %s371
      %p375 = scmp.eq.s32.totalorder %s41, 0
      %p376 = por %p374, %p375
      %p377 = scmp.ne.s32.totalorder %s369, %s371
      %p378 = scmp.eq.s32.totalorder %s46, 1
      %p379 = por %p377, %p378
      %p380 = scmp.ne.s32.totalorder %s371, %s372
      %p381 = scmp.eq.s32.totalorder %s46, 0
      %p382 = por %p380, %p381
      %p383 = scmp.ne.s32.totalorder %s371, %s372
      %p384 = scmp.eq.s32.totalorder %s47, 1
      %p385 = por %p383, %p384
      %p387 = scmp.ne.s32.totalorder %s372, %s386
      %p388 = scmp.eq.s32.totalorder %s47, 0
      %p389 = por %p387, %p388
      %s391 = sadd.s32 %s390, 1
      %p394 = scmp.eq.s32.totalorder %s41, 1
      %p395 = scmp.ne.s32.totalorder %s390, %s392
      %p396 = scmp.eq.s32.totalorder %s41, 0
      %p397 = por %p395, %p396
      %p398 = scmp.ne.s32.totalorder %s390, %s392
      %p399 = scmp.eq.s32.totalorder %s46, 1
      %p400 = por %p398, %p399
      %p401 = scmp.ne.s32.totalorder %s392, %s393
      %p402 = scmp.eq.s32.totalorder %s46, 0
      %p403 = por %p401, %p402
      %p404 = scmp.ne.s32.totalorder %s392, %s393
      %p405 = scmp.eq.s32.totalorder %s47, 1
      %p406 = por %p404, %p405
      %p408 = scmp.ne.s32.totalorder %s393, %s407
      %p409 = scmp.eq.s32.totalorder %s47, 0
      %p410 = por %p408, %p409
      %s412 = sadd.s32 %s411, 1
      %p415 = scmp.eq.s32.totalorder %s41, 1
      %p416 = scmp.ne.s32.totalorder %s411, %s413
      %p417 = scmp.eq.s32.totalorder %s41, 0
      %p418 = por %p416, %p417
      %p419 = scmp.ne.s32.totalorder %s411, %s413
      %p420 = scmp.eq.s32.totalorder %s46, 1
      %p421 = por %p419, %p420
      %p422 = scmp.ne.s32.totalorder %s413, %s414
      %p423 = scmp.eq.s32.totalorder %s46, 0
      %p424 = por %p422, %p423
      %p425 = scmp.ne.s32.totalorder %s413, %s414
      %p426 = scmp.eq.s32.totalorder %s47, 1
      %p427 = por %p425, %p426
      %p429 = scmp.ne.s32.totalorder %s414, %s428
      %p430 = scmp.eq.s32.totalorder %s47, 0
      %p431 = por %p429, %p430
      %s433 = sadd.s32 %s432, 1
      %p436 = scmp.eq.s32.totalorder %s41, 1
      %p437 = scmp.ne.s32.totalorder %s432, %s434
      %p438 = scmp.eq.s32.totalorder %s41, 0
      %p439 = por %p437, %p438
      %p440 = scmp.ne.s32.totalorder %s432, %s434
      %p441 = scmp.eq.s32.totalorder %s46, 1
      %p442 = por %p440, %p441
      %p443 = scmp.ne.s32.totalorder %s434, %s435
      %p444 = scmp.eq.s32.totalorder %s46, 0
      %p445 = por %p443, %p444
      %p446 = scmp.ne.s32.totalorder %s434, %s435
      %p447 = scmp.eq.s32.totalorder %s47, 1
      %p448 = por %p446, %p447
      %p450 = scmp.ne.s32.totalorder %s435, %s449
      %p451 = scmp.eq.s32.totalorder %s47, 0
      %p452 = por %p450, %p451
      %s453 = ssub.s32 %s41, %s48
      %p454 = scmp.eq.s32.totalorder %s453, 0
      %s456 = sadd.s32 %s455, 1
      %s457 = scalar_select %p454, %s455, %s456
      %p460 = pneg %p454
      %p461 = scmp.eq.s32.totalorder %s41, 1
      %p462 = por %p460, %p461
      %p463 = scmp.ne.s32.totalorder %s455, %s458
      %p464 = scmp.eq.s32.totalorder %s41, 0
      %p465 = por %p463, %p464
      %p466 = scmp.ne.s32.totalorder %s455, %s458
      %p467 = scmp.eq.s32.totalorder %s46, 1
      %p468 = por %p466, %p467
      %p469 = scmp.ne.s32.totalorder %s458, %s459
      %p470 = scmp.eq.s32.totalorder %s46, 0
      %p471 = por %p469, %p470
      %p472 = scmp.ne.s32.totalorder %s458, %s459
      %p473 = scmp.eq.s32.totalorder %s47, 1
      %p474 = por %p472, %p473
      %p476 = scmp.ne.s32.totalorder %s459, %s475
      %p477 = scmp.eq.s32.totalorder %s47, 0
      %p478 = por %p476, %p477
      %s479 = ssub.s32 %s41, %s48
      %p480 = scmp.eq.s32.totalorder %s479, 0
      %s482 = sadd.s32 %s481, 1
      %s483 = scalar_select %p480, %s481, %s482
      %p486 = pneg %p480
      %p487 = scmp.eq.s32.totalorder %s41, 1
      %p488 = por %p486, %p487
      %p489 = scmp.ne.s32.totalorder %s481, %s484
      %p490 = scmp.eq.s32.totalorder %s41, 0
      %p491 = por %p489, %p490
      %p492 = scmp.ne.s32.totalorder %s481, %s484
      %p493 = scmp.eq.s32.totalorder %s46, 1
      %p494 = por %p492, %p493
      %p495 = scmp.ne.s32.totalorder %s484, %s485
      %p496 = scmp.eq.s32.totalorder %s46, 0
      %p497 = por %p495, %p496
      %p498 = scmp.ne.s32.totalorder %s484, %s485
      %p499 = scmp.eq.s32.totalorder %s47, 1
      %p500 = por %p498, %p499
      %p502 = scmp.ne.s32.totalorder %s485, %s501
      %p503 = scmp.eq.s32.totalorder %s47, 0
      %p504 = por %p502, %p503
      %p505 = scmp.le.s32.totalorder 1, %s41
      %p506 = scmp.lt.s32.totalorder %s41, 3
      %p507 = pnand %p505, %p506
      %p508 = pneg %p507
      // Predicated region
      $region9: #{tpu_custom_call.1} parent=5 // pred_check
        _
      $region10: #{tpu_custom_call.1} parent=5 // pred_check_branch
        %510 = sbr.rel (%p507) target = $region12
      $region11: #{tpu_custom_call.1} parent=5 // pred_region
        %s511 = ssub.s32 %s41, 1
        // Predicated region
        $region13: #{tpu_custom_call.1} parent=11 // pred_check
          %p512 = pneg %p88
        $region14: #{tpu_custom_call.1} parent=11 // pred_check_branch
          %514 = sbr.rel (%p512) target = $region16
        $region15: #{tpu_custom_call.1} parent=11 // pred_region
          %s516 = ssub.s32 256, 256
          %517 = vsyncadd [#allocation6], %s516
          %s518 = sshll.u32 [#allocation5], 4
          %s519 = int_to_ptr.vmem [resolvable:$true] %s518
          %524 = dma.hbm_to_vmem [thread:$0]  %s1, 256, %s519, [#allocation6], 64, 64, 4
        $region16: #{tpu_custom_call.1} parent=11 // pred_fallthru
          _
        // Predicated region
        $region17: #{tpu_custom_call.1} parent=11 // pred_check
          %p525 = pneg %p109
        $region18: #{tpu_custom_call.1} parent=11 // pred_check_branch
          %527 = sbr.rel (%p525) target = $region20
        $region19: #{tpu_custom_call.1} parent=11 // pred_region
          %s529 = ssub.s32 16, 16
          %530 = vsyncadd [#allocation6], %s529
          %s532 = sshll.u32 [#allocation7], 4
          %s533 = int_to_ptr.vmem [resolvable:$true] %s532
          %535 = dma.hbm_to_vmem [thread:$0]  %s2, 16, %s533, [#allocation6]
        $region20: #{tpu_custom_call.1} parent=11 // pred_fallthru
          _
        // Predicated region
        $region21: #{tpu_custom_call.1} parent=11 // pred_check
          %p536 = pneg %p130
        $region22: #{tpu_custom_call.1} parent=11 // pred_check_branch
          %538 = sbr.rel (%p536) target = $region24
        $region23: #{tpu_custom_call.1} parent=11 // pred_region
          _
        $region24: #{tpu_custom_call.1} parent=11 // pred_fallthru
          _
        // Predicated region
        $region25: #{tpu_custom_call.1} parent=11 // pred_check
          %p539 = pneg %p151
        $region26: #{tpu_custom_call.1} parent=11 // pred_check_branch
          %541 = sbr.rel (%p539) target = $region28
        $region27: #{tpu_custom_call.1} parent=11 // pred_region
          _
        $region28: #{tpu_custom_call.1} parent=11 // pred_fallthru
          _
        // Predicated region
        $region29: #{tpu_custom_call.1} parent=11 // pred_check
          %p542 = pneg %p172
        $region30: #{tpu_custom_call.1} parent=11 // pred_check_branch
          %544 = sbr.rel (%p542) target = $region32
        $region31: #{tpu_custom_call.1} parent=11 // pred_region
          _
        $region32: #{tpu_custom_call.1} parent=11 // pred_fallthru
          _
        // Predicated region
        $region33: #{tpu_custom_call.1} parent=11 // pred_check
          %p545 = pneg %p193
        $region34: #{tpu_custom_call.1} parent=11 // pred_check_branch
          %547 = sbr.rel (%p545) target = $region36
        $region35: #{tpu_custom_call.1} parent=11 // pred_region
          %s549 = ssub.s32 1536, 1536
          %550 = vsyncadd [#allocation9], %s549
          %s551 = sshll.u32 [#allocation8], 4
          %s552 = int_to_ptr.vmem [resolvable:$true] %s551
          %557 = dma.hbm_to_vmem [thread:$0]  %s6, 1536, %s552, [#allocation9], 128, 128, 8
        $region36: #{tpu_custom_call.1} parent=11 // pred_fallthru
          _
        // Predicated region
        $region37: #{tpu_custom_call.1} parent=11 // pred_check
          %p558 = pneg %p214
        $region38: #{tpu_custom_call.1} parent=11 // pred_check_branch
          %560 = sbr.rel (%p558) target = $region40
        $region39: #{tpu_custom_call.1} parent=11 // pred_region
          _
        $region40: #{tpu_custom_call.1} parent=11 // pred_fallthru
          _
        // Predicated region
        $region41: #{tpu_custom_call.1} parent=11 // pred_check
          %p561 = pneg %p235
        $region42: #{tpu_custom_call.1} parent=11 // pred_check_branch
          %563 = sbr.rel (%p561) target = $region44
        $region43: #{tpu_custom_call.1} parent=11 // pred_region
          _
        $region44: #{tpu_custom_call.1} parent=11 // pred_fallthru
          _
        // Predicated region
        $region45: #{tpu_custom_call.1} parent=11 // pred_check
          %p564 = pneg %p256
        $region46: #{tpu_custom_call.1} parent=11 // pred_check_branch
          %566 = sbr.rel (%p564) target = $region48
        $region47: #{tpu_custom_call.1} parent=11 // pred_region
          %s568 = ssub.s32 48, 48
          %569 = vsyncadd [#allocation9], %s568
          %s570 = sshll.u32 [#allocation10], 4
          %s571 = int_to_ptr.vmem [resolvable:$true] %s570
          %576 = dma.hbm_to_vmem [thread:$0]  %s9, 48, %s571, [#allocation9], 16, 16, 1
        $region48: #{tpu_custom_call.1} parent=11 // pred_fallthru
          _
        // Predicated region
        $region49: #{tpu_custom_call.1} parent=11 // pred_check
          %p577 = pneg %p277
        $region50: #{tpu_custom_call.1} parent=11 // pred_check_branch
          %579 = sbr.rel (%p577) target = $region52
        $region51: #{tpu_custom_call.1} parent=11 // pred_region
          %s581 = ssub.s32 48, 48
          %582 = vsyncadd [#allocation12], %s581
          %s583 = sshll.u32 [#allocation11], 4
          %s584 = int_to_ptr.vmem [resolvable:$true] %s583
          %589 = dma.hbm_to_vmem [thread:$0]  %s10, 48, %s584, [#allocation12], 16, 16, 1
        $region52: #{tpu_custom_call.1} parent=11 // pred_fallthru
          _
        // Predicated region
        $region53: #{tpu_custom_call.1} parent=11 // pred_check
          %p590 = pneg %p298
        $region54: #{tpu_custom_call.1} parent=11 // pred_check_branch
          %592 = sbr.rel (%p590) target = $region56
        $region55: #{tpu_custom_call.1} parent=11 // pred_region
          %s594 = ssub.s32 3072, 3072
          %595 = vsyncadd [#allocation12], %s594
          %s596 = sshll.u32 [#allocation13], 4
          %s597 = int_to_ptr.vmem [resolvable:$true] %s596
          %602 = dma.hbm_to_vmem [thread:$0]  %s11, 3072, %s597, [#allocation12], 64, 64, 4
        $region56: #{tpu_custom_call.1} parent=11 // pred_fallthru
          _
        // Predicated region
        $region57: #{tpu_custom_call.1} parent=11 // pred_check
          %p603 = pneg %p319
        $region58: #{tpu_custom_call.1} parent=11 // pred_check_branch
          %605 = sbr.rel (%p603) target = $region60
        $region59: #{tpu_custom_call.1} parent=11 // pred_region
          %s607 = ssub.s32 48, 48
          %608 = vsyncadd [#allocation15], %s607
          %s609 = sshll.u32 [#allocation14], 4
          %s610 = int_to_ptr.vmem [resolvable:$true] %s609
          %615 = dma.hbm_to_vmem [thread:$0]  %s12, 48, %s610, [#allocation15], 16, 16, 1
        $region60: #{tpu_custom_call.1} parent=11 // pred_fallthru
          _
        // Predicated region
        $region61: #{tpu_custom_call.1} parent=11 // pred_check
          %p616 = pneg %p340
        $region62: #{tpu_custom_call.1} parent=11 // pred_check_branch
          %618 = sbr.rel (%p616) target = $region64
        $region63: #{tpu_custom_call.1} parent=11 // pred_region
          %s620 = ssub.s32 3072, 3072
          %621 = vsyncadd [#allocation15], %s620
          %s622 = sshll.u32 [#allocation16], 4
          %s623 = int_to_ptr.vmem [resolvable:$true] %s622
          %628 = dma.hbm_to_vmem [thread:$0]  %s13, 3072, %s623, [#allocation15], 64, 64, 4
        $region64: #{tpu_custom_call.1} parent=11 // pred_fallthru
          _
        // Predicated region
        $region65: #{tpu_custom_call.1} parent=11 // pred_check
          %p629 = pneg %p361
        $region66: #{tpu_custom_call.1} parent=11 // pred_check_branch
          %631 = sbr.rel (%p629) target = $region68
        $region67: #{tpu_custom_call.1} parent=11 // pred_region
          %s633 = ssub.s32 48, 48
          %634 = vsyncadd [#allocation18], %s633
          %s635 = sshll.u32 [#allocation17], 4
          %s636 = int_to_ptr.vmem [resolvable:$true] %s635
          %641 = dma.hbm_to_vmem [thread:$0]  %s14, 48, %s636, [#allocation18], 16, 16, 1
        $region68: #{tpu_custom_call.1} parent=11 // pred_fallthru
          _
        // Predicated region
        $region69: #{tpu_custom_call.1} parent=11 // pred_check
          %p642 = pneg %p382
        $region70: #{tpu_custom_call.1} parent=11 // pred_check_branch
          %644 = sbr.rel (%p642) target = $region72
        $region71: #{tpu_custom_call.1} parent=11 // pred_region
          _
        $region72: #{tpu_custom_call.1} parent=11 // pred_fallthru
          _
        // Predicated region
        $region73: #{tpu_custom_call.1} parent=11 // pred_check
          %p645 = pneg %p403
        $region74: #{tpu_custom_call.1} parent=11 // pred_check_branch
          %647 = sbr.rel (%p645) target = $region76
        $region75: #{tpu_custom_call.1} parent=11 // pred_region
          %s649 = ssub.s32 32, 32
          %650 = vsyncadd [#allocation18], %s649
          %s651 = sshll.u32 [#allocation19], 4
          %s652 = int_to_ptr.vmem [resolvable:$true] %s651
          %657 = dma.hbm_to_vmem [thread:$0]  %s16, 32, %s652, [#allocation18], 16, 16, 1
        $region76: #{tpu_custom_call.1} parent=11 // pred_fallthru
          _
        // Predicated region
        $region77: #{tpu_custom_call.1} parent=11 // pred_check
          %p658 = pneg %p424
        $region78: #{tpu_custom_call.1} parent=11 // pred_check_branch
          %660 = sbr.rel (%p658) target = $region80
        $region79: #{tpu_custom_call.1} parent=11 // pred_region
          _
        $region80: #{tpu_custom_call.1} parent=11 // pred_fallthru
          _
        // Predicated region
        $region81: #{tpu_custom_call.1} parent=11 // pred_check
          %p661 = pneg %p445
        $region82: #{tpu_custom_call.1} parent=11 // pred_check_branch
          %663 = sbr.rel (%p661) target = $region84
        $region83: #{tpu_custom_call.1} parent=11 // pred_region
          _
        $region84: #{tpu_custom_call.1} parent=11 // pred_fallthru
          _
      $region12: #{tpu_custom_call.1} parent=5 // pred_fallthru
        _
      %p664 = scmp.lt.s32.totalorder %s41, 2
      // Predicated region
      $region85: #{tpu_custom_call.1} parent=5 // pred_check
        %p665 = pneg %p664
      $region86: #{tpu_custom_call.1} parent=5 // pred_check_branch
        %667 = sbr.rel (%p665) target = $region88
      $region87: #{tpu_custom_call.1} parent=5 // pred_region
        // Predicated region
        $region89: #{tpu_custom_call.1} parent=87 // pred_check
          %p668 = pneg %p61
        $region90: #{tpu_custom_call.1} parent=87 // pred_check_branch
          %670 = sbr.rel (%p668) target = $region92
        $region91: #{tpu_custom_call.1} parent=87 // pred_region
          %s671 = sand.u32 %s51, 1
          %s672 = scalar_lea.sflag [#allocation3], %s671
          %s673 = sand.u32 %s51, 1
          %s674 = smul.addr %s673, 8
          %s675 = scalar_lea.vmem [#allocation2], %s674
          %s677 = ssub.s32 128, 128
          %678 = vsyncadd %s672, %s677
          %s679 = smul.addr %s41, 128
          %s680 = scalar_lea.hbm %s0, %s679
          %s682 = sshll.u32 %s675, 4
          %s683 = int_to_ptr.vmem [resolvable:$true] %s682
          %685 = dma.hbm_to_vmem [thread:$0]  %s680, 128, %s683, %s672
        $region92: #{tpu_custom_call.1} parent=87 // pred_fallthru
          _
      $region88: #{tpu_custom_call.1} parent=5 // pred_fallthru
        _
      %p686 = scmp.le.s32.totalorder 1, %s41
      %p687 = scmp.lt.s32.totalorder %s41, 3
      %p688 = pnand %p686, %p687
      %p689 = pneg %p688
      // Predicated region
      $region93: #{tpu_custom_call.1} parent=5 // pred_check
        _
      $region94: #{tpu_custom_call.1} parent=5 // pred_check_branch
        %691 = sbr.rel (%p688) target = $region96
      $region95: #{tpu_custom_call.1} parent=5 // pred_region
        %s692 = ssub.s32 %s41, 1
        %s693 = sand.u32 %s54, 1
        %s694 = scalar_lea.sflag [#allocation3], %s693
        %s695 = sand.u32 %s54, 1
        %s696 = smul.addr %s695, 8
        %s697 = scalar_lea.vmem [#allocation2], %s696
        // Predicated region
        $region97: #{tpu_custom_call.1} parent=95 // pred_check
          %p698 = pneg %p67
        $region98: #{tpu_custom_call.1} parent=95 // pred_check_branch
          %700 = sbr.rel (%p698) target = $region100
        $region99: #{tpu_custom_call.1} parent=95 // pred_region
          %701 = dma.done %s694, 128
        $region100: #{tpu_custom_call.1} parent=95 // pred_fallthru
          _
        // Predicated region
        $region101: #{tpu_custom_call.1} parent=95 // pred_check
          %p702 = pneg %p88
        $region102: #{tpu_custom_call.1} parent=95 // pred_check_branch
          %704 = sbr.rel (%p702) target = $region104
        $region103: #{tpu_custom_call.1} parent=95 // pred_region
          %705 = dma.done [#allocation6], 256
        $region104: #{tpu_custom_call.1} parent=95 // pred_fallthru
          _
        // Predicated region
        $region105: #{tpu_custom_call.1} parent=95 // pred_check
          %p706 = pneg %p109
        $region106: #{tpu_custom_call.1} parent=95 // pred_check_branch
          %708 = sbr.rel (%p706) target = $region108
        $region107: #{tpu_custom_call.1} parent=95 // pred_region
          %709 = dma.done [#allocation6], 16
        $region108: #{tpu_custom_call.1} parent=95 // pred_fallthru
          _
        // Predicated region
        $region109: #{tpu_custom_call.1} parent=95 // pred_check
          %p710 = pneg %p193
        $region110: #{tpu_custom_call.1} parent=95 // pred_check_branch
          %712 = sbr.rel (%p710) target = $region112
        $region111: #{tpu_custom_call.1} parent=95 // pred_region
          %713 = dma.done [#allocation9], 1536
        $region112: #{tpu_custom_call.1} parent=95 // pred_fallthru
          _
        // Predicated region
        $region113: #{tpu_custom_call.1} parent=95 // pred_check
          %p714 = pneg %p256
        $region114: #{tpu_custom_call.1} parent=95 // pred_check_branch
          %716 = sbr.rel (%p714) target = $region116
        $region115: #{tpu_custom_call.1} parent=95 // pred_region
          %717 = dma.done [#allocation9], 48
        $region116: #{tpu_custom_call.1} parent=95 // pred_fallthru
          _
        // Predicated region
        $region117: #{tpu_custom_call.1} parent=95 // pred_check
          %p718 = pneg %p277
        $region118: #{tpu_custom_call.1} parent=95 // pred_check_branch
          %720 = sbr.rel (%p718) target = $region120
        $region119: #{tpu_custom_call.1} parent=95 // pred_region
          %721 = dma.done [#allocation12], 48
        $region120: #{tpu_custom_call.1} parent=95 // pred_fallthru
          _
        // Predicated region
        $region121: #{tpu_custom_call.1} parent=95 // pred_check
          %p722 = pneg %p298
        $region122: #{tpu_custom_call.1} parent=95 // pred_check_branch
          %724 = sbr.rel (%p722) target = $region124
        $region123: #{tpu_custom_call.1} parent=95 // pred_region
          %725 = dma.done [#allocation12], 3072
        $region124: #{tpu_custom_call.1} parent=95 // pred_fallthru
          _
        // Predicated region
        $region125: #{tpu_custom_call.1} parent=95 // pred_check
          %p726 = pneg %p319
        $region126: #{tpu_custom_call.1} parent=95 // pred_check_branch
          %728 = sbr.rel (%p726) target = $region128
        $region127: #{tpu_custom_call.1} parent=95 // pred_region
          %729 = dma.done [#allocation15], 48
        $region128: #{tpu_custom_call.1} parent=95 // pred_fallthru
          _
        // Predicated region
        $region129: #{tpu_custom_call.1} parent=95 // pred_check
          %p730 = pneg %p340
        $region130: #{tpu_custom_call.1} parent=95 // pred_check_branch
          %732 = sbr.rel (%p730) target = $region132
        $region131: #{tpu_custom_call.1} parent=95 // pred_region
          %733 = dma.done [#allocation15], 3072
        $region132: #{tpu_custom_call.1} parent=95 // pred_fallthru
          _
        // Predicated region
        $region133: #{tpu_custom_call.1} parent=95 // pred_check
          %p734 = pneg %p361
        $region134: #{tpu_custom_call.1} parent=95 // pred_check_branch
          %736 = sbr.rel (%p734) target = $region136
        $region135: #{tpu_custom_call.1} parent=95 // pred_region
          %737 = dma.done [#allocation18], 48
        $region136: #{tpu_custom_call.1} parent=95 // pred_fallthru
          _
        // Predicated region
        $region137: #{tpu_custom_call.1} parent=95 // pred_check
          %p738 = pneg %p403
        $region138: #{tpu_custom_call.1} parent=95 // pred_check_branch
          %740 = sbr.rel (%p738) target = $region140
        $region139: #{tpu_custom_call.1} parent=95 // pred_region
          %741 = dma.done [#allocation18], 32
        $region140: #{tpu_custom_call.1} parent=95 // pred_fallthru
          _
        %s742 = sand.u32 %s54, 1
        %s743 = scalar_lea.sflag [#allocation3], %s742
        %s744 = sand.u32 %s54, 1
        %s745 = smul.addr %s744, 8
        %s746 = scalar_lea.vmem [#allocation2], %s745
        %p747 = pneg %p67
        %p748 = pneg %p64
        %p749 = pneg %p88
        %p750 = pneg %p85
        %p751 = pneg %p109
        %p752 = pneg %p106
        %p753 = pneg %p130
        %p754 = pneg %p127
        %p755 = pneg %p151
        %p756 = pneg %p148
        %p757 = pneg %p172
        %p758 = pneg %p169
        %p759 = pneg %p193
        %p760 = pneg %p190
        %p761 = pneg %p214
        %p762 = pneg %p211
        %p763 = pneg %p235
        %p764 = pneg %p232
        %p765 = pneg %p256
        %p766 = pneg %p253
        %p767 = pneg %p277
        %p768 = pneg %p274
        %p769 = pneg %p298
        %p770 = pneg %p295
        %p771 = pneg %p319
        %p772 = pneg %p316
        %p773 = pneg %p340
        %p774 = pneg %p337
        %p775 = pneg %p361
        %p776 = pneg %p358
        %p777 = pneg %p382
        %p778 = pneg %p379
        %p779 = pneg %p403
        %p780 = pneg %p400
        %p781 = pneg %p424
        %p782 = pneg %p421
        %p783 = pneg %p445
        %p784 = pneg %p442
        %p785 = pneg %p471
        %p786 = pneg %p468
        %s787 = sand.u32 %s458, 1
        %s788 = scalar_lea.sflag [#allocation4], %s787
        %s789 = sand.u32 %s458, 1
        %s790 = scalar_lea.vmem [#allocation20], %s789
        %p791 = pneg %p497
        %p792 = pneg %p494
        %s793 = sand.u32 %s484, 1
        %s794 = scalar_lea.sflag [#allocation22], %s793
        %s795 = sand.u32 %s484, 1
        %s796 = scalar_lea.vmem [#allocation21], %s795
        %v798 = vld [vmem:[%s697] sm:$0xff]
        %v799 = vpack.c.bf16 %v798, %v798
        %v800 = vld [vmem:[#allocation5] sm:$0xf]
        %v801 = vld [vmem:[#allocation5 + $0x4] sm:$0xf]
        %v802 = vld [vmem:[#allocation5 + $0x8] sm:$0xf]
        %v803 = vld [vmem:[#allocation5 + $0xc] sm:$0xf]
        %v804 = vld [vmem:[#allocation7] sm:$0x1]
        %v806 = vlaneseq
        %v807 = vshrl.u32 %v806, 7
        %v808 = vsub.s32 0, %v807
        %v809 = vrot.slane %v804, %v808
        %v815 = vunpack.c.l.b16 %v800
        %v816 = vunpack.c.l.b16 %v801
        %v817 = vunpack.c.l.b16 %v802
        %v818 = vunpack.c.l.b16 %v803
        %v819 = vpack.c.b16 %v816, %v815
        %v820 = vpack.c.b16 %v818, %v817
        %vm823 = vcmask 261120
        %v825 = vsel %vm823, %v799, 0
        %827 = vmatprep.subr.bf16.mxu0 0
        %828 = vmatpush1.bf16.msra.mxu0 %v819
        %829 = vmatprep.subr.bf16.mxu0 0
        %830 = vmatpush1.bf16.msra.mxu0 %v820
        %831 = vmatprep.subr.bf16.mxu0 0
        %832 = vmatpush1.bf16.msra.mxu0 0
        %833 = vmatprep.subr.bf16.mxu0 0
        %834 = vmatpush1.bf16.msra.mxu0 0
        %835 = vmatprep.subr.bf16.mxu0 0
        %836 = vmatpush1.bf16.msra.mxu0 0
        %837 = vmatprep.subr.bf16.mxu0 0
        %838 = vmatpush1.bf16.msra.mxu0 0
        %839 = vmatprep.subr.bf16.mxu0 0
        %840 = vmatpush1.bf16.msra.mxu0 0
        %841 = vmatprep.subr.bf16.mxu0 0
        %842 = vmatpush1.bf16.msra.mxu0 0
        %843 = vmatprep.subr.bf16.mxu0 0
        %844 = vmatpush1.bf16.msra.mxu0 0
        %845 = vmatprep.subr.bf16.mxu0 0
        %846 = vmatpush1.bf16.msra.mxu0 0
        %847 = vmatprep.subr.bf16.mxu0 0
        %848 = vmatpush1.bf16.msra.mxu0 0
        %849 = vmatprep.subr.bf16.mxu0 0
        %850 = vmatpush1.bf16.msra.mxu0 0
        %851 = vmatprep.subr.bf16.mxu0 0
        %852 = vmatpush1.bf16.msra.mxu0 0
        %853 = vmatprep.subr.bf16.mxu0 0
        %854 = vmatpush1.bf16.msra.mxu0 0
        %855 = vmatprep.subr.bf16.mxu0 0
        %856 = vmatpush1.bf16.msra.mxu0 0
        %857 = vmatprep.subr.bf16.mxu0 0
        %858 = vmatpush1.bf16.msra.mxu0 0
        %859 = vmatprep.mubr.bf16.mxu0 0
        %860 = vmatmul.mubr.bf16.gmra.mrb[0].mxu0 %v825
        %v861 = vpop.f32.mrb[0].mxu0
        %v862 = vadd.f32 %v809, %v861
        %v863 = vpop.f32.mrb[0].mxu0
        %v864 = vpop.f32.mrb[0].mxu0
        %v865 = vpop.f32.mrb[0].mxu0
        %866 = vdwg.mxu0
        %v867 = vld [vmem:[%s3] sm:$0x1]
        %v868 = vld [vmem:[%s4] sm:$0x1]
        %869 = vadd.xlane.f32.xlu0 %v862
        %v870 = vpop.xlane.xlu0 %869
        %v871 = vmul.f32 %v862, %v862
        %872 = vadd.xlane.f32.xlu0 %v871
        %v873 = vpop.xlane.xlu0 %872
        %v874 = vmul.f32 %v870, 0.03125
        %v875 = vmul.f32 %v873, 0.03125
        %v876 = vmul.f32 %v874, %v874
        %v877 = vsub.f32 %v875, %v876
        %v878 = vsub.f32 %v862, %v874
        %v879 = vadd.f32 %v877, 1e-05
        %v880 = vrsqrt.pop %v879
        %v881 = vmul.f32 %v878, %v880
        %v883 = vlaneseq
        %v884 = vshrl.u32 %v883, 7
        %v885 = vsub.s32 0, %v884
        %v886 = vrot.slane %v867, %v885
        %v888 = vmul.f32 %v881, %v886
        %v890 = vlaneseq
        %v891 = vshrl.u32 %v890, 7
        %v892 = vsub.s32 0, %v891
        %v893 = vrot.slane %v868, %v892
        %v895 = vadd.f32 %v888, %v893
        %v896 = vld [vmem:[%s5] sm:$0xff]
        %v897 = vld [vmem:[%s5 + $0x8] sm:$0xff]
        %v898 = vld [vmem:[%s5 + $0x10] sm:$0xff]
        %v899 = vld [vmem:[%s5 + $0x18] sm:$0xff]
        %v900 = vld [vmem:[#allocation8] sm:$0xff]
        %v901 = vld [vmem:[#allocation8 + $0x8] sm:$0xff]
        %v902 = vld [vmem:[#allocation8 + $0x10] sm:$0xff]
        %v903 = vld [vmem:[#allocation8 + $0x18] sm:$0xff]
        %vm904 = vcmask 64512
        %v906 = vsel %vm904, %v896, 0
        %v909 = vsel %vm904, %v897, 0
        %v912 = vsel %vm904, %v898, 0
        %v915 = vsel %vm904, %v899, 0
        %917 = vmatprep.subr.mxu0 0.0
        %918 = vmatpush1.msra.mxu0 %v895
        %919 = vmatprep.subr.mxu0 0.0
        %920 = vmatpush1.msra.mxu0 0.0
        %921 = vmatprep.subr.mxu0 0.0
        %922 = vmatpush1.msra.mxu0 0.0
        %923 = vmatprep.subr.mxu0 0.0
        %924 = vmatpush1.msra.mxu0 0.0
        %925 = vmatprep.subr.mxu0 0.0
        %926 = vmatpush1.msra.mxu0 0.0
        %927 = vmatprep.subr.mxu0 0.0
        %928 = vmatpush1.msra.mxu0 0.0
        %929 = vmatprep.subr.mxu0 0.0
        %930 = vmatpush1.msra.mxu0 0.0
        %931 = vmatprep.subr.mxu0 0.0
        %932 = vmatpush1.msra.mxu0 0.0
        %933 = vmatprep.subr.mxu0 0.0
        %934 = vmatpush1.msra.mxu0 0.0
        %935 = vmatprep.subr.mxu0 0.0
        %936 = vmatpush1.msra.mxu0 0.0
        %937 = vmatprep.subr.mxu0 0.0
        %938 = vmatpush1.msra.mxu0 0.0
        %939 = vmatprep.subr.mxu0 0.0
        %940 = vmatpush1.msra.mxu0 0.0
        %941 = vmatprep.subr.mxu0 0.0
        %942 = vmatpush1.msra.mxu0 0.0
        %943 = vmatprep.subr.mxu0 0.0
        %944 = vmatpush1.msra.mxu0 0.0
        %945 = vmatprep.subr.mxu0 0.0
        %946 = vmatpush1.msra.mxu0 0.0
        %947 = vmatprep.subr.mxu0 0.0
        %948 = vmatpush1.msra.mxu0 0.0
        %949 = vmatprep.subr.mxu0 0.0
        %950 = vmatpush1.msra.mxu0 0.0
        %951 = vmatprep.subr.mxu0 0.0
        %952 = vmatpush1.msra.mxu0 0.0
        %953 = vmatprep.subr.mxu0 0.0
        %954 = vmatpush1.msra.mxu0 0.0
        %955 = vmatprep.subr.mxu0 0.0
        %956 = vmatpush1.msra.mxu0 0.0
        %957 = vmatprep.subr.mxu0 0.0
        %958 = vmatpush1.msra.mxu0 0.0
        %959 = vmatprep.subr.mxu0 0.0
        %960 = vmatpush1.msra.mxu0 0.0
        %961 = vmatprep.subr.mxu0 0.0
        %962 = vmatpush1.msra.mxu0 0.0
        %963 = vmatprep.subr.mxu0 0.0
        %964 = vmatpush1.msra.mxu0 0.0
        %965 = vmatprep.subr.mxu0 0.0
        %966 = vmatpush1.msra.mxu0 0.0
        %967 = vmatprep.subr.mxu0 0.0
        %968 = vmatpush1.msra.mxu0 0.0
        %969 = vmatprep.subr.mxu0 0.0
        %970 = vmatpush1.msra.mxu0 0.0
        %971 = vmatprep.subr.mxu0 0.0
        %972 = vmatpush1.msra.mxu0 0.0
        %973 = vmatprep.subr.mxu0 0.0
        %974 = vmatpush1.msra.mxu0 0.0
        %975 = vmatprep.subr.mxu0 0.0
        %976 = vmatpush1.msra.mxu0 0.0
        %977 = vmatprep.subr.mxu0 0.0
        %978 = vmatpush1.msra.mxu0 0.0
        %979 = vmatprep.subr.mxu0 0.0
        %980 = vmatpush1.msra.mxu0 0.0
        %981 = vmatprep.mubr.f32.mxu0 0.0
        %982 = vmatmul.mubr.f32.gmra.mrb[0].mxu0 %v906
        %v983 = vpop.f32.mrb[0].mxu0
        %v984 = vadd.f32 %v900, %v983
        %v985 = vpop.f32.mrb[0].mxu0
        %986 = vmatprep.mubr.f32.mxu0 0.0
        %987 = vmatmul.mubr.f32.gmra.mrb[0].mxu0 %v909
        %v988 = vpop.f32.mrb[0].mxu0
        %v989 = vadd.f32 %v901, %v988
        %v990 = vpop.f32.mrb[0].mxu0
        %991 = vmatprep.mubr.f32.mxu0 0.0
        %992 = vmatmul.mubr.f32.gmra.mrb[0].mxu0 %v912
        %v993 = vpop.f32.mrb[0].mxu0
        %v994 = vadd.f32 %v902, %v993
        %v995 = vpop.f32.mrb[0].mxu0
        %996 = vmatprep.mubr.f32.mxu0 0.0
        %997 = vmatmul.mubr.f32.gmra.mrb[0].mxu0 %v915
        %v998 = vpop.f32.mrb[0].mxu0
        %v999 = vadd.f32 %v903, %v998
        %v1000 = vpop.f32.mrb[0].mxu0
        %1001 = vdwg.mxu0
        %v1002 = vmul.f32 %v984, 0.5
        %v1003 = vmul.f32 %v989, 0.5
        %v1004 = vmul.f32 %v994, 0.5
        %v1005 = vmul.f32 %v999, 0.5
        %v1006 = vmul.f32 %v984, 0.044715
        %v1007 = vmul.f32 %v989, 0.044715
        %v1008 = vmul.f32 %v994, 0.044715
        %v1009 = vmul.f32 %v999, 0.044715
        %v1010 = vmul.f32 %v1006, %v984
        %v1011 = vmul.f32 %v1007, %v989
        %v1012 = vmul.f32 %v1008, %v994
        %v1013 = vmul.f32 %v1009, %v999
        %v1014 = vmul.f32 %v1010, %v984
        %v1015 = vmul.f32 %v1011, %v989
        %v1016 = vmul.f32 %v1012, %v994
        %v1017 = vmul.f32 %v1013, %v999
        %v1018 = vadd.f32 %v984, %v1014
        %v1019 = vadd.f32 %v989, %v1015
        %v1020 = vadd.f32 %v994, %v1016
        %v1021 = vadd.f32 %v999, %v1017
        %v1022 = vmul.f32 %v1018, 0.7978846
        %v1023 = vmul.f32 %v1019, 0.7978846
        %v1024 = vmul.f32 %v1020, 0.7978846
        %v1025 = vmul.f32 %v1021, 0.7978846
        %v1026 = vtanh.pop %v1022
        %v1027 = vtanh.pop %v1023
        %v1028 = vtanh.pop %v1024
        %v1029 = vtanh.pop %v1025
        %v1030 = vadd.f32 %v1026, 1.0
        %v1031 = vadd.f32 %v1027, 1.0
        %v1032 = vadd.f32 %v1028, 1.0
        %v1033 = vadd.f32 %v1029, 1.0
        %v1034 = vmul.f32 %v1002, %v1030
        %v1035 = vmul.f32 %v1003, %v1031
        %v1036 = vmul.f32 %v1004, %v1032
        %v1037 = vmul.f32 %v1005, %v1033
        %v1038 = vld [vmem:[%s7] sm:$0xff]
        %v1039 = vld [vmem:[%s8] sm:$0xff]
        %v1041 = vsel %vm823, %v1038, 0
        %1043 = vmatprep.subr.mxu0 0.0
        %1044 = vmatpush1.msra.mxu0 %v1034
        %1045 = vmatprep.subr.mxu0 0.0
        %1046 = vmatpush1.msra.mxu0 %v1035
        %1047 = vmatprep.subr.mxu0 0.0
        %1048 = vmatpush1.msra.mxu0 %v1036
        %1049 = vmatprep.subr.mxu0 0.0
        %1050 = vmatpush1.msra.mxu0 %v1037
        %1051 = vmatprep.subr.mxu0 0.0
        %1052 = vmatpush1.msra.mxu0 0.0
        %1053 = vmatprep.subr.mxu0 0.0
        %1054 = vmatpush1.msra.mxu0 0.0
        %1055 = vmatprep.subr.mxu0 0.0
        %1056 = vmatpush1.msra.mxu0 0.0
        %1057 = vmatprep.subr.mxu0 0.0
        %1058 = vmatpush1.msra.mxu0 0.0
        %1059 = vmatprep.subr.mxu0 0.0
        %1060 = vmatpush1.msra.mxu0 0.0
        %1061 = vmatprep.subr.mxu0 0.0
        %1062 = vmatpush1.msra.mxu0 0.0
        %1063 = vmatprep.subr.mxu0 0.0
        %1064 = vmatpush1.msra.mxu0 0.0
        %1065 = vmatprep.subr.mxu0 0.0
        %1066 = vmatpush1.msra.mxu0 0.0
        %1067 = vmatprep.subr.mxu0 0.0
        %1068 = vmatpush1.msra.mxu0 0.0
        %1069 = vmatprep.subr.mxu0 0.0
        %1070 = vmatpush1.msra.mxu0 0.0
        %1071 = vmatprep.subr.mxu0 0.0
        %1072 = vmatpush1.msra.mxu0 0.0
        %1073 = vmatprep.subr.mxu0 0.0
        %1074 = vmatpush1.msra.mxu0 0.0
        %1075 = vmatprep.subr.mxu0 0.0
        %1076 = vmatpush1.msra.mxu0 0.0
        %1077 = vmatprep.subr.mxu0 0.0
        %1078 = vmatpush1.msra.mxu0 0.0
        %1079 = vmatprep.subr.mxu0 0.0
        %1080 = vmatpush1.msra.mxu0 0.0
        %1081 = vmatprep.subr.mxu0 0.0
        %1082 = vmatpush1.msra.mxu0 0.0
        %1083 = vmatprep.subr.mxu0 0.0
        %1084 = vmatpush1.msra.mxu0 0.0
        %1085 = vmatprep.subr.mxu0 0.0
        %1086 = vmatpush1.msra.mxu0 0.0
        %1087 = vmatprep.subr.mxu0 0.0
        %1088 = vmatpush1.msra.mxu0 0.0
        %1089 = vmatprep.subr.mxu0 0.0
        %1090 = vmatpush1.msra.mxu0 0.0
        %1091 = vmatprep.subr.mxu0 0.0
        %1092 = vmatpush1.msra.mxu0 0.0
        %1093 = vmatprep.subr.mxu0 0.0
        %1094 = vmatpush1.msra.mxu0 0.0
        %1095 = vmatprep.subr.mxu0 0.0
        %1096 = vmatpush1.msra.mxu0 0.0
        %1097 = vmatprep.subr.mxu0 0.0
        %1098 = vmatpush1.msra.mxu0 0.0
        %1099 = vmatprep.subr.mxu0 0.0
        %1100 = vmatpush1.msra.mxu0 0.0
        %1101 = vmatprep.subr.mxu0 0.0
        %1102 = vmatpush1.msra.mxu0 0.0
        %1103 = vmatprep.subr.mxu0 0.0
        %1104 = vmatpush1.msra.mxu0 0.0
        %1105 = vmatprep.subr.mxu0 0.0
        %1106 = vmatpush1.msra.mxu0 0.0
        %1107 = vmatprep.mubr.f32.mxu0 0.0
        %1108 = vmatmul.mubr.f32.gmra.mrb[0].mxu0 %v1041
        %v1109 = vpop.f32.mrb[0].mxu0
        %v1110 = vadd.f32 %v1039, %v1109
        %v1111 = vpop.f32.mrb[0].mxu0
        %1112 = vdwg.mxu0
        %v1113 = vadd.f32 %v862, %v1110
        %v1114 = vld [vmem:[#allocation10] sm:$0x1]
        %v1115 = vld [vmem:[#allocation11] sm:$0x1]
        %1116 = vadd.xlane.f32.xlu0 %v1113
        %v1117 = vpop.xlane.xlu0 %1116
        %v1118 = vmul.f32 %v1113, %v1113
        %1119 = vadd.xlane.f32.xlu0 %v1118
        %v1120 = vpop.xlane.xlu0 %1119
        %v1121 = vmul.f32 %v1117, 0.03125
        %v1122 = vmul.f32 %v1120, 0.03125
        %v1123 = vmul.f32 %v1121, %v1121
        %v1124 = vsub.f32 %v1122, %v1123
        %v1125 = vsub.f32 %v1113, %v1121
        %v1126 = vadd.f32 %v1124, 1e-05
        %v1127 = vrsqrt.pop %v1126
        %v1128 = vmul.f32 %v1125, %v1127
        %v1130 = vlaneseq
        %v1131 = vshrl.u32 %v1130, 7
        %v1132 = vsub.s32 0, %v1131
        %v1133 = vrot.slane %v1114, %v1132
        %v1135 = vmul.f32 %v1128, %v1133
        %v1137 = vlaneseq
        %v1138 = vshrl.u32 %v1137, 7
        %v1139 = vsub.s32 0, %v1138
        %v1140 = vrot.slane %v1115, %v1139
        %v1142 = vadd.f32 %v1135, %v1140
        %v1143 = vpack.c.bf16 %v1142, %v1142
        %v1144 = vld [vmem:[#allocation13] sm:$0xf]
        %v1145 = vld [vmem:[#allocation13 + $0x4] sm:$0xf]
        %v1146 = vld [vmem:[#allocation13 + $0x8] sm:$0xf]
        %v1147 = vld [vmem:[#allocation13 + $0xc] sm:$0xf]
        %v1148 = vld [vmem:[#allocation13 + $0x10] sm:$0xf]
        %v1149 = vld [vmem:[#allocation13 + $0x14] sm:$0xf]
        %v1150 = vld [vmem:[#allocation13 + $0x18] sm:$0xf]
        %v1151 = vld [vmem:[#allocation13 + $0x1c] sm:$0xf]
        %v1152 = vld [vmem:[#allocation13 + $0x20] sm:$0xf]
        %v1153 = vld [vmem:[#allocation13 + $0x24] sm:$0xf]
        %v1154 = vld [vmem:[#allocation13 + $0x28] sm:$0xf]
        %v1155 = vld [vmem:[#allocation13 + $0x2c] sm:$0xf]
        %v1156 = vld [vmem:[#allocation13 + $0x30] sm:$0xf]
        %v1157 = vld [vmem:[#allocation13 + $0x34] sm:$0xf]
        %v1158 = vld [vmem:[#allocation13 + $0x38] sm:$0xf]
        %v1159 = vld [vmem:[#allocation13 + $0x3c] sm:$0xf]
        %v1160 = vld [vmem:[#allocation14] sm:$0x1]
        %v1162 = vlaneseq
        %v1163 = vshrl.u32 %v1162, 7
        %v1164 = vsub.s32 0, %v1163
        %v1165 = vrot.slane %v1160, %v1164
        %v1183 = vunpack.c.l.b16 %v1144
        %v1184 = vunpack.c.l.b16 %v1145
        %v1185 = vunpack.c.l.b16 %v1146
        %v1186 = vunpack.c.l.b16 %v1147
        %v1187 = vunpack.c.l.b16 %v1148
        %v1188 = vunpack.c.l.b16 %v1149
        %v1189 = vunpack.c.l.b16 %v1150
        %v1190 = vunpack.c.l.b16 %v1151
        %v1191 = vunpack.c.l.b16 %v1152
        %v1192 = vunpack.c.l.b16 %v1153
        %v1193 = vunpack.c.l.b16 %v1154
        %v1194 = vunpack.c.l.b16 %v1155
        %v1195 = vunpack.c.l.b16 %v1156
        %v1196 = vunpack.c.l.b16 %v1157
        %v1197 = vunpack.c.l.b16 %v1158
        %v1198 = vunpack.c.l.b16 %v1159
        %v1199 = vpack.c.b16 %v1184, %v1183
        %v1200 = vpack.c.b16 %v1186, %v1185
        %v1201 = vpack.c.b16 %v1188, %v1187
        %v1202 = vpack.c.b16 %v1190, %v1189
        %v1203 = vpack.c.b16 %v1192, %v1191
        %v1204 = vpack.c.b16 %v1194, %v1193
        %v1205 = vpack.c.b16 %v1196, %v1195
        %v1206 = vpack.c.b16 %v1198, %v1197
        %1215 = vmatprep.subr.bf16.mxu0 0
        %1216 = vmatpush1.bf16.msra.mxu0 %v1199
        %1217 = vmatprep.subr.bf16.mxu0 0
        %1218 = vmatpush1.bf16.msra.mxu0 %v1200
        %1219 = vmatprep.subr.bf16.mxu0 0
        %1220 = vmatpush1.bf16.msra.mxu0 %v1201
        %1221 = vmatprep.subr.bf16.mxu0 0
        %1222 = vmatpush1.bf16.msra.mxu0 %v1202
        %1223 = vmatprep.subr.bf16.mxu0 0
        %1224 = vmatpush1.bf16.msra.mxu0 %v1203
        %1225 = vmatprep.subr.bf16.mxu0 0
        %1226 = vmatpush1.bf16.msra.mxu0 %v1204
        %1227 = vmatprep.subr.bf16.mxu0 0
        %1228 = vmatpush1.bf16.msra.mxu0 %v1205
        %1229 = vmatprep.subr.bf16.mxu0 0
        %1230 = vmatpush1.bf16.msra.mxu0 %v1206
        %1231 = vmatprep.subr.bf16.mxu0 0
        %1232 = vmatpush1.bf16.msra.mxu0 0
        %1233 = vmatprep.subr.bf16.mxu0 0
        %1234 = vmatpush1.bf16.msra.mxu0 0
        %1235 = vmatprep.subr.bf16.mxu0 0
        %1236 = vmatpush1.bf16.msra.mxu0 0
        %1237 = vmatprep.subr.bf16.mxu0 0
        %1238 = vmatpush1.bf16.msra.mxu0 0
        %1239 = vmatprep.subr.bf16.mxu0 0
        %1240 = vmatpush1.bf16.msra.mxu0 0
        %1241 = vmatprep.subr.bf16.mxu0 0
        %1242 = vmatpush1.bf16.msra.mxu0 0
        %1243 = vmatprep.subr.bf16.mxu0 0
        %1244 = vmatpush1.bf16.msra.mxu0 0
        %1245 = vmatprep.subr.bf16.mxu0 0
        %1246 = vmatpush1.bf16.msra.mxu0 0
        %1247 = vmatprep.mubr.bf16.mxu0 0
        %1248 = vmatmul.mubr.bf16.gmra.mrb[0].mxu0 %v1143
        %v1249 = vpop.f32.mrb[0].mxu0
        %v1250 = vadd.f32 %v1165, %v1249
        %v1251 = vpop.f32.mrb[0].mxu0
        %v1252 = vpop.f32.mrb[0].mxu0
        %v1253 = vpop.f32.mrb[0].mxu0
        %1254 = vdwg.mxu0
        %v1255 = vmul.f32 %v1250, 0.5
        %v1256 = vmul.f32 %v1250, 0.044715
        %v1257 = vmul.f32 %v1256, %v1250
        %v1258 = vmul.f32 %v1257, %v1250
        %v1259 = vadd.f32 %v1250, %v1258
        %v1260 = vmul.f32 %v1259, 0.7978846
        %v1261 = vtanh.pop %v1260
        %v1262 = vadd.f32 %v1261, 1.0
        %v1263 = vmul.f32 %v1255, %v1262
        %v1264 = vpack.c.bf16 %v1263, %v1263
        %v1265 = vld [vmem:[#allocation16] sm:$0xf]
        %v1266 = vld [vmem:[#allocation16 + $0x4] sm:$0xf]
        %v1267 = vld [vmem:[#allocation16 + $0x8] sm:$0xf]
        %v1268 = vld [vmem:[#allocation16 + $0xc] sm:$0xf]
        %v1269 = vld [vmem:[#allocation16 + $0x10] sm:$0xf]
        %v1270 = vld [vmem:[#allocation16 + $0x14] sm:$0xf]
        %v1271 = vld [vmem:[#allocation16 + $0x18] sm:$0xf]
        %v1272 = vld [vmem:[#allocation16 + $0x1c] sm:$0xf]
        %v1273 = vld [vmem:[#allocation16 + $0x20] sm:$0xf]
        %v1274 = vld [vmem:[#allocation16 + $0x24] sm:$0xf]
        %v1275 = vld [vmem:[#allocation16 + $0x28] sm:$0xf]
        %v1276 = vld [vmem:[#allocation16 + $0x2c] sm:$0xf]
        %v1277 = vld [vmem:[#allocation16 + $0x30] sm:$0xf]
        %v1278 = vld [vmem:[#allocation16 + $0x34] sm:$0xf]
        %v1279 = vld [vmem:[#allocation16 + $0x38] sm:$0xf]
        %v1280 = vld [vmem:[#allocation16 + $0x3c] sm:$0xf]
        %v1281 = vld [vmem:[#allocation17] sm:$0x1]
        %v1283 = vlaneseq
        %v1284 = vshrl.u32 %v1283, 7
        %v1285 = vsub.s32 0, %v1284
        %v1286 = vrot.slane %v1281, %v1285
        %v1304 = vunpack.c.l.b16 %v1265
        %v1305 = vunpack.c.l.b16 %v1266
        %v1306 = vunpack.c.l.b16 %v1267
        %v1307 = vunpack.c.l.b16 %v1268
        %v1308 = vunpack.c.l.b16 %v1269
        %v1309 = vunpack.c.l.b16 %v1270
        %v1310 = vunpack.c.l.b16 %v1271
        %v1311 = vunpack.c.l.b16 %v1272
        %v1312 = vunpack.c.l.b16 %v1273
        %v1313 = vunpack.c.l.b16 %v1274
        %v1314 = vunpack.c.l.b16 %v1275
        %v1315 = vunpack.c.l.b16 %v1276
        %v1316 = vunpack.c.l.b16 %v1277
        %v1317 = vunpack.c.l.b16 %v1278
        %v1318 = vunpack.c.l.b16 %v1279
        %v1319 = vunpack.c.l.b16 %v1280
        %v1320 = vpack.c.b16 %v1305, %v1304
        %v1321 = vpack.c.b16 %v1307, %v1306
        %v1322 = vpack.c.b16 %v1309, %v1308
        %v1323 = vpack.c.b16 %v1311, %v1310
        %v1324 = vpack.c.b16 %v1313, %v1312
        %v1325 = vpack.c.b16 %v1315, %v1314
        %v1326 = vpack.c.b16 %v1317, %v1316
        %v1327 = vpack.c.b16 %v1319, %v1318
        %1336 = vmatprep.subr.bf16.mxu0 0
        %1337 = vmatpush1.bf16.msra.mxu0 %v1320
        %1338 = vmatprep.subr.bf16.mxu0 0
        %1339 = vmatpush1.bf16.msra.mxu0 %v1321
        %1340 = vmatprep.subr.bf16.mxu0 0
        %1341 = vmatpush1.bf16.msra.mxu0 %v1322
        %1342 = vmatprep.subr.bf16.mxu0 0
        %1343 = vmatpush1.bf16.msra.mxu0 %v1323
        %1344 = vmatprep.subr.bf16.mxu0 0
        %1345 = vmatpush1.bf16.msra.mxu0 %v1324
        %1346 = vmatprep.subr.bf16.mxu0 0
        %1347 = vmatpush1.bf16.msra.mxu0 %v1325
        %1348 = vmatprep.subr.bf16.mxu0 0
        %1349 = vmatpush1.bf16.msra.mxu0 %v1326
        %1350 = vmatprep.subr.bf16.mxu0 0
        %1351 = vmatpush1.bf16.msra.mxu0 %v1327
        %1352 = vmatprep.subr.bf16.mxu0 0
        %1353 = vmatpush1.bf16.msra.mxu0 0
        %1354 = vmatprep.subr.bf16.mxu0 0
        %1355 = vmatpush1.bf16.msra.mxu0 0
        %1356 = vmatprep.subr.bf16.mxu0 0
        %1357 = vmatpush1.bf16.msra.mxu0 0
        %1358 = vmatprep.subr.bf16.mxu0 0
        %1359 = vmatpush1.bf16.msra.mxu0 0
        %1360 = vmatprep.subr.bf16.mxu0 0
        %1361 = vmatpush1.bf16.msra.mxu0 0
        %1362 = vmatprep.subr.bf16.mxu0 0
        %1363 = vmatpush1.bf16.msra.mxu0 0
        %1364 = vmatprep.subr.bf16.mxu0 0
        %1365 = vmatpush1.bf16.msra.mxu0 0
        %1366 = vmatprep.subr.bf16.mxu0 0
        %1367 = vmatpush1.bf16.msra.mxu0 0
        %1368 = vmatprep.mubr.bf16.mxu0 0
        %1369 = vmatmul.mubr.bf16.gmra.mrb[0].mxu0 %v1264
        %v1370 = vpop.f32.mrb[0].mxu0
        %v1371 = vadd.f32 %v1286, %v1370
        %v1372 = vpop.f32.mrb[0].mxu0
        %v1373 = vpop.f32.mrb[0].mxu0
        %v1374 = vpop.f32.mrb[0].mxu0
        %1375 = vdwg.mxu0
        %v1376 = vadd.f32 %v1113, %v1371
        %s1377 = scalar_lea.vmem %s3, 1
        %v1378 = vld [vmem:[%s1377] sm:$0x1]
        %s1379 = scalar_lea.vmem %s4, 1
        %v1380 = vld [vmem:[%s1379] sm:$0x1]
        %1381 = vadd.xlane.f32.xlu0 %v1376
        %v1382 = vpop.xlane.xlu0 %1381
        %v1383 = vmul.f32 %v1376, %v1376
        %1384 = vadd.xlane.f32.xlu0 %v1383
        %v1385 = vpop.xlane.xlu0 %1384
        %v1386 = vmul.f32 %v1382, 0.03125
        %v1387 = vmul.f32 %v1385, 0.03125
        %v1388 = vmul.f32 %v1386, %v1386
        %v1389 = vsub.f32 %v1387, %v1388
        %v1390 = vsub.f32 %v1376, %v1386
        %v1391 = vadd.f32 %v1389, 1e-05
        %v1392 = vrsqrt.pop %v1391
        %v1393 = vmul.f32 %v1390, %v1392
        %v1395 = vlaneseq
        %v1396 = vshrl.u32 %v1395, 7
        %v1397 = vsub.s32 0, %v1396
        %v1398 = vrot.slane %v1378, %v1397
        %v1400 = vmul.f32 %v1393, %v1398
        %v1402 = vlaneseq
        %v1403 = vshrl.u32 %v1402, 7
        %v1404 = vsub.s32 0, %v1403
        %v1405 = vrot.slane %v1380, %v1404
        %v1407 = vadd.f32 %v1400, %v1405
        %s1408 = scalar_lea.vmem %s5, 32
        %v1409 = vld [vmem:[%s1408] sm:$0xff]
        %v1410 = vld [vmem:[%s1408 + $0x8] sm:$0xff]
        %v1411 = vld [vmem:[%s1408 + $0x10] sm:$0xff]
        %v1412 = vld [vmem:[%s1408 + $0x18] sm:$0xff]
        %s1413 = scalar_lea.vmem [#allocation8], 32
        %v1414 = vld [vmem:[%s1413] sm:$0xff]
        %v1415 = vld [vmem:[%s1413 + $0x8] sm:$0xff]
        %v1416 = vld [vmem:[%s1413 + $0x10] sm:$0xff]
        %v1417 = vld [vmem:[%s1413 + $0x18] sm:$0xff]
        %v1419 = vsel %vm904, %v1409, 0
        %v1422 = vsel %vm904, %v1410, 0
        %v1425 = vsel %vm904, %v1411, 0
        %v1428 = vsel %vm904, %v1412, 0
        %1430 = vmatprep.subr.mxu0 0.0
        %1431 = vmatpush1.msra.mxu0 %v1407
        %1432 = vmatprep.subr.mxu0 0.0
        %1433 = vmatpush1.msra.mxu0 0.0
        %1434 = vmatprep.subr.mxu0 0.0
        %1435 = vmatpush1.msra.mxu0 0.0
        %1436 = vmatprep.subr.mxu0 0.0
        %1437 = vmatpush1.msra.mxu0 0.0
        %1438 = vmatprep.subr.mxu0 0.0
        %1439 = vmatpush1.msra.mxu0 0.0
        %1440 = vmatprep.subr.mxu0 0.0
        %1441 = vmatpush1.msra.mxu0 0.0
        %1442 = vmatprep.subr.mxu0 0.0
        %1443 = vmatpush1.msra.mxu0 0.0
        %1444 = vmatprep.subr.mxu0 0.0
        %1445 = vmatpush1.msra.mxu0 0.0
        %1446 = vmatprep.subr.mxu0 0.0
        %1447 = vmatpush1.msra.mxu0 0.0
        %1448 = vmatprep.subr.mxu0 0.0
        %1449 = vmatpush1.msra.mxu0 0.0
        %1450 = vmatprep.subr.mxu0 0.0
        %1451 = vmatpush1.msra.mxu0 0.0
        %1452 = vmatprep.subr.mxu0 0.0
        %1453 = vmatpush1.msra.mxu0 0.0
        %1454 = vmatprep.subr.mxu0 0.0
        %1455 = vmatpush1.msra.mxu0 0.0
        %1456 = vmatprep.subr.mxu0 0.0
        %1457 = vmatpush1.msra.mxu0 0.0
        %1458 = vmatprep.subr.mxu0 0.0
        %1459 = vmatpush1.msra.mxu0 0.0
        %1460 = vmatprep.subr.mxu0 0.0
        %1461 = vmatpush1.msra.mxu0 0.0
        %1462 = vmatprep.subr.mxu0 0.0
        %1463 = vmatpush1.msra.mxu0 0.0
        %1464 = vmatprep.subr.mxu0 0.0
        %1465 = vmatpush1.msra.mxu0 0.0
        %1466 = vmatprep.subr.mxu0 0.0
        %1467 = vmatpush1.msra.mxu0 0.0
        %1468 = vmatprep.subr.mxu0 0.0
        %1469 = vmatpush1.msra.mxu0 0.0
        %1470 = vmatprep.subr.mxu0 0.0
        %1471 = vmatpush1.msra.mxu0 0.0
        %1472 = vmatprep.subr.mxu0 0.0
        %1473 = vmatpush1.msra.mxu0 0.0
        %1474 = vmatprep.subr.mxu0 0.0
        %1475 = vmatpush1.msra.mxu0 0.0
        %1476 = vmatprep.subr.mxu0 0.0
        %1477 = vmatpush1.msra.mxu0 0.0
        %1478 = vmatprep.subr.mxu0 0.0
        %1479 = vmatpush1.msra.mxu0 0.0
        %1480 = vmatprep.subr.mxu0 0.0
        %1481 = vmatpush1.msra.mxu0 0.0
        %1482 = vmatprep.subr.mxu0 0.0
        %1483 = vmatpush1.msra.mxu0 0.0
        %1484 = vmatprep.subr.mxu0 0.0
        %1485 = vmatpush1.msra.mxu0 0.0
        %1486 = vmatprep.subr.mxu0 0.0
        %1487 = vmatpush1.msra.mxu0 0.0
        %1488 = vmatprep.subr.mxu0 0.0
        %1489 = vmatpush1.msra.mxu0 0.0
        %1490 = vmatprep.subr.mxu0 0.0
        %1491 = vmatpush1.msra.mxu0 0.0
        %1492 = vmatprep.subr.mxu0 0.0
        %1493 = vmatpush1.msra.mxu0 0.0
        %1494 = vmatprep.mubr.f32.mxu0 0.0
        %1495 = vmatmul.mubr.f32.gmra.mrb[0].mxu0 %v1419
        %v1496 = vpop.f32.mrb[0].mxu0
        %v1497 = vadd.f32 %v1414, %v1496
        %v1498 = vpop.f32.mrb[0].mxu0
        %1499 = vmatprep.mubr.f32.mxu0 0.0
        %1500 = vmatmul.mubr.f32.gmra.mrb[0].mxu0 %v1422
        %v1501 = vpop.f32.mrb[0].mxu0
        %v1502 = vadd.f32 %v1415, %v1501
        %v1503 = vpop.f32.mrb[0].mxu0
        %1504 = vmatprep.mubr.f32.mxu0 0.0
        %1505 = vmatmul.mubr.f32.gmra.mrb[0].mxu0 %v1425
        %v1506 = vpop.f32.mrb[0].mxu0
        %v1507 = vadd.f32 %v1416, %v1506
        %v1508 = vpop.f32.mrb[0].mxu0
        %1509 = vmatprep.mubr.f32.mxu0 0.0
        %1510 = vmatmul.mubr.f32.gmra.mrb[0].mxu0 %v1428
        %v1511 = vpop.f32.mrb[0].mxu0
        %v1512 = vadd.f32 %v1417, %v1511
        %v1513 = vpop.f32.mrb[0].mxu0
        %1514 = vdwg.mxu0
        %v1515 = vmul.f32 %v1497, 0.5
        %v1516 = vmul.f32 %v1502, 0.5
        %v1517 = vmul.f32 %v1507, 0.5
        %v1518 = vmul.f32 %v1512, 0.5
        %v1519 = vmul.f32 %v1497, 0.044715
        %v1520 = vmul.f32 %v1502, 0.044715
        %v1521 = vmul.f32 %v1507, 0.044715
        %v1522 = vmul.f32 %v1512, 0.044715
        %v1523 = vmul.f32 %v1519, %v1497
        %v1524 = vmul.f32 %v1520, %v1502
        %v1525 = vmul.f32 %v1521, %v1507
        %v1526 = vmul.f32 %v1522, %v1512
        %v1527 = vmul.f32 %v1523, %v1497
        %v1528 = vmul.f32 %v1524, %v1502
        %v1529 = vmul.f32 %v1525, %v1507
        %v1530 = vmul.f32 %v1526, %v1512
        %v1531 = vadd.f32 %v1497, %v1527
        %v1532 = vadd.f32 %v1502, %v1528
        %v1533 = vadd.f32 %v1507, %v1529
        %v1534 = vadd.f32 %v1512, %v1530
        %v1535 = vmul.f32 %v1531, 0.7978846
        %v1536 = vmul.f32 %v1532, 0.7978846
        %v1537 = vmul.f32 %v1533, 0.7978846
        %v1538 = vmul.f32 %v1534, 0.7978846
        %v1539 = vtanh.pop %v1535
        %v1540 = vtanh.pop %v1536
        %v1541 = vtanh.pop %v1537
        %v1542 = vtanh.pop %v1538
        %v1543 = vadd.f32 %v1539, 1.0
        %v1544 = vadd.f32 %v1540, 1.0
        %v1545 = vadd.f32 %v1541, 1.0
        %v1546 = vadd.f32 %v1542, 1.0
        %v1547 = vmul.f32 %v1515, %v1543
        %v1548 = vmul.f32 %v1516, %v1544
        %v1549 = vmul.f32 %v1517, %v1545
        %v1550 = vmul.f32 %v1518, %v1546
        %s1551 = scalar_lea.vmem %s7, 8
        %v1552 = vld [vmem:[%s1551] sm:$0xff]
        %s1553 = scalar_lea.vmem %s8, 8
        %v1554 = vld [vmem:[%s1553] sm:$0xff]
        %v1556 = vsel %vm823, %v1552, 0
        %1558 = vmatprep.subr.mxu0 0.0
        %1559 = vmatpush1.msra.mxu0 %v1547
        %1560 = vmatprep.subr.mxu0 0.0
        %1561 = vmatpush1.msra.mxu0 %v1548
        %1562 = vmatprep.subr.mxu0 0.0
        %1563 = vmatpush1.msra.mxu0 %v1549
        %1564 = vmatprep.subr.mxu0 0.0
        %1565 = vmatpush1.msra.mxu0 %v1550
        %1566 = vmatprep.subr.mxu0 0.0
        %1567 = vmatpush1.msra.mxu0 0.0
        %1568 = vmatprep.subr.mxu0 0.0
        %1569 = vmatpush1.msra.mxu0 0.0
        %1570 = vmatprep.subr.mxu0 0.0
        %1571 = vmatpush1.msra.mxu0 0.0
        %1572 = vmatprep.subr.mxu0 0.0
        %1573 = vmatpush1.msra.mxu0 0.0
        %1574 = vmatprep.subr.mxu0 0.0
        %1575 = vmatpush1.msra.mxu0 0.0
        %1576 = vmatprep.subr.mxu0 0.0
        %1577 = vmatpush1.msra.mxu0 0.0
        %1578 = vmatprep.subr.mxu0 0.0
        %1579 = vmatpush1.msra.mxu0 0.0
        %1580 = vmatprep.subr.mxu0 0.0
        %1581 = vmatpush1.msra.mxu0 0.0
        %1582 = vmatprep.subr.mxu0 0.0
        %1583 = vmatpush1.msra.mxu0 0.0
        %1584 = vmatprep.subr.mxu0 0.0
        %1585 = vmatpush1.msra.mxu0 0.0
        %1586 = vmatprep.subr.mxu0 0.0
        %1587 = vmatpush1.msra.mxu0 0.0
        %1588 = vmatprep.subr.mxu0 0.0
        %1589 = vmatpush1.msra.mxu0 0.0
        %1590 = vmatprep.subr.mxu0 0.0
        %1591 = vmatpush1.msra.mxu0 0.0
        %1592 = vmatprep.subr.mxu0 0.0
        %1593 = vmatpush1.msra.mxu0 0.0
        %1594 = vmatprep.subr.mxu0 0.0
        %1595 = vmatpush1.msra.mxu0 0.0
        %1596 = vmatprep.subr.mxu0 0.0
        %1597 = vmatpush1.msra.mxu0 0.0
        %1598 = vmatprep.subr.mxu0 0.0
        %1599 = vmatpush1.msra.mxu0 0.0
        %1600 = vmatprep.subr.mxu0 0.0
        %1601 = vmatpush1.msra.mxu0 0.0
        %1602 = vmatprep.subr.mxu0 0.0
        %1603 = vmatpush1.msra.mxu0 0.0
        %1604 = vmatprep.subr.mxu0 0.0
        %1605 = vmatpush1.msra.mxu0 0.0
        %1606 = vmatprep.subr.mxu0 0.0
        %1607 = vmatpush1.msra.mxu0 0.0
        %1608 = vmatprep.subr.mxu0 0.0
        %1609 = vmatpush1.msra.mxu0 0.0
        %1610 = vmatprep.subr.mxu0 0.0
        %1611 = vmatpush1.msra.mxu0 0.0
        %1612 = vmatprep.subr.mxu0 0.0
        %1613 = vmatpush1.msra.mxu0 0.0
        %1614 = vmatprep.subr.mxu0 0.0
        %1615 = vmatpush1.msra.mxu0 0.0
        %1616 = vmatprep.subr.mxu0 0.0
        %1617 = vmatpush1.msra.mxu0 0.0
        %1618 = vmatprep.subr.mxu0 0.0
        %1619 = vmatpush1.msra.mxu0 0.0
        %1620 = vmatprep.subr.mxu0 0.0
        %1621 = vmatpush1.msra.mxu0 0.0
        %1622 = vmatprep.mubr.f32.mxu0 0.0
        %1623 = vmatmul.mubr.f32.gmra.mrb[0].mxu0 %v1556
        %v1624 = vpop.f32.mrb[0].mxu0
        %v1625 = vadd.f32 %v1554, %v1624
        %v1626 = vpop.f32.mrb[0].mxu0
        %1627 = vdwg.mxu0
        %v1628 = vadd.f32 %v1376, %v1625
        %s1629 = scalar_lea.vmem [#allocation10], 1
        %v1630 = vld [vmem:[%s1629] sm:$0x1]
        %s1631 = scalar_lea.vmem [#allocation11], 1
        %v1632 = vld [vmem:[%s1631] sm:$0x1]
        %1633 = vadd.xlane.f32.xlu0 %v1628
        %v1634 = vpop.xlane.xlu0 %1633
        %v1635 = vmul.f32 %v1628, %v1628
        %1636 = vadd.xlane.f32.xlu0 %v1635
        %v1637 = vpop.xlane.xlu0 %1636
        %v1638 = vmul.f32 %v1634, 0.03125
        %v1639 = vmul.f32 %v1637, 0.03125
        %v1640 = vmul.f32 %v1638, %v1638
        %v1641 = vsub.f32 %v1639, %v1640
        %v1642 = vsub.f32 %v1628, %v1638
        %v1643 = vadd.f32 %v1641, 1e-05
        %v1644 = vrsqrt.pop %v1643
        %v1645 = vmul.f32 %v1642, %v1644
        %v1647 = vlaneseq
        %v1648 = vshrl.u32 %v1647, 7
        %v1649 = vsub.s32 0, %v1648
        %v1650 = vrot.slane %v1630, %v1649
        %v1652 = vmul.f32 %v1645, %v1650
        %v1654 = vlaneseq
        %v1655 = vshrl.u32 %v1654, 7
        %v1656 = vsub.s32 0, %v1655
        %v1657 = vrot.slane %v1632, %v1656
        %v1659 = vadd.f32 %v1652, %v1657
        %v1660 = vpack.c.bf16 %v1659, %v1659
        %s1661 = scalar_lea.vmem [#allocation13], 64
        %v1662 = vld [vmem:[%s1661] sm:$0xf]
        %v1663 = vld [vmem:[%s1661 + $0x4] sm:$0xf]
        %v1664 = vld [vmem:[%s1661 + $0x8] sm:$0xf]
        %v1665 = vld [vmem:[%s1661 + $0xc] sm:$0xf]
        %v1666 = vld [vmem:[%s1661 + $0x10] sm:$0xf]
        %v1667 = vld [vmem:[%s1661 + $0x14] sm:$0xf]
        %v1668 = vld [vmem:[%s1661 + $0x18] sm:$0xf]
        %v1669 = vld [vmem:[%s1661 + $0x1c] sm:$0xf]
        %v1670 = vld [vmem:[%s1661 + $0x20] sm:$0xf]
        %v1671 = vld [vmem:[%s1661 + $0x24] sm:$0xf]
        %v1672 = vld [vmem:[%s1661 + $0x28] sm:$0xf]
        %v1673 = vld [vmem:[%s1661 + $0x2c] sm:$0xf]
        %v1674 = vld [vmem:[%s1661 + $0x30] sm:$0xf]
        %v1675 = vld [vmem:[%s1661 + $0x34] sm:$0xf]
        %v1676 = vld [vmem:[%s1661 + $0x38] sm:$0xf]
        %v1677 = vld [vmem:[%s1661 + $0x3c] sm:$0xf]
        %s1678 = scalar_lea.vmem [#allocation14], 1
        %v1679 = vld [vmem:[%s1678] sm:$0x1]
        %v1681 = vlaneseq
        %v1682 = vshrl.u32 %v1681, 7
        %v1683 = vsub.s32 0, %v1682
        %v1684 = vrot.slane %v1679, %v1683
        %v1702 = vunpack.c.l.b16 %v1662
        %v1703 = vunpack.c.l.b16 %v1663
        %v1704 = vunpack.c.l.b16 %v1664
        %v1705 = vunpack.c.l.b16 %v1665
        %v1706 = vunpack.c.l.b16 %v1666
        %v1707 = vunpack.c.l.b16 %v1667
        %v1708 = vunpack.c.l.b16 %v1668
        %v1709 = vunpack.c.l.b16 %v1669
        %v1710 = vunpack.c.l.b16 %v1670
        %v1711 = vunpack.c.l.b16 %v1671
        %v1712 = vunpack.c.l.b16 %v1672
        %v1713 = vunpack.c.l.b16 %v1673
        %v1714 = vunpack.c.l.b16 %v1674
        %v1715 = vunpack.c.l.b16 %v1675
        %v1716 = vunpack.c.l.b16 %v1676
        %v1717 = vunpack.c.l.b16 %v1677
        %v1718 = vpack.c.b16 %v1703, %v1702
        %v1719 = vpack.c.b16 %v1705, %v1704
        %v1720 = vpack.c.b16 %v1707, %v1706
        %v1721 = vpack.c.b16 %v1709, %v1708
        %v1722 = vpack.c.b16 %v1711, %v1710
        %v1723 = vpack.c.b16 %v1713, %v1712
        %v1724 = vpack.c.b16 %v1715, %v1714
        %v1725 = vpack.c.b16 %v1717, %v1716
        %1734 = vmatprep.subr.bf16.mxu0 0
        %1735 = vmatpush1.bf16.msra.mxu0 %v1718
        %1736 = vmatprep.subr.bf16.mxu0 0
        %1737 = vmatpush1.bf16.msra.mxu0 %v1719
        %1738 = vmatprep.subr.bf16.mxu0 0
        %1739 = vmatpush1.bf16.msra.mxu0 %v1720
        %1740 = vmatprep.subr.bf16.mxu0 0
        %1741 = vmatpush1.bf16.msra.mxu0 %v1721
        %1742 = vmatprep.subr.bf16.mxu0 0
        %1743 = vmatpush1.bf16.msra.mxu0 %v1722
        %1744 = vmatprep.subr.bf16.mxu0 0
        %1745 = vmatpush1.bf16.msra.mxu0 %v1723
        %1746 = vmatprep.subr.bf16.mxu0 0
        %1747 = vmatpush1.bf16.msra.mxu0 %v1724
        %1748 = vmatprep.subr.bf16.mxu0 0
        %1749 = vmatpush1.bf16.msra.mxu0 %v1725
        %1750 = vmatprep.subr.bf16.mxu0 0
        %1751 = vmatpush1.bf16.msra.mxu0 0
        %1752 = vmatprep.subr.bf16.mxu0 0
        %1753 = vmatpush1.bf16.msra.mxu0 0
        %1754 = vmatprep.subr.bf16.mxu0 0
        %1755 = vmatpush1.bf16.msra.mxu0 0
        %1756 = vmatprep.subr.bf16.mxu0 0
        %1757 = vmatpush1.bf16.msra.mxu0 0
        %1758 = vmatprep.subr.bf16.mxu0 0
        %1759 = vmatpush1.bf16.msra.mxu0 0
        %1760 = vmatprep.subr.bf16.mxu0 0
        %1761 = vmatpush1.bf16.msra.mxu0 0
        %1762 = vmatprep.subr.bf16.mxu0 0
        %1763 = vmatpush1.bf16.msra.mxu0 0
        %1764 = vmatprep.subr.bf16.mxu0 0
        %1765 = vmatpush1.bf16.msra.mxu0 0
        %1766 = vmatprep.mubr.bf16.mxu0 0
        %1767 = vmatmul.mubr.bf16.gmra.mrb[0].mxu0 %v1660
        %v1768 = vpop.f32.mrb[0].mxu0
        %v1769 = vadd.f32 %v1684, %v1768
        %v1770 = vpop.f32.mrb[0].mxu0
        %v1771 = vpop.f32.mrb[0].mxu0
        %v1772 = vpop.f32.mrb[0].mxu0
        %1773 = vdwg.mxu0
        %v1774 = vmul.f32 %v1769, 0.5
        %v1775 = vmul.f32 %v1769, 0.044715
        %v1776 = vmul.f32 %v1775, %v1769
        %v1777 = vmul.f32 %v1776, %v1769
        %v1778 = vadd.f32 %v1769, %v1777
        %v1779 = vmul.f32 %v1778, 0.7978846
        %v1780 = vtanh.pop %v1779
        %v1781 = vadd.f32 %v1780, 1.0
        %v1782 = vmul.f32 %v1774, %v1781
        %v1783 = vpack.c.bf16 %v1782, %v1782
        %s1784 = scalar_lea.vmem [#allocation16], 64
        %v1785 = vld [vmem:[%s1784] sm:$0xf]
        %v1786 = vld [vmem:[%s1784 + $0x4] sm:$0xf]
        %v1787 = vld [vmem:[%s1784 + $0x8] sm:$0xf]
        %v1788 = vld [vmem:[%s1784 + $0xc] sm:$0xf]
        %v1789 = vld [vmem:[%s1784 + $0x10] sm:$0xf]
        %v1790 = vld [vmem:[%s1784 + $0x14] sm:$0xf]
        %v1791 = vld [vmem:[%s1784 + $0x18] sm:$0xf]
        %v1792 = vld [vmem:[%s1784 + $0x1c] sm:$0xf]
        %v1793 = vld [vmem:[%s1784 + $0x20] sm:$0xf]
        %v1794 = vld [vmem:[%s1784 + $0x24] sm:$0xf]
        %v1795 = vld [vmem:[%s1784 + $0x28] sm:$0xf]
        %v1796 = vld [vmem:[%s1784 + $0x2c] sm:$0xf]
        %v1797 = vld [vmem:[%s1784 + $0x30] sm:$0xf]
        %v1798 = vld [vmem:[%s1784 + $0x34] sm:$0xf]
        %v1799 = vld [vmem:[%s1784 + $0x38] sm:$0xf]
        %v1800 = vld [vmem:[%s1784 + $0x3c] sm:$0xf]
        %s1801 = scalar_lea.vmem [#allocation17], 1
        %v1802 = vld [vmem:[%s1801] sm:$0x1]
        %v1804 = vlaneseq
        %v1805 = vshrl.u32 %v1804, 7
        %v1806 = vsub.s32 0, %v1805
        %v1807 = vrot.slane %v1802, %v1806
        %v1825 = vunpack.c.l.b16 %v1785
        %v1826 = vunpack.c.l.b16 %v1786
        %v1827 = vunpack.c.l.b16 %v1787
        %v1828 = vunpack.c.l.b16 %v1788
        %v1829 = vunpack.c.l.b16 %v1789
        %v1830 = vunpack.c.l.b16 %v1790
        %v1831 = vunpack.c.l.b16 %v1791
        %v1832 = vunpack.c.l.b16 %v1792
        %v1833 = vunpack.c.l.b16 %v1793
        %v1834 = vunpack.c.l.b16 %v1794
        %v1835 = vunpack.c.l.b16 %v1795
        %v1836 = vunpack.c.l.b16 %v1796
        %v1837 = vunpack.c.l.b16 %v1797
        %v1838 = vunpack.c.l.b16 %v1798
        %v1839 = vunpack.c.l.b16 %v1799
        %v1840 = vunpack.c.l.b16 %v1800
        %v1841 = vpack.c.b16 %v1826, %v1825
        %v1842 = vpack.c.b16 %v1828, %v1827
        %v1843 = vpack.c.b16 %v1830, %v1829
        %v1844 = vpack.c.b16 %v1832, %v1831
        %v1845 = vpack.c.b16 %v1834, %v1833
        %v1846 = vpack.c.b16 %v1836, %v1835
        %v1847 = vpack.c.b16 %v1838, %v1837
        %v1848 = vpack.c.b16 %v1840, %v1839
        %1857 = vmatprep.subr.bf16.mxu0 0
        %1858 = vmatpush1.bf16.msra.mxu0 %v1841
        %1859 = vmatprep.subr.bf16.mxu0 0
        %1860 = vmatpush1.bf16.msra.mxu0 %v1842
        %1861 = vmatprep.subr.bf16.mxu0 0
        %1862 = vmatpush1.bf16.msra.mxu0 %v1843
        %1863 = vmatprep.subr.bf16.mxu0 0
        %1864 = vmatpush1.bf16.msra.mxu0 %v1844
        %1865 = vmatprep.subr.bf16.mxu0 0
        %1866 = vmatpush1.bf16.msra.mxu0 %v1845
        %1867 = vmatprep.subr.bf16.mxu0 0
        %1868 = vmatpush1.bf16.msra.mxu0 %v1846
        %1869 = vmatprep.subr.bf16.mxu0 0
        %1870 = vmatpush1.bf16.msra.mxu0 %v1847
        %1871 = vmatprep.subr.bf16.mxu0 0
        %1872 = vmatpush1.bf16.msra.mxu0 %v1848
        %1873 = vmatprep.subr.bf16.mxu0 0
        %1874 = vmatpush1.bf16.msra.mxu0 0
        %1875 = vmatprep.subr.bf16.mxu0 0
        %1876 = vmatpush1.bf16.msra.mxu0 0
        %1877 = vmatprep.subr.bf16.mxu0 0
        %1878 = vmatpush1.bf16.msra.mxu0 0
        %1879 = vmatprep.subr.bf16.mxu0 0
        %1880 = vmatpush1.bf16.msra.mxu0 0
        %1881 = vmatprep.subr.bf16.mxu0 0
        %1882 = vmatpush1.bf16.msra.mxu0 0
        %1883 = vmatprep.subr.bf16.mxu0 0
        %1884 = vmatpush1.bf16.msra.mxu0 0
        %1885 = vmatprep.subr.bf16.mxu0 0
        %1886 = vmatpush1.bf16.msra.mxu0 0
        %1887 = vmatprep.subr.bf16.mxu0 0
        %1888 = vmatpush1.bf16.msra.mxu0 0
        %1889 = vmatprep.mubr.bf16.mxu0 0
        %1890 = vmatmul.mubr.bf16.gmra.mrb[0].mxu0 %v1783
        %v1891 = vpop.f32.mrb[0].mxu0
        %v1892 = vadd.f32 %v1807, %v1891
        %v1893 = vpop.f32.mrb[0].mxu0
        %v1894 = vpop.f32.mrb[0].mxu0
        %v1895 = vpop.f32.mrb[0].mxu0
        %1896 = vdwg.mxu0
        %v1897 = vadd.f32 %v1628, %v1892
        %s1898 = scalar_lea.vmem %s3, 2
        %v1899 = vld [vmem:[%s1898] sm:$0x1]
        %s1900 = scalar_lea.vmem %s4, 2
        %v1901 = vld [vmem:[%s1900] sm:$0x1]
        %v1903 = vlaneseq
        %v1904 = vshrl.u32 %v1903, 7
        %v1905 = vsub.s32 0, %v1904
        %v1906 = vrot.slane %v1899, %v1905
        %v1908 = vmul.f32 %v1393, %v1906
        %v1910 = vlaneseq
        %v1911 = vshrl.u32 %v1910, 7
        %v1912 = vsub.s32 0, %v1911
        %v1913 = vrot.slane %v1901, %v1912
        %v1915 = vadd.f32 %v1908, %v1913
        %s1916 = scalar_lea.vmem %s5, 64
        %v1917 = vld [vmem:[%s1916] sm:$0xff]
        %v1918 = vld [vmem:[%s1916 + $0x8] sm:$0xff]
        %v1919 = vld [vmem:[%s1916 + $0x10] sm:$0xff]
        %v1920 = vld [vmem:[%s1916 + $0x18] sm:$0xff]
        %s1921 = scalar_lea.vmem [#allocation8], 64
        %v1922 = vld [vmem:[%s1921] sm:$0xff]
        %v1923 = vld [vmem:[%s1921 + $0x8] sm:$0xff]
        %v1924 = vld [vmem:[%s1921 + $0x10] sm:$0xff]
        %v1925 = vld [vmem:[%s1921 + $0x18] sm:$0xff]
        %v1927 = vsel %vm904, %v1917, 0
        %v1930 = vsel %vm904, %v1918, 0
        %v1933 = vsel %vm904, %v1919, 0
        %v1936 = vsel %vm904, %v1920, 0
        %1938 = vmatprep.subr.mxu0 0.0
        %1939 = vmatpush1.msra.mxu0 %v1915
        %1940 = vmatprep.subr.mxu0 0.0
        %1941 = vmatpush1.msra.mxu0 0.0
        %1942 = vmatprep.subr.mxu0 0.0
        %1943 = vmatpush1.msra.mxu0 0.0
        %1944 = vmatprep.subr.mxu0 0.0
        %1945 = vmatpush1.msra.mxu0 0.0
        %1946 = vmatprep.subr.mxu0 0.0
        %1947 = vmatpush1.msra.mxu0 0.0
        %1948 = vmatprep.subr.mxu0 0.0
        %1949 = vmatpush1.msra.mxu0 0.0
        %1950 = vmatprep.subr.mxu0 0.0
        %1951 = vmatpush1.msra.mxu0 0.0
        %1952 = vmatprep.subr.mxu0 0.0
        %1953 = vmatpush1.msra.mxu0 0.0
        %1954 = vmatprep.subr.mxu0 0.0
        %1955 = vmatpush1.msra.mxu0 0.0
        %1956 = vmatprep.subr.mxu0 0.0
        %1957 = vmatpush1.msra.mxu0 0.0
        %1958 = vmatprep.subr.mxu0 0.0
        %1959 = vmatpush1.msra.mxu0 0.0
        %1960 = vmatprep.subr.mxu0 0.0
        %1961 = vmatpush1.msra.mxu0 0.0
        %1962 = vmatprep.subr.mxu0 0.0
        %1963 = vmatpush1.msra.mxu0 0.0
        %1964 = vmatprep.subr.mxu0 0.0
        %1965 = vmatpush1.msra.mxu0 0.0
        %1966 = vmatprep.subr.mxu0 0.0
        %1967 = vmatpush1.msra.mxu0 0.0
        %1968 = vmatprep.subr.mxu0 0.0
        %1969 = vmatpush1.msra.mxu0 0.0
        %1970 = vmatprep.subr.mxu0 0.0
        %1971 = vmatpush1.msra.mxu0 0.0
        %1972 = vmatprep.subr.mxu0 0.0
        %1973 = vmatpush1.msra.mxu0 0.0
        %1974 = vmatprep.subr.mxu0 0.0
        %1975 = vmatpush1.msra.mxu0 0.0
        %1976 = vmatprep.subr.mxu0 0.0
        %1977 = vmatpush1.msra.mxu0 0.0
        %1978 = vmatprep.subr.mxu0 0.0
        %1979 = vmatpush1.msra.mxu0 0.0
        %1980 = vmatprep.subr.mxu0 0.0
        %1981 = vmatpush1.msra.mxu0 0.0
        %1982 = vmatprep.subr.mxu0 0.0
        %1983 = vmatpush1.msra.mxu0 0.0
        %1984 = vmatprep.subr.mxu0 0.0
        %1985 = vmatpush1.msra.mxu0 0.0
        %1986 = vmatprep.subr.mxu0 0.0
        %1987 = vmatpush1.msra.mxu0 0.0
        %1988 = vmatprep.subr.mxu0 0.0
        %1989 = vmatpush1.msra.mxu0 0.0
        %1990 = vmatprep.subr.mxu0 0.0
        %1991 = vmatpush1.msra.mxu0 0.0
        %1992 = vmatprep.subr.mxu0 0.0
        %1993 = vmatpush1.msra.mxu0 0.0
        %1994 = vmatprep.subr.mxu0 0.0
        %1995 = vmatpush1.msra.mxu0 0.0
        %1996 = vmatprep.subr.mxu0 0.0
        %1997 = vmatpush1.msra.mxu0 0.0
        %1998 = vmatprep.subr.mxu0 0.0
        %1999 = vmatpush1.msra.mxu0 0.0
        %2000 = vmatprep.subr.mxu0 0.0
        %2001 = vmatpush1.msra.mxu0 0.0
        %2002 = vmatprep.mubr.f32.mxu0 0.0
        %2003 = vmatmul.mubr.f32.gmra.mrb[0].mxu0 %v1927
        %v2004 = vpop.f32.mrb[0].mxu0
        %v2005 = vadd.f32 %v1922, %v2004
        %v2006 = vpop.f32.mrb[0].mxu0
        %2007 = vmatprep.mubr.f32.mxu0 0.0
        %2008 = vmatmul.mubr.f32.gmra.mrb[0].mxu0 %v1930
        %v2009 = vpop.f32.mrb[0].mxu0
        %v2010 = vadd.f32 %v1923, %v2009
        %v2011 = vpop.f32.mrb[0].mxu0
        %2012 = vmatprep.mubr.f32.mxu0 0.0
        %2013 = vmatmul.mubr.f32.gmra.mrb[0].mxu0 %v1933
        %v2014 = vpop.f32.mrb[0].mxu0
        %v2015 = vadd.f32 %v1924, %v2014
        %v2016 = vpop.f32.mrb[0].mxu0
        %2017 = vmatprep.mubr.f32.mxu0 0.0
        %2018 = vmatmul.mubr.f32.gmra.mrb[0].mxu0 %v1936
        %v2019 = vpop.f32.mrb[0].mxu0
        %v2020 = vadd.f32 %v1925, %v2019
        %v2021 = vpop.f32.mrb[0].mxu0
        %2022 = vdwg.mxu0
        %v2023 = vmul.f32 %v2005, 0.5
        %v2024 = vmul.f32 %v2010, 0.5
        %v2025 = vmul.f32 %v2015, 0.5
        %v2026 = vmul.f32 %v2020, 0.5
        %v2027 = vmul.f32 %v2005, 0.044715
        %v2028 = vmul.f32 %v2010, 0.044715
        %v2029 = vmul.f32 %v2015, 0.044715
        %v2030 = vmul.f32 %v2020, 0.044715
        %v2031 = vmul.f32 %v2027, %v2005
        %v2032 = vmul.f32 %v2028, %v2010
        %v2033 = vmul.f32 %v2029, %v2015
        %v2034 = vmul.f32 %v2030, %v2020
        %v2035 = vmul.f32 %v2031, %v2005
        %v2036 = vmul.f32 %v2032, %v2010
        %v2037 = vmul.f32 %v2033, %v2015
        %v2038 = vmul.f32 %v2034, %v2020
        %v2039 = vadd.f32 %v2005, %v2035
        %v2040 = vadd.f32 %v2010, %v2036
        %v2041 = vadd.f32 %v2015, %v2037
        %v2042 = vadd.f32 %v2020, %v2038
        %v2043 = vmul.f32 %v2039, 0.7978846
        %v2044 = vmul.f32 %v2040, 0.7978846
        %v2045 = vmul.f32 %v2041, 0.7978846
        %v2046 = vmul.f32 %v2042, 0.7978846
        %v2047 = vtanh.pop %v2043
        %v2048 = vtanh.pop %v2044
        %v2049 = vtanh.pop %v2045
        %v2050 = vtanh.pop %v2046
        %v2051 = vadd.f32 %v2047, 1.0
        %v2052 = vadd.f32 %v2048, 1.0
        %v2053 = vadd.f32 %v2049, 1.0
        %v2054 = vadd.f32 %v2050, 1.0
        %v2055 = vmul.f32 %v2023, %v2051
        %v2056 = vmul.f32 %v2024, %v2052
        %v2057 = vmul.f32 %v2025, %v2053
        %v2058 = vmul.f32 %v2026, %v2054
        %s2059 = scalar_lea.vmem %s7, 16
        %v2060 = vld [vmem:[%s2059] sm:$0xff]
        %s2061 = scalar_lea.vmem %s8, 16
        %v2062 = vld [vmem:[%s2061] sm:$0xff]
        %v2064 = vsel %vm823, %v2060, 0
        %2066 = vmatprep.subr.mxu0 0.0
        %2067 = vmatpush1.msra.mxu0 %v2055
        %2068 = vmatprep.subr.mxu0 0.0
        %2069 = vmatpush1.msra.mxu0 %v2056
        %2070 = vmatprep.subr.mxu0 0.0
        %2071 = vmatpush1.msra.mxu0 %v2057
        %2072 = vmatprep.subr.mxu0 0.0
        %2073 = vmatpush1.msra.mxu0 %v2058
        %2074 = vmatprep.subr.mxu0 0.0
        %2075 = vmatpush1.msra.mxu0 0.0
        %2076 = vmatprep.subr.mxu0 0.0
        %2077 = vmatpush1.msra.mxu0 0.0
        %2078 = vmatprep.subr.mxu0 0.0
        %2079 = vmatpush1.msra.mxu0 0.0
        %2080 = vmatprep.subr.mxu0 0.0
        %2081 = vmatpush1.msra.mxu0 0.0
        %2082 = vmatprep.subr.mxu0 0.0
        %2083 = vmatpush1.msra.mxu0 0.0
        %2084 = vmatprep.subr.mxu0 0.0
        %2085 = vmatpush1.msra.mxu0 0.0
        %2086 = vmatprep.subr.mxu0 0.0
        %2087 = vmatpush1.msra.mxu0 0.0
        %2088 = vmatprep.subr.mxu0 0.0
        %2089 = vmatpush1.msra.mxu0 0.0
        %2090 = vmatprep.subr.mxu0 0.0
        %2091 = vmatpush1.msra.mxu0 0.0
        %2092 = vmatprep.subr.mxu0 0.0
        %2093 = vmatpush1.msra.mxu0 0.0
        %2094 = vmatprep.subr.mxu0 0.0
        %2095 = vmatpush1.msra.mxu0 0.0
        %2096 = vmatprep.subr.mxu0 0.0
        %2097 = vmatpush1.msra.mxu0 0.0
        %2098 = vmatprep.subr.mxu0 0.0
        %2099 = vmatpush1.msra.mxu0 0.0
        %2100 = vmatprep.subr.mxu0 0.0
        %2101 = vmatpush1.msra.mxu0 0.0
        %2102 = vmatprep.subr.mxu0 0.0
        %2103 = vmatpush1.msra.mxu0 0.0
        %2104 = vmatprep.subr.mxu0 0.0
        %2105 = vmatpush1.msra.mxu0 0.0
        %2106 = vmatprep.subr.mxu0 0.0
        %2107 = vmatpush1.msra.mxu0 0.0
        %2108 = vmatprep.subr.mxu0 0.0
        %2109 = vmatpush1.msra.mxu0 0.0
        %2110 = vmatprep.subr.mxu0 0.0
        %2111 = vmatpush1.msra.mxu0 0.0
        %2112 = vmatprep.subr.mxu0 0.0
        %2113 = vmatpush1.msra.mxu0 0.0
        %2114 = vmatprep.subr.mxu0 0.0
        %2115 = vmatpush1.msra.mxu0 0.0
        %2116 = vmatprep.subr.mxu0 0.0
        %2117 = vmatpush1.msra.mxu0 0.0
        %2118 = vmatprep.subr.mxu0 0.0
        %2119 = vmatpush1.msra.mxu0 0.0
        %2120 = vmatprep.subr.mxu0 0.0
        %2121 = vmatpush1.msra.mxu0 0.0
        %2122 = vmatprep.subr.mxu0 0.0
        %2123 = vmatpush1.msra.mxu0 0.0
        %2124 = vmatprep.subr.mxu0 0.0
        %2125 = vmatpush1.msra.mxu0 0.0
        %2126 = vmatprep.subr.mxu0 0.0
        %2127 = vmatpush1.msra.mxu0 0.0
        %2128 = vmatprep.subr.mxu0 0.0
        %2129 = vmatpush1.msra.mxu0 0.0
        %2130 = vmatprep.mubr.f32.mxu0 0.0
        %2131 = vmatmul.mubr.f32.gmra.mrb[0].mxu0 %v2064
        %v2132 = vpop.f32.mrb[0].mxu0
        %v2133 = vadd.f32 %v2062, %v2132
        %v2134 = vpop.f32.mrb[0].mxu0
        %2135 = vdwg.mxu0
        %v2136 = vadd.f32 %v1376, %v2133
        %s2137 = scalar_lea.vmem [#allocation10], 2
        %v2138 = vld [vmem:[%s2137] sm:$0x1]
        %s2139 = scalar_lea.vmem [#allocation11], 2
        %v2140 = vld [vmem:[%s2139] sm:$0x1]
        %2141 = vadd.xlane.f32.xlu0 %v2136
        %v2142 = vpop.xlane.xlu0 %2141
        %v2143 = vmul.f32 %v2136, %v2136
        %2144 = vadd.xlane.f32.xlu0 %v2143
        %v2145 = vpop.xlane.xlu0 %2144
        %v2146 = vmul.f32 %v2142, 0.03125
        %v2147 = vmul.f32 %v2145, 0.03125
        %v2148 = vmul.f32 %v2146, %v2146
        %v2149 = vsub.f32 %v2147, %v2148
        %v2150 = vsub.f32 %v2136, %v2146
        %v2151 = vadd.f32 %v2149, 1e-05
        %v2152 = vrsqrt.pop %v2151
        %v2153 = vmul.f32 %v2150, %v2152
        %v2155 = vlaneseq
        %v2156 = vshrl.u32 %v2155, 7
        %v2157 = vsub.s32 0, %v2156
        %v2158 = vrot.slane %v2138, %v2157
        %v2160 = vmul.f32 %v2153, %v2158
        %v2162 = vlaneseq
        %v2163 = vshrl.u32 %v2162, 7
        %v2164 = vsub.s32 0, %v2163
        %v2165 = vrot.slane %v2140, %v2164
        %v2167 = vadd.f32 %v2160, %v2165
        %v2168 = vpack.c.bf16 %v2167, %v2167
        %s2169 = scalar_lea.vmem [#allocation13], 128
        %v2170 = vld [vmem:[%s2169] sm:$0xf]
        %v2171 = vld [vmem:[%s2169 + $0x4] sm:$0xf]
        %v2172 = vld [vmem:[%s2169 + $0x8] sm:$0xf]
        %v2173 = vld [vmem:[%s2169 + $0xc] sm:$0xf]
        %v2174 = vld [vmem:[%s2169 + $0x10] sm:$0xf]
        %v2175 = vld [vmem:[%s2169 + $0x14] sm:$0xf]
        %v2176 = vld [vmem:[%s2169 + $0x18] sm:$0xf]
        %v2177 = vld [vmem:[%s2169 + $0x1c] sm:$0xf]
        %v2178 = vld [vmem:[%s2169 + $0x20] sm:$0xf]
        %v2179 = vld [vmem:[%s2169 + $0x24] sm:$0xf]
        %v2180 = vld [vmem:[%s2169 + $0x28] sm:$0xf]
        %v2181 = vld [vmem:[%s2169 + $0x2c] sm:$0xf]
        %v2182 = vld [vmem:[%s2169 + $0x30] sm:$0xf]
        %v2183 = vld [vmem:[%s2169 + $0x34] sm:$0xf]
        %v2184 = vld [vmem:[%s2169 + $0x38] sm:$0xf]
        %v2185 = vld [vmem:[%s2169 + $0x3c] sm:$0xf]
        %s2186 = scalar_lea.vmem [#allocation14], 2
        %v2187 = vld [vmem:[%s2186] sm:$0x1]
        %v2189 = vlaneseq
        %v2190 = vshrl.u32 %v2189, 7
        %v2191 = vsub.s32 0, %v2190
        %v2192 = vrot.slane %v2187, %v2191
        %v2210 = vunpack.c.l.b16 %v2170
        %v2211 = vunpack.c.l.b16 %v2171
        %v2212 = vunpack.c.l.b16 %v2172
        %v2213 = vunpack.c.l.b16 %v2173
        %v2214 = vunpack.c.l.b16 %v2174
        %v2215 = vunpack.c.l.b16 %v2175
        %v2216 = vunpack.c.l.b16 %v2176
        %v2217 = vunpack.c.l.b16 %v2177
        %v2218 = vunpack.c.l.b16 %v2178
        %v2219 = vunpack.c.l.b16 %v2179
        %v2220 = vunpack.c.l.b16 %v2180
        %v2221 = vunpack.c.l.b16 %v2181
        %v2222 = vunpack.c.l.b16 %v2182
        %v2223 = vunpack.c.l.b16 %v2183
        %v2224 = vunpack.c.l.b16 %v2184
        %v2225 = vunpack.c.l.b16 %v2185
        %v2226 = vpack.c.b16 %v2211, %v2210
        %v2227 = vpack.c.b16 %v2213, %v2212
        %v2228 = vpack.c.b16 %v2215, %v2214
        %v2229 = vpack.c.b16 %v2217, %v2216
        %v2230 = vpack.c.b16 %v2219, %v2218
        %v2231 = vpack.c.b16 %v2221, %v2220
        %v2232 = vpack.c.b16 %v2223, %v2222
        %v2233 = vpack.c.b16 %v2225, %v2224
        %2242 = vmatprep.subr.bf16.mxu0 0
        %2243 = vmatpush1.bf16.msra.mxu0 %v2226
        %2244 = vmatprep.subr.bf16.mxu0 0
        %2245 = vmatpush1.bf16.msra.mxu0 %v2227
        %2246 = vmatprep.subr.bf16.mxu0 0
        %2247 = vmatpush1.bf16.msra.mxu0 %v2228
        %2248 = vmatprep.subr.bf16.mxu0 0
        %2249 = vmatpush1.bf16.msra.mxu0 %v2229
        %2250 = vmatprep.subr.bf16.mxu0 0
        %2251 = vmatpush1.bf16.msra.mxu0 %v2230
        %2252 = vmatprep.subr.bf16.mxu0 0
        %2253 = vmatpush1.bf16.msra.mxu0 %v2231
        %2254 = vmatprep.subr.bf16.mxu0 0
        %2255 = vmatpush1.bf16.msra.mxu0 %v2232
        %2256 = vmatprep.subr.bf16.mxu0 0
        %2257 = vmatpush1.bf16.msra.mxu0 %v2233
        %2258 = vmatprep.subr.bf16.mxu0 0
        %2259 = vmatpush1.bf16.msra.mxu0 0
        %2260 = vmatprep.subr.bf16.mxu0 0
        %2261 = vmatpush1.bf16.msra.mxu0 0
        %2262 = vmatprep.subr.bf16.mxu0 0
        %2263 = vmatpush1.bf16.msra.mxu0 0
        %2264 = vmatprep.subr.bf16.mxu0 0
        %2265 = vmatpush1.bf16.msra.mxu0 0
        %2266 = vmatprep.subr.bf16.mxu0 0
        %2267 = vmatpush1.bf16.msra.mxu0 0
        %2268 = vmatprep.subr.bf16.mxu0 0
        %2269 = vmatpush1.bf16.msra.mxu0 0
        %2270 = vmatprep.subr.bf16.mxu0 0
        %2271 = vmatpush1.bf16.msra.mxu0 0
        %2272 = vmatprep.subr.bf16.mxu0 0
        %2273 = vmatpush1.bf16.msra.mxu0 0
        %2274 = vmatprep.mubr.bf16.mxu0 0
        %2275 = vmatmul.mubr.bf16.gmra.mrb[0].mxu0 %v2168
        %v2276 = vpop.f32.mrb[0].mxu0
        %v2277 = vadd.f32 %v2192, %v2276
        %v2278 = vpop.f32.mrb[0].mxu0
        %v2279 = vpop.f32.mrb[0].mxu0
        %v2280 = vpop.f32.mrb[0].mxu0
        %2281 = vdwg.mxu0
        %v2282 = vmul.f32 %v2277, 0.5
        %v2283 = vmul.f32 %v2277, 0.044715
        %v2284 = vmul.f32 %v2283, %v2277
        %v2285 = vmul.f32 %v2284, %v2277
        %v2286 = vadd.f32 %v2277, %v2285
        %v2287 = vmul.f32 %v2286, 0.7978846
        %v2288 = vtanh.pop %v2287
        %v2289 = vadd.f32 %v2288, 1.0
        %v2290 = vmul.f32 %v2282, %v2289
        %v2291 = vpack.c.bf16 %v2290, %v2290
        %s2292 = scalar_lea.vmem [#allocation16], 128
        %v2293 = vld [vmem:[%s2292] sm:$0xf]
        %v2294 = vld [vmem:[%s2292 + $0x4] sm:$0xf]
        %v2295 = vld [vmem:[%s2292 + $0x8] sm:$0xf]
        %v2296 = vld [vmem:[%s2292 + $0xc] sm:$0xf]
        %v2297 = vld [vmem:[%s2292 + $0x10] sm:$0xf]
        %v2298 = vld [vmem:[%s2292 + $0x14] sm:$0xf]
        %v2299 = vld [vmem:[%s2292 + $0x18] sm:$0xf]
        %v2300 = vld [vmem:[%s2292 + $0x1c] sm:$0xf]
        %v2301 = vld [vmem:[%s2292 + $0x20] sm:$0xf]
        %v2302 = vld [vmem:[%s2292 + $0x24] sm:$0xf]
        %v2303 = vld [vmem:[%s2292 + $0x28] sm:$0xf]
        %v2304 = vld [vmem:[%s2292 + $0x2c] sm:$0xf]
        %v2305 = vld [vmem:[%s2292 + $0x30] sm:$0xf]
        %v2306 = vld [vmem:[%s2292 + $0x34] sm:$0xf]
        %v2307 = vld [vmem:[%s2292 + $0x38] sm:$0xf]
        %v2308 = vld [vmem:[%s2292 + $0x3c] sm:$0xf]
        %s2309 = scalar_lea.vmem [#allocation17], 2
        %v2310 = vld [vmem:[%s2309] sm:$0x1]
        %v2312 = vlaneseq
        %v2313 = vshrl.u32 %v2312, 7
        %v2314 = vsub.s32 0, %v2313
        %v2315 = vrot.slane %v2310, %v2314
        %v2333 = vunpack.c.l.b16 %v2293
        %v2334 = vunpack.c.l.b16 %v2294
        %v2335 = vunpack.c.l.b16 %v2295
        %v2336 = vunpack.c.l.b16 %v2296
        %v2337 = vunpack.c.l.b16 %v2297
        %v2338 = vunpack.c.l.b16 %v2298
        %v2339 = vunpack.c.l.b16 %v2299
        %v2340 = vunpack.c.l.b16 %v2300
        %v2341 = vunpack.c.l.b16 %v2301
        %v2342 = vunpack.c.l.b16 %v2302
        %v2343 = vunpack.c.l.b16 %v2303
        %v2344 = vunpack.c.l.b16 %v2304
        %v2345 = vunpack.c.l.b16 %v2305
        %v2346 = vunpack.c.l.b16 %v2306
        %v2347 = vunpack.c.l.b16 %v2307
        %v2348 = vunpack.c.l.b16 %v2308
        %v2349 = vpack.c.b16 %v2334, %v2333
        %v2350 = vpack.c.b16 %v2336, %v2335
        %v2351 = vpack.c.b16 %v2338, %v2337
        %v2352 = vpack.c.b16 %v2340, %v2339
        %v2353 = vpack.c.b16 %v2342, %v2341
        %v2354 = vpack.c.b16 %v2344, %v2343
        %v2355 = vpack.c.b16 %v2346, %v2345
        %v2356 = vpack.c.b16 %v2348, %v2347
        %2365 = vmatprep.subr.bf16.mxu0 0
        %2366 = vmatpush1.bf16.msra.mxu0 %v2349
        %2367 = vmatprep.subr.bf16.mxu0 0
        %2368 = vmatpush1.bf16.msra.mxu0 %v2350
        %2369 = vmatprep.subr.bf16.mxu0 0
        %2370 = vmatpush1.bf16.msra.mxu0 %v2351
        %2371 = vmatprep.subr.bf16.mxu0 0
        %2372 = vmatpush1.bf16.msra.mxu0 %v2352
        %2373 = vmatprep.subr.bf16.mxu0 0
        %2374 = vmatpush1.bf16.msra.mxu0 %v2353
        %2375 = vmatprep.subr.bf16.mxu0 0
        %2376 = vmatpush1.bf16.msra.mxu0 %v2354
        %2377 = vmatprep.subr.bf16.mxu0 0
        %2378 = vmatpush1.bf16.msra.mxu0 %v2355
        %2379 = vmatprep.subr.bf16.mxu0 0
        %2380 = vmatpush1.bf16.msra.mxu0 %v2356
        %2381 = vmatprep.subr.bf16.mxu0 0
        %2382 = vmatpush1.bf16.msra.mxu0 0
        %2383 = vmatprep.subr.bf16.mxu0 0
        %2384 = vmatpush1.bf16.msra.mxu0 0
        %2385 = vmatprep.subr.bf16.mxu0 0
        %2386 = vmatpush1.bf16.msra.mxu0 0
        %2387 = vmatprep.subr.bf16.mxu0 0
        %2388 = vmatpush1.bf16.msra.mxu0 0
        %2389 = vmatprep.subr.bf16.mxu0 0
        %2390 = vmatpush1.bf16.msra.mxu0 0
        %2391 = vmatprep.subr.bf16.mxu0 0
        %2392 = vmatpush1.bf16.msra.mxu0 0
        %2393 = vmatprep.subr.bf16.mxu0 0
        %2394 = vmatpush1.bf16.msra.mxu0 0
        %2395 = vmatprep.subr.bf16.mxu0 0
        %2396 = vmatpush1.bf16.msra.mxu0 0
        %2397 = vmatprep.mubr.bf16.mxu0 0
        %2398 = vmatmul.mubr.bf16.gmra.mrb[0].mxu0 %v2291
        %v2399 = vpop.f32.mrb[0].mxu0
        %v2400 = vadd.f32 %v2315, %v2399
        %v2401 = vpop.f32.mrb[0].mxu0
        %v2402 = vpop.f32.mrb[0].mxu0
        %v2403 = vpop.f32.mrb[0].mxu0
        %2404 = vdwg.mxu0
        %v2405 = vadd.f32 %v2136, %v2400
        %v2406 = vld [vmem:[%s15] sm:$0x1]
        %v2407 = vld [vmem:[#allocation19] sm:$0x1]
        %2408 = vadd.xlane.f32.xlu0 %v1897
        %v2409 = vpop.xlane.xlu0 %2408
        %v2410 = vmul.f32 %v1897, %v1897
        %2411 = vadd.xlane.f32.xlu0 %v2410
        %v2412 = vpop.xlane.xlu0 %2411
        %v2413 = vmul.f32 %v2409, 0.03125
        %v2414 = vmul.f32 %v2412, 0.03125
        %v2415 = vmul.f32 %v2413, %v2413
        %v2416 = vsub.f32 %v2414, %v2415
        %v2417 = vsub.f32 %v1897, %v2413
        %v2418 = vadd.f32 %v2416, 1e-05
        %v2419 = vrsqrt.pop %v2418
        %v2420 = vmul.f32 %v2417, %v2419
        %v2422 = vlaneseq
        %v2423 = vshrl.u32 %v2422, 7
        %v2424 = vsub.s32 0, %v2423
        %v2425 = vrot.slane %v2406, %v2424
        %v2427 = vmul.f32 %v2420, %v2425
        %v2429 = vlaneseq
        %v2430 = vshrl.u32 %v2429, 7
        %v2431 = vsub.s32 0, %v2430
        %v2432 = vrot.slane %v2407, %v2431
        %v2434 = vadd.f32 %v2427, %v2432
        %v2435 = vpack.c.bf16 %v2434, %v2434
        %v2436 = vld [vmem:[%s17] sm:$0xf]
        %v2437 = vld [vmem:[%s17 + $0x4] sm:$0xf]
        %v2438 = vld [vmem:[%s17 + $0x8] sm:$0xf]
        %v2439 = vld [vmem:[%s17 + $0xc] sm:$0xf]
        %v2440 = vld [vmem:[%s17 + $0x10] sm:$0xf]
        %v2441 = vld [vmem:[%s17 + $0x14] sm:$0xf]
        %v2442 = vld [vmem:[%s17 + $0x18] sm:$0xf]
        %v2443 = vld [vmem:[%s17 + $0x1c] sm:$0xf]
        %v2444 = vld [vmem:[%s17 + $0x20] sm:$0xf]
        %v2445 = vld [vmem:[%s17 + $0x24] sm:$0xf]
        %v2446 = vld [vmem:[%s17 + $0x28] sm:$0xf]
        %v2447 = vld [vmem:[%s17 + $0x2c] sm:$0xf]
        %v2448 = vld [vmem:[%s17 + $0x30] sm:$0xf]
        %v2449 = vld [vmem:[%s17 + $0x34] sm:$0xf]
        %v2450 = vld [vmem:[%s17 + $0x38] sm:$0xf]
        %v2451 = vld [vmem:[%s17 + $0x3c] sm:$0xf]
        %v2468 = vunpack.c.l.b16 %v2436
        %v2469 = vunpack.c.l.b16 %v2437
        %v2470 = vunpack.c.l.b16 %v2438
        %v2471 = vunpack.c.l.b16 %v2439
        %v2472 = vunpack.c.l.b16 %v2440
        %v2473 = vunpack.c.l.b16 %v2441
        %v2474 = vunpack.c.l.b16 %v2442
        %v2475 = vunpack.c.l.b16 %v2443
        %v2476 = vunpack.c.l.b16 %v2444
        %v2477 = vunpack.c.l.b16 %v2445
        %v2478 = vunpack.c.l.b16 %v2446
        %v2479 = vunpack.c.l.b16 %v2447
        %v2480 = vunpack.c.l.b16 %v2448
        %v2481 = vunpack.c.l.b16 %v2449
        %v2482 = vunpack.c.l.b16 %v2450
        %v2483 = vunpack.c.l.b16 %v2451
        %v2484 = vpack.c.b16 %v2469, %v2468
        %v2485 = vpack.c.b16 %v2471, %v2470
        %v2486 = vpack.c.b16 %v2473, %v2472
        %v2487 = vpack.c.b16 %v2475, %v2474
        %v2488 = vpack.c.b16 %v2477, %v2476
        %v2489 = vpack.c.b16 %v2479, %v2478
        %v2490 = vpack.c.b16 %v2481, %v2480
        %v2491 = vpack.c.b16 %v2483, %v2482
        %2500 = vmatprep.subr.bf16.mxu0 0
        %2501 = vmatpush1.bf16.msra.mxu0 %v2484
        %2502 = vmatprep.subr.bf16.mxu0 0
        %2503 = vmatpush1.bf16.msra.mxu0 %v2485
        %2504 = vmatprep.subr.bf16.mxu0 0
        %2505 = vmatpush1.bf16.msra.mxu0 %v2486
        %2506 = vmatprep.subr.bf16.mxu0 0
        %2507 = vmatpush1.bf16.msra.mxu0 %v2487
        %2508 = vmatprep.subr.bf16.mxu0 0
        %2509 = vmatpush1.bf16.msra.mxu0 %v2488
        %2510 = vmatprep.subr.bf16.mxu0 0
        %2511 = vmatpush1.bf16.msra.mxu0 %v2489
        %2512 = vmatprep.subr.bf16.mxu0 0
        %2513 = vmatpush1.bf16.msra.mxu0 %v2490
        %2514 = vmatprep.subr.bf16.mxu0 0
        %2515 = vmatpush1.bf16.msra.mxu0 %v2491
        %2516 = vmatprep.subr.bf16.mxu0 0
        %2517 = vmatpush1.bf16.msra.mxu0 0
        %2518 = vmatprep.subr.bf16.mxu0 0
        %2519 = vmatpush1.bf16.msra.mxu0 0
        %2520 = vmatprep.subr.bf16.mxu0 0
        %2521 = vmatpush1.bf16.msra.mxu0 0
        %2522 = vmatprep.subr.bf16.mxu0 0
        %2523 = vmatpush1.bf16.msra.mxu0 0
        %2524 = vmatprep.subr.bf16.mxu0 0
        %2525 = vmatpush1.bf16.msra.mxu0 0
        %2526 = vmatprep.subr.bf16.mxu0 0
        %2527 = vmatpush1.bf16.msra.mxu0 0
        %2528 = vmatprep.subr.bf16.mxu0 0
        %2529 = vmatpush1.bf16.msra.mxu0 0
        %2530 = vmatprep.subr.bf16.mxu0 0
        %2531 = vmatpush1.bf16.msra.mxu0 0
        %2532 = vmatprep.mubr.bf16.mxu0 0
        %2533 = vmatmul.mubr.bf16.gmra.mrb[0].mxu0 %v2435
        %v2534 = vpop.f32.mrb[0].mxu0
        %v2535 = vadd.f32 0.0, %v2534
        %v2536 = vpop.f32.mrb[0].mxu0
        %v2537 = vpop.f32.mrb[0].mxu0
        %v2538 = vpop.f32.mrb[0].mxu0
        %2539 = vdwg.mxu0
        %v2540 = vrot.slane %v2535, 4
        %v2541 = vadd.f32 %v2535, %v2540
        %v2542 = vrot.slane %v2541, 2
        %v2543 = vadd.f32 %v2541, %v2542
        %v2544 = vrot.slane %v2543, 1
        %v2545 = vadd.f32 %v2543, %v2544
        %v2546 = vrcp.pop 8.0
        %v2547 = vmul.f32 %v2545, %v2546
        %v2548 = vld [vmem:[%s18] sm:$0x1]
        %v2549 = vadd.f32 %v2547, %v2548
        %v2550 = vxor.u32 %v2549, 2147483648
        %v2551 = vmul.f32 %v2550, 1.442695
        %v2552 = vpow.pop %v2551
        %v2553 = vadd.f32 %v2552, 1.0
        %v2554 = vrcp.pop %v2553
        %v2555 = vmul.f32 1.0, %v2554
        %2556 = vst [vmem:[%s790] sm:$0x1] %v2555
        %s2557 = scalar_lea.vmem %s15, 1
        %v2558 = vld [vmem:[%s2557] sm:$0x1]
        %s2559 = scalar_lea.vmem [#allocation19], 1
        %v2560 = vld [vmem:[%s2559] sm:$0x1]
        %2561 = vadd.xlane.f32.xlu0 %v2405
        %v2562 = vpop.xlane.xlu0 %2561
        %v2563 = vmul.f32 %v2405, %v2405
        %2564 = vadd.xlane.f32.xlu0 %v2563
        %v2565 = vpop.xlane.xlu0 %2564
        %v2566 = vmul.f32 %v2562, 0.03125
        %v2567 = vmul.f32 %v2565, 0.03125
        %v2568 = vmul.f32 %v2566, %v2566
        %v2569 = vsub.f32 %v2567, %v2568
        %v2570 = vsub.f32 %v2405, %v2566
        %v2571 = vadd.f32 %v2569, 1e-05
        %v2572 = vrsqrt.pop %v2571
        %v2573 = vmul.f32 %v2570, %v2572
        %v2575 = vlaneseq
        %v2576 = vshrl.u32 %v2575, 7
        %v2577 = vsub.s32 0, %v2576
        %v2578 = vrot.slane %v2558, %v2577
        %v2580 = vmul.f32 %v2573, %v2578
        %v2582 = vlaneseq
        %v2583 = vshrl.u32 %v2582, 7
        %v2584 = vsub.s32 0, %v2583
        %v2585 = vrot.slane %v2560, %v2584
        %v2587 = vadd.f32 %v2580, %v2585
        %v2588 = vpack.c.bf16 %v2587, %v2587
        %s2589 = scalar_lea.vmem %s17, 64
        %v2590 = vld [vmem:[%s2589] sm:$0xf]
        %v2591 = vld [vmem:[%s2589 + $0x4] sm:$0xf]
        %v2592 = vld [vmem:[%s2589 + $0x8] sm:$0xf]
        %v2593 = vld [vmem:[%s2589 + $0xc] sm:$0xf]
        %v2594 = vld [vmem:[%s2589 + $0x10] sm:$0xf]
        %v2595 = vld [vmem:[%s2589 + $0x14] sm:$0xf]
        %v2596 = vld [vmem:[%s2589 + $0x18] sm:$0xf]
        %v2597 = vld [vmem:[%s2589 + $0x1c] sm:$0xf]
        %v2598 = vld [vmem:[%s2589 + $0x20] sm:$0xf]
        %v2599 = vld [vmem:[%s2589 + $0x24] sm:$0xf]
        %v2600 = vld [vmem:[%s2589 + $0x28] sm:$0xf]
        %v2601 = vld [vmem:[%s2589 + $0x2c] sm:$0xf]
        %v2602 = vld [vmem:[%s2589 + $0x30] sm:$0xf]
        %v2603 = vld [vmem:[%s2589 + $0x34] sm:$0xf]
        %v2604 = vld [vmem:[%s2589 + $0x38] sm:$0xf]
        %v2605 = vld [vmem:[%s2589 + $0x3c] sm:$0xf]
        %v2622 = vunpack.c.l.b16 %v2590
        %v2623 = vunpack.c.l.b16 %v2591
        %v2624 = vunpack.c.l.b16 %v2592
        %v2625 = vunpack.c.l.b16 %v2593
        %v2626 = vunpack.c.l.b16 %v2594
        %v2627 = vunpack.c.l.b16 %v2595
        %v2628 = vunpack.c.l.b16 %v2596
        %v2629 = vunpack.c.l.b16 %v2597
        %v2630 = vunpack.c.l.b16 %v2598
        %v2631 = vunpack.c.l.b16 %v2599
        %v2632 = vunpack.c.l.b16 %v2600
        %v2633 = vunpack.c.l.b16 %v2601
        %v2634 = vunpack.c.l.b16 %v2602
        %v2635 = vunpack.c.l.b16 %v2603
        %v2636 = vunpack.c.l.b16 %v2604
        %v2637 = vunpack.c.l.b16 %v2605
        %v2638 = vpack.c.b16 %v2623, %v2622
        %v2639 = vpack.c.b16 %v2625, %v2624
        %v2640 = vpack.c.b16 %v2627, %v2626
        %v2641 = vpack.c.b16 %v2629, %v2628
        %v2642 = vpack.c.b16 %v2631, %v2630
        %v2643 = vpack.c.b16 %v2633, %v2632
        %v2644 = vpack.c.b16 %v2635, %v2634
        %v2645 = vpack.c.b16 %v2637, %v2636
        %2654 = vmatprep.subr.bf16.mxu0 0
        %2655 = vmatpush1.bf16.msra.mxu0 %v2638
        %2656 = vmatprep.subr.bf16.mxu0 0
        %2657 = vmatpush1.bf16.msra.mxu0 %v2639
        %2658 = vmatprep.subr.bf16.mxu0 0
        %2659 = vmatpush1.bf16.msra.mxu0 %v2640
        %2660 = vmatprep.subr.bf16.mxu0 0
        %2661 = vmatpush1.bf16.msra.mxu0 %v2641
        %2662 = vmatprep.subr.bf16.mxu0 0
        %2663 = vmatpush1.bf16.msra.mxu0 %v2642
        %2664 = vmatprep.subr.bf16.mxu0 0
        %2665 = vmatpush1.bf16.msra.mxu0 %v2643
        %2666 = vmatprep.subr.bf16.mxu0 0
        %2667 = vmatpush1.bf16.msra.mxu0 %v2644
        %2668 = vmatprep.subr.bf16.mxu0 0
        %2669 = vmatpush1.bf16.msra.mxu0 %v2645
        %2670 = vmatprep.subr.bf16.mxu0 0
        %2671 = vmatpush1.bf16.msra.mxu0 0
        %2672 = vmatprep.subr.bf16.mxu0 0
        %2673 = vmatpush1.bf16.msra.mxu0 0
        %2674 = vmatprep.subr.bf16.mxu0 0
        %2675 = vmatpush1.bf16.msra.mxu0 0
        %2676 = vmatprep.subr.bf16.mxu0 0
        %2677 = vmatpush1.bf16.msra.mxu0 0
        %2678 = vmatprep.subr.bf16.mxu0 0
        %2679 = vmatpush1.bf16.msra.mxu0 0
        %2680 = vmatprep.subr.bf16.mxu0 0
        %2681 = vmatpush1.bf16.msra.mxu0 0
        %2682 = vmatprep.subr.bf16.mxu0 0
        %2683 = vmatpush1.bf16.msra.mxu0 0
        %2684 = vmatprep.subr.bf16.mxu0 0
        %2685 = vmatpush1.bf16.msra.mxu0 0
        %2686 = vmatprep.mubr.bf16.mxu0 0
        %2687 = vmatmul.mubr.bf16.gmra.mrb[0].mxu0 %v2588
        %v2688 = vpop.f32.mrb[0].mxu0
        %v2689 = vadd.f32 0.0, %v2688
        %v2690 = vpop.f32.mrb[0].mxu0
        %v2691 = vpop.f32.mrb[0].mxu0
        %v2692 = vpop.f32.mrb[0].mxu0
        %2693 = vdwg.mxu0
        %v2694 = vrot.slane %v2689, 4
        %v2695 = vadd.f32 %v2689, %v2694
        %v2696 = vrot.slane %v2695, 2
        %v2697 = vadd.f32 %v2695, %v2696
        %v2698 = vrot.slane %v2697, 1
        %v2699 = vadd.f32 %v2697, %v2698
        %v2700 = vmul.f32 %v2699, %v2546
        %s2701 = scalar_lea.vmem %s18, 1
        %v2702 = vld [vmem:[%s2701] sm:$0x1]
        %v2703 = vadd.f32 %v2700, %v2702
        %v2704 = vxor.u32 %v2703, 2147483648
        %v2705 = vmul.f32 %v2704, 1.442695
        %v2706 = vpow.pop %v2705
        %v2707 = vadd.f32 %v2706, 1.0
        %v2708 = vrcp.pop %v2707
        %v2709 = vmul.f32 1.0, %v2708
        %2710 = vst [vmem:[%s796] sm:$0x1] %v2709
        %s2711 = sand.u32 %s458, 1
        %s2712 = scalar_lea.sflag [#allocation4], %s2711
        %s2713 = sand.u32 %s458, 1
        %s2714 = scalar_lea.vmem [#allocation20], %s2713
        %s2715 = sand.u32 %s484, 1
        %s2716 = scalar_lea.sflag [#allocation22], %s2715
        %s2717 = sand.u32 %s484, 1
        %s2718 = scalar_lea.vmem [#allocation21], %s2717
        // Predicated region
        $region141: #{tpu_custom_call.1} parent=95 // pred_check
          %p2719 = pneg %p468
        $region142: #{tpu_custom_call.1} parent=95 // pred_check_branch
          %2721 = sbr.rel (%p2719) target = $region144
        $region143: #{tpu_custom_call.1} parent=95 // pred_region
          %s2723 = ssub.s32 16, 16
          %2724 = vsyncadd %s2712, %s2723
          %s2725 = smul.addr %s46, 16
          %s2726 = scalar_lea.hbm %s19, %s2725
          %s2728 = sshll.u32 %s2714, 4
          %s2729 = int_to_ptr.vmem [resolvable:$true] %s2728
          %2731 = dma.vmem_to_hbm [thread:$0]  %s2729, 16, %s2726, %s2712
        $region144: #{tpu_custom_call.1} parent=95 // pred_fallthru
          _
        // Predicated region
        $region145: #{tpu_custom_call.1} parent=95 // pred_check
          %p2732 = pneg %p494
        $region146: #{tpu_custom_call.1} parent=95 // pred_check_branch
          %2734 = sbr.rel (%p2732) target = $region148
        $region147: #{tpu_custom_call.1} parent=95 // pred_region
          %s2736 = ssub.s32 16, 16
          %2737 = vsyncadd %s2716, %s2736
          %s2738 = smul.addr %s46, 16
          %s2739 = scalar_lea.hbm %s20, %s2738
          %s2741 = sshll.u32 %s2718, 4
          %s2742 = int_to_ptr.vmem [resolvable:$true] %s2741
          %2744 = dma.vmem_to_hbm [thread:$0]  %s2742, 16, %s2739, %s2716
        $region148: #{tpu_custom_call.1} parent=95 // pred_fallthru
          _
      $region96: #{tpu_custom_call.1} parent=5 // pred_fallthru
        _
      %p2745 = scmp.le.s32.totalorder 2, %s41
      // Predicated region
      $region149: #{tpu_custom_call.1} parent=5 // pred_check
        %p2746 = pneg %p2745
      $region150: #{tpu_custom_call.1} parent=5 // pred_check_branch
        %2748 = sbr.rel (%p2746) target = $region152
      $region151: #{tpu_custom_call.1} parent=5 // pred_region
        %s2749 = ssub.s32 %s41, 2
        // Predicated region
        $region153: #{tpu_custom_call.1} parent=151 // pred_check
          %p2750 = pneg %p474
        $region154: #{tpu_custom_call.1} parent=151 // pred_check_branch
          %2752 = sbr.rel (%p2750) target = $region156
        $region155: #{tpu_custom_call.1} parent=151 // pred_region
          %s2753 = sand.u32 %s459, 1
          %s2754 = scalar_lea.sflag [#allocation4], %s2753
          %s2755 = sand.u32 %s459, 1
          %s2756 = scalar_lea.vmem [#allocation20], %s2755
          %2757 = dma.done %s2754, 16
        $region156: #{tpu_custom_call.1} parent=151 // pred_fallthru
          _
        // Predicated region
        $region157: #{tpu_custom_call.1} parent=151 // pred_check
          %p2758 = pneg %p500
        $region158: #{tpu_custom_call.1} parent=151 // pred_check_branch
          %2760 = sbr.rel (%p2758) target = $region160
        $region159: #{tpu_custom_call.1} parent=151 // pred_region
          %s2761 = sand.u32 %s485, 1
          %s2762 = scalar_lea.sflag [#allocation22], %s2761
          %s2763 = sand.u32 %s485, 1
          %s2764 = scalar_lea.vmem [#allocation21], %s2763
          %2765 = dma.done %s2762, 16
        $region160: #{tpu_custom_call.1} parent=151 // pred_fallthru
          _
      $region152: #{tpu_custom_call.1} parent=5 // pred_fallthru
        _
    $region6: #{tpu_custom_call.1} parent=1 // loop_footer
      %s45 = sadd.s32 1, %s41
    $region7: #{tpu_custom_call.1} parent=1 // loop_footer_branch
      %40 = sbr.rel target = $region3
    $region8: #{tpu_custom_call.1} parent=1 // loop_exit
      _
    %2766 = vsyncpa [#allocation3], 1
    %s2767 = scalar_lea.sflag [#allocation3], 1
    %2768 = vsyncpa %s2767, 1
    %2769 = vsyncpa [#allocation6], 1
    %2770 = vsyncpa [#allocation9], 1
    %2771 = vsyncpa [#allocation12], 1
    %2772 = vsyncpa [#allocation15], 1
    %2773 = vsyncpa [#allocation18], 1
    %2774 = vsyncpa [#allocation4], 1
    %s2775 = scalar_lea.sflag [#allocation4], 1
    %2776 = vsyncpa %s2775, 1
    %2777 = vsyncpa [#allocation22], 1
    %s2778 = scalar_lea.sflag [#allocation22], 1
    %2779 = vsyncpa %s2778, 1

</llo_original>
